<compile_context>
chip_gen: v6e
topology: v6e:2x2x1
jax: 0.10.0
libtpu: 0.0.40
codegen_flags: <defaults>
</compile_context>

<pallas_src>
import functools
import math

import jax
import jax.numpy as jnp
from jax.experimental import pallas as pl
from jax.experimental.pallas import tpu as pltpu  # noqa: F401  (TPU backend)

# ----------------------------- configuration -------------------------------
NUM_CONCEPT  = 10          # encoder_config['num_concept']
DIM_MODEL    = 32          # encoder_config['dim_model']
NUM_BLOCK    = 1           # encoder_config['num_block']
DIM_FF       = 64          # feed-forward hidden size inside transformer layer
DIM_FINAL_FC = 32          # encoder_config['dim_final_fc']
NUM_HEAD     = 2           # attention heads inside CL4KTTransformerLayer
BATCH        = 2
SEQ_LEN      = 8
LN_EPS       = 1e-5
NEG_INF      = -1e30

_SELF_BLOCK_NPARAMS  = 12   # wqkv,bqkv,wo,bo,ln1g,ln1b,w1,b1,w2,b2,ln2g,ln2b
_CROSS_BLOCK_NPARAMS = 14   # wqk,bqk,wv,bv,wo,bo,ln1g,ln1b,w1,b1,w2,b2,ln2g,ln2b
_PREDICT_NPARAMS     = 7    # w1a,w1b,b1,w2,b2,w3t,b3


# ----------------------------- fused Pallas kernel --------------------------
def cl4kt_forward_kernel(*refs, num_block, num_head):
    """Entire CL4KT forward for the whole batch in one kernel invocation.

    Inputs (in order): concept ids (BS,1), interaction ids (BS,1),
    padded embedding tables, additive attention bias for mask=1 and mask=0
    (block-diagonal causal masks over the flattened B*S rows), the zero-pad
    row multiplier, then the parameters of every transformer block and the
    predict MLP.  Output: sigmoid predictions, lane-dense (1, B*S).
    """
    n_in = (7 + 2 * num_block * _SELF_BLOCK_NPARAMS
            + num_block * _CROSS_BLOCK_NPARAMS + _PREDICT_NPARAMS)
    assert len(refs) == n_in + 1, (len(refs), n_in + 1)

    out_ref = refs[-1]
    it = iter(refs[:-1])
    c_ids_ref = next(it)
    i_ids_ref = next(it)
    emb_c_ref = next(it)
    emb_i_ref = next(it)
    bias1_ref = next(it)
    bias0_ref = next(it)
    zrow_ref = next(it)
    c_blocks = [[next(it) for _ in range(_SELF_BLOCK_NPARAMS)]
                for _ in range(num_block)]
    i_blocks = [[next(it) for _ in range(_SELF_BLOCK_NPARAMS)]
                for _ in range(num_block)]
    r_blocks = [[next(it) for _ in range(_CROSS_BLOCK_NPARAMS)]
                for _ in range(num_block)]
    p_prm = [next(it) for _ in range(_PREDICT_NPARAMS)]

    f32 = jnp.float32
    bf16 = jnp.bfloat16

    def bdot(a, b):
        # bf16 MXU inputs, f32 accumulation
        return jnp.dot(a.astype(bf16), b.astype(bf16), preferred_element_type=f32)

    def bdot_nt(a, b):
        # a @ b.T without materializing the transpose (contract last dims)
        return jax.lax.dot_general(a.astype(bf16), b.astype(bf16),
                                   (((1,), (1,)), ((), ())),
                                   preferred_element_type=f32)

    def layer_norm(v, g, b):
        mu = jnp.mean(v, axis=-1, keepdims=True)
        var = jnp.mean((v - mu) * (v - mu), axis=-1, keepdims=True)
        return (v - mu) * jax.lax.rsqrt(var + LN_EPS) * g + b

    # ---- embeddings as one-hot matmuls (padding row 0 is zero in the table)
    c_ids = c_ids_ref[...]                       # (BS, 1) int32
    i_ids = i_ids_ref[...]                       # (BS, 1) int32
    BS = c_ids.shape[0]
    nC = emb_c_ref.shape[0]                      # padded rows
    nI = emb_i_ref.shape[0]
    onehot_c = (c_ids == jax.lax.broadcasted_iota(jnp.int32, (BS, nC), 1)).astype(f32)
    onehot_i = (i_ids == jax.lax.broadcasted_iota(jnp.int32, (BS, nI), 1)).astype(f32)
    concept_emb = jnp.dot(onehot_c, emb_c_ref[...], preferred_element_type=f32)  # (BS, D)
    inter_emb = jnp.dot(onehot_i, emb_i_ref[...], preferred_element_type=f32)    # (BS, D)

    bias1 = bias1_ref[...]                       # (BS, BS) additive mask (mask=1)
    bias0 = bias0_ref[...]                       # (BS, BS) additive mask (mask=0)
    zrow = zrow_ref[...]                         # (BS, 1)  zero-pad row multiplier

    def mha(Q, K, V, wo, bo, bias, zero_pad):
        Dm = Q.shape[-1]
        dk = Dm // num_head
        scale = 1.0 / math.sqrt(dk)
        attn = None
        for h in range(num_head):
            Qh = Q[:, h * dk:(h + 1) * dk]
            Kh = K[:, h * dk:(h + 1) * dk]
            Vh = V[:, h * dk:(h + 1) * dk]
            s = bdot_nt(Qh, Kh) * scale + bias                     # (BS, BS)
            s = s - jnp.max(s, axis=-1, keepdims=True)
            p = jnp.exp(s)
            p = p * pl.reciprocal(jnp.sum(p, axis=-1, keepdims=True), approx=True)
            if zero_pad is not None:
                p = p * zero_pad                                   # AKT zero_pad row
            # accumulate ctx_h @ Wo[h*dk:(h+1)*dk, :] instead of concat + matmul
            contrib = bdot(bdot(p, Vh), wo[h * dk:(h + 1) * dk, :])
            attn = contrib if attn is None else attn + contrib
        return attn + bo

    def ffn_ln(x1, w1, b1, w2, b2, g2, be2):
        h = jnp.maximum(bdot(x1, w1) + b1, 0.0)                    # ReLU FFN
        h = bdot(h, w2) + b2
        return layer_norm(x1 + h, g2, be2)

    def self_block(x, prm):
        wqkv, bqkv, wo, bo, g1, be1, w1, b1, w2, b2, g2, be2 = (r[...] for r in prm)
        Dm = x.shape[-1]
        qkv = bdot(x, wqkv) + bqkv                                 # fused QKV proj
        attn = mha(qkv[:, :Dm], qkv[:, Dm:2 * Dm], qkv[:, 2 * Dm:3 * Dm],
                   wo, bo, bias1, None)
        x1 = layer_norm(x + attn, g1, be1)
        return ffn_ln(x1, w1, b1, w2, b2, g2, be2)

    def cross_block(x, y, prm):
        (wqk, bqk, wv, bv, wo, bo, g1, be1,
         w1, b1, w2, b2, g2, be2) = (r[...] for r in prm)
        Dm = x.shape[-1]
        qk = bdot(x, wqk) + bqk                                    # fused QK proj on x
        V = bdot(y, wv) + bv                                       # V proj on y
        attn = mha(qk[:, :Dm], qk[:, Dm:2 * Dm], V, wo, bo, bias0, zrow)
        x1 = layer_norm(x + attn, g1, be1)
        return ffn_ln(x1, w1, b1, w2, b2, g2, be2)

    # ---- three transformer stacks
    x = concept_emb
    for prm in c_blocks:
        x = self_block(x, prm)
    y = inter_emb
    for prm in i_blocks:
        y = self_block(y, prm)
    for prm in r_blocks:
        x = cross_block(x, y, prm)

    # ---- predict MLP on concat([x, concept_emb]) without materializing concat
    w1a, w1b, b1, w2, b2, w3t, b3 = (r[...] for r in p_prm)

    def gelu_exact(v):
        return 0.5 * v * (1.0 + jax.lax.erf(v * (1.0 / math.sqrt(2.0))))

    h = gelu_exact(bdot(x, w1a) + bdot(concept_emb, w1b) + b1)     # (BS, F)
    h = gelu_exact(bdot(h, w2) + b2)                               # (BS, F/2)
    logits = bdot_nt(w3t, h) + b3                                  # (1, BS) lane-dense
    out_ref[...] = jax.nn.sigmoid(logits)


# ----------------------------- host-side helpers ----------------------------
def _make_attn_bias(batch, seq_len, mask_k):
    """Block-diagonal causal additive bias over the flattened B*S rows."""
    idx = jnp.arange(batch * seq_len, dtype=jnp.int32)
    rb, cb = idx[:, None] // seq_len, idx[None, :] // seq_len
    ri, ci = idx[:, None] % seq_len, idx[None, :] % seq_len
    allowed = (rb == cb) & (ci <= ri + (mask_k - 1))
    return jnp.where(allowed, 0.0, NEG_INF).astype(jnp.float32)


def _make_zero_pad_rows(batch, seq_len):
    idx = jnp.arange(batch * seq_len, dtype=jnp.int32)
    return jnp.where(idx % seq_len == 0, 0.0, 1.0).astype(jnp.float32).reshape(-1, 1)


def _pad_rows(t, multiple=8):
    pad = (-t.shape[0]) % multiple
    if pad:
        t = jnp.concatenate([t, jnp.zeros((pad, t.shape[1]), t.dtype)], axis=0)
    return t


def cl4kt_forward(params, concept_seq, correct_seq):
    """Replicates CL4KT.forward (inference / eval mode) in one pallas_call."""
    B, S = concept_seq.shape
    BS = B * S
    c_ids = concept_seq.reshape(BS, 1).astype(jnp.int32)
    i_ids = (concept_seq + NUM_CONCEPT * correct_seq).reshape(BS, 1).astype(jnp.int32)

    flat = [c_ids, i_ids,
            _pad_rows(params["embed_concept"]),
            _pad_rows(params["embed_interaction"]),
            _make_attn_bias(B, S, 1),
            _make_attn_bias(B, S, 0),
            _make_zero_pad_rows(B, S)]
    for blk in params["concept_blocks"]:
        flat += list(blk)
    for blk in params["interaction_blocks"]:
        flat += list(blk)
    for blk in params["retriever_blocks"]:
        flat += list(blk)
    flat += list(params["predict"])

    kernel = functools.partial(cl4kt_forward_kernel,
                               num_block=NUM_BLOCK, num_head=NUM_HEAD)
    out = pl.pallas_call(
        kernel,
        out_shape=jax.ShapeDtypeStruct((1, BS), jnp.float32),
    )(*flat)
    return out.reshape(B, S)


# ----------------------------- parameter init -------------------------------
def _linear(key, d_in, d_out):
    k1, k2 = jax.random.split(key)
    lim = 1.0 / math.sqrt(d_in)
    w = jax.random.uniform(k1, (d_in, d_out), jnp.float32, -lim, lim)
    b = jax.random.uniform(k2, (1, d_out), jnp.float32, -lim, lim)
    return w, b


def _init_raw_block(key, d_model, d_ff):
    ks = jax.random.split(key, 6)
    wq, bq = _linear(ks[0], d_model, d_model)
    wk, bk = _linear(ks[1], d_model, d_model)
    wv, bv = _linear(ks[2], d_model, d_model)
    wo, bo = _linear(ks[3], d_model, d_model)
    w1, b1 = _linear(ks[4], d_model, d_ff)
    w2, b2 = _linear(ks[5], d_ff, d_model)
    ones = jnp.ones((1, d_model), jnp.float32)
    zeros = jnp.zeros((1, d_model), jnp.float32)
    return dict(wq=wq, bq=bq, wk=wk, bk=bk, wv=wv, bv=bv, wo=wo, bo=bo,
                w1=w1, b1=b1, w2=w2, b2=b2,
                ln1g=ones, ln1b=zeros, ln2g=ones, ln2b=zeros)


def _fuse_self_block(r):
    wqkv = jnp.concatenate([r["wq"], r["wk"], r["wv"]], axis=1)     # (D, 3D)
    bqkv = jnp.concatenate([r["bq"], r["bk"], r["bv"]], axis=1)     # (1, 3D)
    return (wqkv, bqkv, r["wo"], r["bo"], r["ln1g"], r["ln1b"],
            r["w1"], r["b1"], r["w2"], r["b2"], r["ln2g"], r["ln2b"])


def _fuse_cross_block(r):
    wqk = jnp.concatenate([r["wq"], r["wk"]], axis=1)               # (D, 2D)
    bqk = jnp.concatenate([r["bq"], r["bk"]], axis=1)               # (1, 2D)
    return (wqk, bqk, r["wv"], r["bv"], r["wo"], r["bo"],
            r["ln1g"], r["ln1b"],
            r["w1"], r["b1"], r["w2"], r["b2"], r["ln2g"], r["ln2b"])


def init_cl4kt_params(key):
    keys = jax.random.split(key, 8)
    embed_concept = 0.02 * jax.random.normal(keys[0], (NUM_CONCEPT, DIM_MODEL), jnp.float32)
    embed_concept = embed_concept.at[0].set(0.0)                    # padding_idx=0
    embed_interaction = 0.02 * jax.random.normal(keys[1], (2 * NUM_CONCEPT, DIM_MODEL), jnp.float32)
    embed_interaction = embed_interaction.at[0].set(0.0)            # padding_idx=0

    concept_blocks = [_fuse_self_block(_init_raw_block(k, DIM_MODEL, DIM_FF))
                      for k in jax.random.split(keys[2], NUM_BLOCK)]
    interaction_blocks = [_fuse_self_block(_init_raw_block(k, DIM_MODEL, DIM_FF))
                          for k in jax.random.split(keys[3], NUM_BLOCK)]
    retriever_blocks = [_fuse_cross_block(_init_raw_block(k, DIM_MODEL, DIM_FF))
                        for k in jax.random.split(keys[4], NUM_BLOCK)]

    w1, b1 = _linear(keys[5], 2 * DIM_MODEL, DIM_FINAL_FC)
    w2, b2 = _linear(keys[6], DIM_FINAL_FC, DIM_FINAL_FC // 2)
    w3, b3 = _linear(keys[7], DIM_FINAL_FC // 2, 1)
    # split first predict matmul (avoids the retrieved_knowledge concat) and
    # transpose the last one (lane-dense (1, BS) output).
    predict = (w1[:DIM_MODEL, :], w1[DIM_MODEL:, :], b1, w2, b2, w3.T, b3)

    return dict(embed_concept=embed_concept,
                embed_interaction=embed_interaction,
                concept_blocks=concept_blocks,
                interaction_blocks=interaction_blocks,
                retriever_blocks=retriever_blocks,
                predict=predict)


# ---------------------------------- main -------------------------------------
if __name__ == "__main__":
    key = jax.random.PRNGKey(0)
    k_param, k_c, k_r = jax.random.split(key, 3)

    params = init_cl4kt_params(k_param)

    concept_seq = jax.random.randint(k_c, (BATCH, SEQ_LEN), 0, NUM_CONCEPT, dtype=jnp.int32)
    correct_seq = jax.random.randint(k_r, (BATCH, SEQ_LEN), 0, 2, dtype=jnp.int32)

    fwd = jax.jit(cl4kt_forward)
    out = jax.block_until_ready(fwd(params, concept_seq, correct_seq))

    assert out.shape == (BATCH, SEQ_LEN)
    assert bool(jnp.all(jnp.isfinite(out)))
    assert bool(jnp.all((out >= 0.0) & (out <= 1.0)))
    print("KERNEL_OK")
</pallas_src>

<mosaic_0001>
module attributes {stable_mosaic.version = 11 : i64} {
  func.func @cl4kt_forward_kernel(%arg0: memref<16x1xi32, #tpu.memory_space<vmem>>, %arg1: memref<16x1xi32, #tpu.memory_space<vmem>>, %arg2: memref<16x32xf32, #tpu.memory_space<vmem>>, %arg3: memref<24x32xf32, #tpu.memory_space<vmem>>, %arg4: memref<16x16xf32, #tpu.memory_space<vmem>>, %arg5: memref<16x16xf32, #tpu.memory_space<vmem>>, %arg6: memref<16x1xf32, #tpu.memory_space<vmem>>, %arg7: memref<32x96xf32, #tpu.memory_space<vmem>>, %arg8: memref<1x96xf32, #tpu.memory_space<vmem>>, %arg9: memref<32x32xf32, #tpu.memory_space<vmem>>, %arg10: memref<1x32xf32, #tpu.memory_space<vmem>>, %arg11: memref<1x32xf32, #tpu.memory_space<vmem>>, %arg12: memref<1x32xf32, #tpu.memory_space<vmem>>, %arg13: memref<32x64xf32, #tpu.memory_space<vmem>>, %arg14: memref<1x64xf32, #tpu.memory_space<vmem>>, %arg15: memref<64x32xf32, #tpu.memory_space<vmem>>, %arg16: memref<1x32xf32, #tpu.memory_space<vmem>>, %arg17: memref<1x32xf32, #tpu.memory_space<vmem>>, %arg18: memref<1x32xf32, #tpu.memory_space<vmem>>, %arg19: memref<32x96xf32, #tpu.memory_space<vmem>>, %arg20: memref<1x96xf32, #tpu.memory_space<vmem>>, %arg21: memref<32x32xf32, #tpu.memory_space<vmem>>, %arg22: memref<1x32xf32, #tpu.memory_space<vmem>>, %arg23: memref<1x32xf32, #tpu.memory_space<vmem>>, %arg24: memref<1x32xf32, #tpu.memory_space<vmem>>, %arg25: memref<32x64xf32, #tpu.memory_space<vmem>>, %arg26: memref<1x64xf32, #tpu.memory_space<vmem>>, %arg27: memref<64x32xf32, #tpu.memory_space<vmem>>, %arg28: memref<1x32xf32, #tpu.memory_space<vmem>>, %arg29: memref<1x32xf32, #tpu.memory_space<vmem>>, %arg30: memref<1x32xf32, #tpu.memory_space<vmem>>, %arg31: memref<32x64xf32, #tpu.memory_space<vmem>>, %arg32: memref<1x64xf32, #tpu.memory_space<vmem>>, %arg33: memref<32x32xf32, #tpu.memory_space<vmem>>, %arg34: memref<1x32xf32, #tpu.memory_space<vmem>>, %arg35: memref<32x32xf32, #tpu.memory_space<vmem>>, %arg36: memref<1x32xf32, #tpu.memory_space<vmem>>, %arg37: memref<1x32xf32, #tpu.memory_space<vmem>>, %arg38: memref<1x32xf32, #tpu.memory_space<vmem>>, %arg39: memref<32x64xf32, #tpu.memory_space<vmem>>, %arg40: memref<1x64xf32, #tpu.memory_space<vmem>>, %arg41: memref<64x32xf32, #tpu.memory_space<vmem>>, %arg42: memref<1x32xf32, #tpu.memory_space<vmem>>, %arg43: memref<1x32xf32, #tpu.memory_space<vmem>>, %arg44: memref<1x32xf32, #tpu.memory_space<vmem>>, %arg45: memref<32x32xf32, #tpu.memory_space<vmem>>, %arg46: memref<32x32xf32, #tpu.memory_space<vmem>>, %arg47: memref<1x32xf32, #tpu.memory_space<vmem>>, %arg48: memref<32x16xf32, #tpu.memory_space<vmem>>, %arg49: memref<1x16xf32, #tpu.memory_space<vmem>>, %arg50: memref<1x16xf32, #tpu.memory_space<vmem>>, %arg51: memref<1x1xf32, #tpu.memory_space<vmem>>, %arg52: memref<1x16xf32, #tpu.memory_space<vmem>>) attributes {dimension_semantics = [], scalar_prefetch = 0 : i64, scratch_operands = 0 : i64, tpu.core_type = #tpu.core_type<tc>} {
    %c0 = arith.constant 0 : index
    %c0_0 = arith.constant 0 : index
    %0 = vector.load %arg0[%c0, %c0_0] : memref<16x1xi32, #tpu.memory_space<vmem>>, vector<16x1xi32>
    %c0_1 = arith.constant 0 : index
    %c0_2 = arith.constant 0 : index
    %1 = vector.load %arg1[%c0_1, %c0_2] : memref<16x1xi32, #tpu.memory_space<vmem>>, vector<16x1xi32>
    %2 = tpu.iota {dimensions = array<i32: 1>} : vector<16x16xi32>
    %3 = vector.broadcast %0 : vector<16x1xi32> to vector<16x16xi32>
    %4 = arith.cmpi eq, %3, %2 : vector<16x16xi32>
    %5 = arith.extui %4 : vector<16x16xi1> to vector<16x16xi32>
    %6 = arith.sitofp %5 : vector<16x16xi32> to vector<16x16xf32>
    %7 = tpu.iota {dimensions = array<i32: 1>} : vector<16x24xi32>
    %8 = vector.broadcast %1 : vector<16x1xi32> to vector<16x24xi32>
    %9 = arith.cmpi eq, %8, %7 : vector<16x24xi32>
    %10 = arith.extui %9 : vector<16x24xi1> to vector<16x24xi32>
    %11 = arith.sitofp %10 : vector<16x24xi32> to vector<16x24xf32>
    %c0_3 = arith.constant 0 : index
    %c0_4 = arith.constant 0 : index
    %12 = vector.load %arg2[%c0_3, %c0_4] : memref<16x32xf32, #tpu.memory_space<vmem>>, vector<16x32xf32>
    %cst = arith.constant dense<0.000000e+00> : vector<16x32xf32>
    %13 = tpu.matmul %6, %12, %cst {dimension_numbers = #tpu.dot_dimension_numbers<[1], [0], [0], [1], [0, 0, 1, 1], [], []>} : vector<16x16xf32>, vector<16x32xf32>, vector<16x32xf32> -> vector<16x32xf32>
    %c0_5 = arith.constant 0 : index
    %c0_6 = arith.constant 0 : index
    %14 = vector.load %arg3[%c0_5, %c0_6] : memref<24x32xf32, #tpu.memory_space<vmem>>, vector<24x32xf32>
    %cst_7 = arith.constant dense<0.000000e+00> : vector<16x32xf32>
    %15 = tpu.matmul %11, %14, %cst_7 {dimension_numbers = #tpu.dot_dimension_numbers<[1], [0], [0], [1], [0, 0, 1, 1], [], []>} : vector<16x24xf32>, vector<24x32xf32>, vector<16x32xf32> -> vector<16x32xf32>
    %c0_8 = arith.constant 0 : index
    %c0_9 = arith.constant 0 : index
    %16 = vector.load %arg4[%c0_8, %c0_9] : memref<16x16xf32, #tpu.memory_space<vmem>>, vector<16x16xf32>
    %c0_10 = arith.constant 0 : index
    %c0_11 = arith.constant 0 : index
    %17 = vector.load %arg5[%c0_10, %c0_11] : memref<16x16xf32, #tpu.memory_space<vmem>>, vector<16x16xf32>
    %c0_12 = arith.constant 0 : index
    %c0_13 = arith.constant 0 : index
    %18 = vector.load %arg6[%c0_12, %c0_13] : memref<16x1xf32, #tpu.memory_space<vmem>>, vector<16x1xf32>
    %c0_14 = arith.constant 0 : index
    %c0_15 = arith.constant 0 : index
    %19 = vector.load %arg7[%c0_14, %c0_15] : memref<32x96xf32, #tpu.memory_space<vmem>>, vector<32x96xf32>
    %c0_16 = arith.constant 0 : index
    %c0_17 = arith.constant 0 : index
    %20 = vector.load %arg8[%c0_16, %c0_17] : memref<1x96xf32, #tpu.memory_space<vmem>>, vector<1x96xf32>
    %c0_18 = arith.constant 0 : index
    %c0_19 = arith.constant 0 : index
    %21 = vector.load %arg9[%c0_18, %c0_19] : memref<32x32xf32, #tpu.memory_space<vmem>>, vector<32x32xf32>
    %c0_20 = arith.constant 0 : index
    %c0_21 = arith.constant 0 : index
    %22 = vector.load %arg10[%c0_20, %c0_21] : memref<1x32xf32, #tpu.memory_space<vmem>>, vector<1x32xf32>
    %c0_22 = arith.constant 0 : index
    %c0_23 = arith.constant 0 : index
    %23 = vector.load %arg11[%c0_22, %c0_23] : memref<1x32xf32, #tpu.memory_space<vmem>>, vector<1x32xf32>
    %c0_24 = arith.constant 0 : index
    %c0_25 = arith.constant 0 : index
    %24 = vector.load %arg12[%c0_24, %c0_25] : memref<1x32xf32, #tpu.memory_space<vmem>>, vector<1x32xf32>
    %c0_26 = arith.constant 0 : index
    %c0_27 = arith.constant 0 : index
    %25 = vector.load %arg13[%c0_26, %c0_27] : memref<32x64xf32, #tpu.memory_space<vmem>>, vector<32x64xf32>
    %c0_28 = arith.constant 0 : index
    %c0_29 = arith.constant 0 : index
    %26 = vector.load %arg14[%c0_28, %c0_29] : memref<1x64xf32, #tpu.memory_space<vmem>>, vector<1x64xf32>
    %c0_30 = arith.constant 0 : index
    %c0_31 = arith.constant 0 : index
    %27 = vector.load %arg15[%c0_30, %c0_31] : memref<64x32xf32, #tpu.memory_space<vmem>>, vector<64x32xf32>
    %c0_32 = arith.constant 0 : index
    %c0_33 = arith.constant 0 : index
    %28 = vector.load %arg16[%c0_32, %c0_33] : memref<1x32xf32, #tpu.memory_space<vmem>>, vector<1x32xf32>
    %c0_34 = arith.constant 0 : index
    %c0_35 = arith.constant 0 : index
    %29 = vector.load %arg17[%c0_34, %c0_35] : memref<1x32xf32, #tpu.memory_space<vmem>>, vector<1x32xf32>
    %c0_36 = arith.constant 0 : index
    %c0_37 = arith.constant 0 : index
    %30 = vector.load %arg18[%c0_36, %c0_37] : memref<1x32xf32, #tpu.memory_space<vmem>>, vector<1x32xf32>
    %31 = arith.truncf %13 : vector<16x32xf32> to vector<16x32xbf16>
    %32 = arith.truncf %19 : vector<32x96xf32> to vector<32x96xbf16>
    %cst_38 = arith.constant dense<0.000000e+00> : vector<16x96xf32>
    %33 = tpu.matmul %31, %32, %cst_38 {dimension_numbers = #tpu.dot_dimension_numbers<[1], [0], [0], [1], [0, 0, 1, 1], [], []>} : vector<16x32xbf16>, vector<32x96xbf16>, vector<16x96xf32> -> vector<16x96xf32>
    %34 = vector.broadcast %20 : vector<1x96xf32> to vector<16x96xf32>
    %35 = arith.addf %33, %34 : vector<16x96xf32>
    %36 = vector.extract_strided_slice %35 {offsets = [0, 0], sizes = [16, 32], strides = [1, 1]} : vector<16x96xf32> to vector<16x32xf32>
    %37 = vector.extract_strided_slice %35 {offsets = [0, 32], sizes = [16, 32], strides = [1, 1]} : vector<16x96xf32> to vector<16x32xf32>
    %38 = vector.extract_strided_slice %35 {offsets = [0, 64], sizes = [16, 32], strides = [1, 1]} : vector<16x96xf32> to vector<16x32xf32>
    %39 = vector.extract_strided_slice %36 {offsets = [0, 0], sizes = [16, 16], strides = [1, 1]} : vector<16x32xf32> to vector<16x16xf32>
    %40 = vector.extract_strided_slice %37 {offsets = [0, 0], sizes = [16, 16], strides = [1, 1]} : vector<16x32xf32> to vector<16x16xf32>
    %41 = vector.extract_strided_slice %38 {offsets = [0, 0], sizes = [16, 16], strides = [1, 1]} : vector<16x32xf32> to vector<16x16xf32>
    %42 = arith.truncf %39 : vector<16x16xf32> to vector<16x16xbf16>
    %43 = arith.truncf %40 : vector<16x16xf32> to vector<16x16xbf16>
    %cst_39 = arith.constant dense<0.000000e+00> : vector<16x16xf32>
    %44 = tpu.matmul %42, %43, %cst_39 {dimension_numbers = #tpu.dot_dimension_numbers<[1], [1], [0], [0], [0, 0, 1, 0], [], []>} : vector<16x16xbf16>, vector<16x16xbf16>, vector<16x16xf32> -> vector<16x16xf32>
    %cst_40 = arith.constant 2.500000e-01 : f32
    %45 = vector.broadcast %cst_40 : f32 to vector<16x16xf32>
    %46 = arith.mulf %44, %45 : vector<16x16xf32>
    %47 = arith.addf %46, %16 : vector<16x16xf32>
    %cst_41 = arith.constant dense<0xFF800000> : vector<16xf32>
    %48 = vector.multi_reduction <maximumf>, %47, %cst_41 [1] : vector<16x16xf32> to vector<16xf32>
    %49 = vector.shape_cast %48 : vector<16xf32> to vector<16x1xf32>
    %50 = vector.broadcast %49 : vector<16x1xf32> to vector<16x16xf32>
    %51 = arith.subf %47, %50 : vector<16x16xf32>
    %52 = math.exp %51 : vector<16x16xf32>
    %cst_42 = arith.constant dense<0.000000e+00> : vector<16xf32>
    %53 = vector.multi_reduction <add>, %52, %cst_42 [1] : vector<16x16xf32> to vector<16xf32>
    %54 = vector.shape_cast %53 : vector<16xf32> to vector<16x1xf32>
    %55 = tpu.reciprocal %54 {approx = true} : vector<16x1xf32> -> vector<16x1xf32>
    %56 = vector.broadcast %55 : vector<16x1xf32> to vector<16x16xf32>
    %57 = arith.mulf %52, %56 : vector<16x16xf32>
    %58 = arith.truncf %57 : vector<16x16xf32> to vector<16x16xbf16>
    %59 = arith.truncf %41 : vector<16x16xf32> to vector<16x16xbf16>
    %cst_43 = arith.constant dense<0.000000e+00> : vector<16x16xf32>
    %60 = tpu.matmul %58, %59, %cst_43 {dimension_numbers = #tpu.dot_dimension_numbers<[1], [0], [0], [1], [0, 0, 1, 1], [], []>} : vector<16x16xbf16>, vector<16x16xbf16>, vector<16x16xf32> -> vector<16x16xf32>
    %61 = vector.extract_strided_slice %21 {offsets = [0, 0], sizes = [16, 32], strides = [1, 1]} : vector<32x32xf32> to vector<16x32xf32>
    %62 = arith.truncf %60 : vector<16x16xf32> to vector<16x16xbf16>
    %63 = arith.truncf %61 : vector<16x32xf32> to vector<16x32xbf16>
    %cst_44 = arith.constant dense<0.000000e+00> : vector<16x32xf32>
    %64 = tpu.matmul %62, %63, %cst_44 {dimension_numbers = #tpu.dot_dimension_numbers<[1], [0], [0], [1], [0, 0, 1, 1], [], []>} : vector<16x16xbf16>, vector<16x32xbf16>, vector<16x32xf32> -> vector<16x32xf32>
    %65 = vector.extract_strided_slice %36 {offsets = [0, 16], sizes = [16, 16], strides = [1, 1]} : vector<16x32xf32> to vector<16x16xf32>
    %66 = vector.extract_strided_slice %37 {offsets = [0, 16], sizes = [16, 16], strides = [1, 1]} : vector<16x32xf32> to vector<16x16xf32>
    %67 = vector.extract_strided_slice %38 {offsets = [0, 16], sizes = [16, 16], strides = [1, 1]} : vector<16x32xf32> to vector<16x16xf32>
    %68 = arith.truncf %65 : vector<16x16xf32> to vector<16x16xbf16>
    %69 = arith.truncf %66 : vector<16x16xf32> to vector<16x16xbf16>
    %cst_45 = arith.constant dense<0.000000e+00> : vector<16x16xf32>
    %70 = tpu.matmul %68, %69, %cst_45 {dimension_numbers = #tpu.dot_dimension_numbers<[1], [1], [0], [0], [0, 0, 1, 0], [], []>} : vector<16x16xbf16>, vector<16x16xbf16>, vector<16x16xf32> -> vector<16x16xf32>
    %cst_46 = arith.constant 2.500000e-01 : f32
    %71 = vector.broadcast %cst_46 : f32 to vector<16x16xf32>
    %72 = arith.mulf %70, %71 : vector<16x16xf32>
    %73 = arith.addf %72, %16 : vector<16x16xf32>
    %cst_47 = arith.constant dense<0xFF800000> : vector<16xf32>
    %74 = vector.multi_reduction <maximumf>, %73, %cst_47 [1] : vector<16x16xf32> to vector<16xf32>
    %75 = vector.shape_cast %74 : vector<16xf32> to vector<16x1xf32>
    %76 = vector.broadcast %75 : vector<16x1xf32> to vector<16x16xf32>
    %77 = arith.subf %73, %76 : vector<16x16xf32>
    %78 = math.exp %77 : vector<16x16xf32>
    %cst_48 = arith.constant dense<0.000000e+00> : vector<16xf32>
    %79 = vector.multi_reduction <add>, %78, %cst_48 [1] : vector<16x16xf32> to vector<16xf32>
    %80 = vector.shape_cast %79 : vector<16xf32> to vector<16x1xf32>
    %81 = tpu.reciprocal %80 {approx = true} : vector<16x1xf32> -> vector<16x1xf32>
    %82 = vector.broadcast %81 : vector<16x1xf32> to vector<16x16xf32>
    %83 = arith.mulf %78, %82 : vector<16x16xf32>
    %84 = arith.truncf %83 : vector<16x16xf32> to vector<16x16xbf16>
    %85 = arith.truncf %67 : vector<16x16xf32> to vector<16x16xbf16>
    %cst_49 = arith.constant dense<0.000000e+00> : vector<16x16xf32>
    %86 = tpu.matmul %84, %85, %cst_49 {dimension_numbers = #tpu.dot_dimension_numbers<[1], [0], [0], [1], [0, 0, 1, 1], [], []>} : vector<16x16xbf16>, vector<16x16xbf16>, vector<16x16xf32> -> vector<16x16xf32>
    %87 = vector.extract_strided_slice %21 {offsets = [16, 0], sizes = [16, 32], strides = [1, 1]} : vector<32x32xf32> to vector<16x32xf32>
    %88 = arith.truncf %86 : vector<16x16xf32> to vector<16x16xbf16>
    %89 = arith.truncf %87 : vector<16x32xf32> to vector<16x32xbf16>
    %cst_50 = arith.constant dense<0.000000e+00> : vector<16x32xf32>
    %90 = tpu.matmul %88, %89, %cst_50 {dimension_numbers = #tpu.dot_dimension_numbers<[1], [0], [0], [1], [0, 0, 1, 1], [], []>} : vector<16x16xbf16>, vector<16x32xbf16>, vector<16x32xf32> -> vector<16x32xf32>
    %91 = arith.addf %64, %90 : vector<16x32xf32>
    %92 = vector.broadcast %22 : vector<1x32xf32> to vector<16x32xf32>
    %93 = arith.addf %91, %92 : vector<16x32xf32>
    %94 = arith.addf %13, %93 : vector<16x32xf32>
    %cst_51 = arith.constant dense<0.000000e+00> : vector<16xf32>
    %95 = vector.multi_reduction <add>, %94, %cst_51 [1] : vector<16x32xf32> to vector<16xf32>
    %96 = vector.shape_cast %95 : vector<16xf32> to vector<16x1xf32>
    %cst_52 = arith.constant 3.200000e+01 : f32
    %97 = vector.broadcast %cst_52 : f32 to vector<16x1xf32>
    %98 = arith.divf %96, %97 : vector<16x1xf32>
    %99 = vector.broadcast %98 : vector<16x1xf32> to vector<16x32xf32>
    %100 = arith.subf %94, %99 : vector<16x32xf32>
    %101 = vector.broadcast %98 : vector<16x1xf32> to vector<16x32xf32>
    %102 = arith.subf %94, %101 : vector<16x32xf32>
    %103 = arith.mulf %100, %102 : vector<16x32xf32>
    %cst_53 = arith.constant dense<0.000000e+00> : vector<16xf32>
    %104 = vector.multi_reduction <add>, %103, %cst_53 [1] : vector<16x32xf32> to vector<16xf32>
    %105 = vector.shape_cast %104 : vector<16xf32> to vector<16x1xf32>
    %cst_54 = arith.constant 3.200000e+01 : f32
    %106 = vector.broadcast %cst_54 : f32 to vector<16x1xf32>
    %107 = arith.divf %105, %106 : vector<16x1xf32>
    %108 = vector.broadcast %98 : vector<16x1xf32> to vector<16x32xf32>
    %109 = arith.subf %94, %108 : vector<16x32xf32>
    %cst_55 = arith.constant 9.99999974E-6 : f32
    %110 = vector.broadcast %cst_55 : f32 to vector<16x1xf32>
    %111 = arith.addf %107, %110 : vector<16x1xf32>
    %112 = math.rsqrt %111 : vector<16x1xf32>
    %113 = vector.broadcast %112 : vector<16x1xf32> to vector<16x32xf32>
    %114 = arith.mulf %109, %113 : vector<16x32xf32>
    %115 = vector.broadcast %23 : vector<1x32xf32> to vector<16x32xf32>
    %116 = arith.mulf %114, %115 : vector<16x32xf32>
    %117 = vector.broadcast %24 : vector<1x32xf32> to vector<16x32xf32>
    %118 = arith.addf %116, %117 : vector<16x32xf32>
    %119 = arith.truncf %118 : vector<16x32xf32> to vector<16x32xbf16>
    %120 = arith.truncf %25 : vector<32x64xf32> to vector<32x64xbf16>
    %cst_56 = arith.constant dense<0.000000e+00> : vector<16x64xf32>
    %121 = tpu.matmul %119, %120, %cst_56 {dimension_numbers = #tpu.dot_dimension_numbers<[1], [0], [0], [1], [0, 0, 1, 1], [], []>} : vector<16x32xbf16>, vector<32x64xbf16>, vector<16x64xf32> -> vector<16x64xf32>
    %122 = vector.broadcast %26 : vector<1x64xf32> to vector<16x64xf32>
    %123 = arith.addf %121, %122 : vector<16x64xf32>
    %cst_57 = arith.constant 0.000000e+00 : f32
    %124 = vector.broadcast %cst_57 : f32 to vector<16x64xf32>
    %125 = arith.maximumf %123, %124 : vector<16x64xf32>
    %126 = arith.truncf %125 : vector<16x64xf32> to vector<16x64xbf16>
    %127 = arith.truncf %27 : vector<64x32xf32> to vector<64x32xbf16>
    %cst_58 = arith.constant dense<0.000000e+00> : vector<16x32xf32>
    %128 = tpu.matmul %126, %127, %cst_58 {dimension_numbers = #tpu.dot_dimension_numbers<[1], [0], [0], [1], [0, 0, 1, 1], [], []>} : vector<16x64xbf16>, vector<64x32xbf16>, vector<16x32xf32> -> vector<16x32xf32>
    %129 = vector.broadcast %28 : vector<1x32xf32> to vector<16x32xf32>
    %130 = arith.addf %128, %129 : vector<16x32xf32>
    %131 = arith.addf %118, %130 : vector<16x32xf32>
    %cst_59 = arith.constant dense<0.000000e+00> : vector<16xf32>
    %132 = vector.multi_reduction <add>, %131, %cst_59 [1] : vector<16x32xf32> to vector<16xf32>
    %133 = vector.shape_cast %132 : vector<16xf32> to vector<16x1xf32>
    %cst_60 = arith.constant 3.200000e+01 : f32
    %134 = vector.broadcast %cst_60 : f32 to vector<16x1xf32>
    %135 = arith.divf %133, %134 : vector<16x1xf32>
    %136 = vector.broadcast %135 : vector<16x1xf32> to vector<16x32xf32>
    %137 = arith.subf %131, %136 : vector<16x32xf32>
    %138 = vector.broadcast %135 : vector<16x1xf32> to vector<16x32xf32>
    %139 = arith.subf %131, %138 : vector<16x32xf32>
    %140 = arith.mulf %137, %139 : vector<16x32xf32>
    %cst_61 = arith.constant dense<0.000000e+00> : vector<16xf32>
    %141 = vector.multi_reduction <add>, %140, %cst_61 [1] : vector<16x32xf32> to vector<16xf32>
    %142 = vector.shape_cast %141 : vector<16xf32> to vector<16x1xf32>
    %cst_62 = arith.constant 3.200000e+01 : f32
    %143 = vector.broadcast %cst_62 : f32 to vector<16x1xf32>
    %144 = arith.divf %142, %143 : vector<16x1xf32>
    %145 = vector.broadcast %135 : vector<16x1xf32> to vector<16x32xf32>
    %146 = arith.subf %131, %145 : vector<16x32xf32>
    %cst_63 = arith.constant 9.99999974E-6 : f32
    %147 = vector.broadcast %cst_63 : f32 to vector<16x1xf32>
    %148 = arith.addf %144, %147 : vector<16x1xf32>
    %149 = math.rsqrt %148 : vector<16x1xf32>
    %150 = vector.broadcast %149 : vector<16x1xf32> to vector<16x32xf32>
    %151 = arith.mulf %146, %150 : vector<16x32xf32>
    %152 = vector.broadcast %29 : vector<1x32xf32> to vector<16x32xf32>
    %153 = arith.mulf %151, %152 : vector<16x32xf32>
    %154 = vector.broadcast %30 : vector<1x32xf32> to vector<16x32xf32>
    %155 = arith.addf %153, %154 : vector<16x32xf32>
    %c0_64 = arith.constant 0 : index
    %c0_65 = arith.constant 0 : index
    %156 = vector.load %arg19[%c0_64, %c0_65] : memref<32x96xf32, #tpu.memory_space<vmem>>, vector<32x96xf32>
    %c0_66 = arith.constant 0 : index
    %c0_67 = arith.constant 0 : index
    %157 = vector.load %arg20[%c0_66, %c0_67] : memref<1x96xf32, #tpu.memory_space<vmem>>, vector<1x96xf32>
    %c0_68 = arith.constant 0 : index
    %c0_69 = arith.constant 0 : index
    %158 = vector.load %arg21[%c0_68, %c0_69] : memref<32x32xf32, #tpu.memory_space<vmem>>, vector<32x32xf32>
    %c0_70 = arith.constant 0 : index
    %c0_71 = arith.constant 0 : index
    %159 = vector.load %arg22[%c0_70, %c0_71] : memref<1x32xf32, #tpu.memory_space<vmem>>, vector<1x32xf32>
    %c0_72 = arith.constant 0 : index
    %c0_73 = arith.constant 0 : index
    %160 = vector.load %arg23[%c0_72, %c0_73] : memref<1x32xf32, #tpu.memory_space<vmem>>, vector<1x32xf32>
    %c0_74 = arith.constant 0 : index
    %c0_75 = arith.constant 0 : index
    %161 = vector.load %arg24[%c0_74, %c0_75] : memref<1x32xf32, #tpu.memory_space<vmem>>, vector<1x32xf32>
    %c0_76 = arith.constant 0 : index
    %c0_77 = arith.constant 0 : index
    %162 = vector.load %arg25[%c0_76, %c0_77] : memref<32x64xf32, #tpu.memory_space<vmem>>, vector<32x64xf32>
    %c0_78 = arith.constant 0 : index
    %c0_79 = arith.constant 0 : index
    %163 = vector.load %arg26[%c0_78, %c0_79] : memref<1x64xf32, #tpu.memory_space<vmem>>, vector<1x64xf32>
    %c0_80 = arith.constant 0 : index
    %c0_81 = arith.constant 0 : index
    %164 = vector.load %arg27[%c0_80, %c0_81] : memref<64x32xf32, #tpu.memory_space<vmem>>, vector<64x32xf32>
    %c0_82 = arith.constant 0 : index
    %c0_83 = arith.constant 0 : index
    %165 = vector.load %arg28[%c0_82, %c0_83] : memref<1x32xf32, #tpu.memory_space<vmem>>, vector<1x32xf32>
    %c0_84 = arith.constant 0 : index
    %c0_85 = arith.constant 0 : index
    %166 = vector.load %arg29[%c0_84, %c0_85] : memref<1x32xf32, #tpu.memory_space<vmem>>, vector<1x32xf32>
    %c0_86 = arith.constant 0 : index
    %c0_87 = arith.constant 0 : index
    %167 = vector.load %arg30[%c0_86, %c0_87] : memref<1x32xf32, #tpu.memory_space<vmem>>, vector<1x32xf32>
    %168 = arith.truncf %15 : vector<16x32xf32> to vector<16x32xbf16>
    %169 = arith.truncf %156 : vector<32x96xf32> to vector<32x96xbf16>
    %cst_88 = arith.constant dense<0.000000e+00> : vector<16x96xf32>
    %170 = tpu.matmul %168, %169, %cst_88 {dimension_numbers = #tpu.dot_dimension_numbers<[1], [0], [0], [1], [0, 0, 1, 1], [], []>} : vector<16x32xbf16>, vector<32x96xbf16>, vector<16x96xf32> -> vector<16x96xf32>
    %171 = vector.broadcast %157 : vector<1x96xf32> to vector<16x96xf32>
    %172 = arith.addf %170, %171 : vector<16x96xf32>
    %173 = vector.extract_strided_slice %172 {offsets = [0, 0], sizes = [16, 32], strides = [1, 1]} : vector<16x96xf32> to vector<16x32xf32>
    %174 = vector.extract_strided_slice %172 {offsets = [0, 32], sizes = [16, 32], strides = [1, 1]} : vector<16x96xf32> to vector<16x32xf32>
    %175 = vector.extract_strided_slice %172 {offsets = [0, 64], sizes = [16, 32], strides = [1, 1]} : vector<16x96xf32> to vector<16x32xf32>
    %176 = vector.extract_strided_slice %173 {offsets = [0, 0], sizes = [16, 16], strides = [1, 1]} : vector<16x32xf32> to vector<16x16xf32>
    %177 = vector.extract_strided_slice %174 {offsets = [0, 0], sizes = [16, 16], strides = [1, 1]} : vector<16x32xf32> to vector<16x16xf32>
    %178 = vector.extract_strided_slice %175 {offsets = [0, 0], sizes = [16, 16], strides = [1, 1]} : vector<16x32xf32> to vector<16x16xf32>
    %179 = arith.truncf %176 : vector<16x16xf32> to vector<16x16xbf16>
    %180 = arith.truncf %177 : vector<16x16xf32> to vector<16x16xbf16>
    %cst_89 = arith.constant dense<0.000000e+00> : vector<16x16xf32>
    %181 = tpu.matmul %179, %180, %cst_89 {dimension_numbers = #tpu.dot_dimension_numbers<[1], [1], [0], [0], [0, 0, 1, 0], [], []>} : vector<16x16xbf16>, vector<16x16xbf16>, vector<16x16xf32> -> vector<16x16xf32>
    %cst_90 = arith.constant 2.500000e-01 : f32
    %182 = vector.broadcast %cst_90 : f32 to vector<16x16xf32>
    %183 = arith.mulf %181, %182 : vector<16x16xf32>
    %184 = arith.addf %183, %16 : vector<16x16xf32>
    %cst_91 = arith.constant dense<0xFF800000> : vector<16xf32>
    %185 = vector.multi_reduction <maximumf>, %184, %cst_91 [1] : vector<16x16xf32> to vector<16xf32>
    %186 = vector.shape_cast %185 : vector<16xf32> to vector<16x1xf32>
    %187 = vector.broadcast %186 : vector<16x1xf32> to vector<16x16xf32>
    %188 = arith.subf %184, %187 : vector<16x16xf32>
    %189 = math.exp %188 : vector<16x16xf32>
    %cst_92 = arith.constant dense<0.000000e+00> : vector<16xf32>
    %190 = vector.multi_reduction <add>, %189, %cst_92 [1] : vector<16x16xf32> to vector<16xf32>
    %191 = vector.shape_cast %190 : vector<16xf32> to vector<16x1xf32>
    %192 = tpu.reciprocal %191 {approx = true} : vector<16x1xf32> -> vector<16x1xf32>
    %193 = vector.broadcast %192 : vector<16x1xf32> to vector<16x16xf32>
    %194 = arith.mulf %189, %193 : vector<16x16xf32>
    %195 = arith.truncf %194 : vector<16x16xf32> to vector<16x16xbf16>
    %196 = arith.truncf %178 : vector<16x16xf32> to vector<16x16xbf16>
    %cst_93 = arith.constant dense<0.000000e+00> : vector<16x16xf32>
    %197 = tpu.matmul %195, %196, %cst_93 {dimension_numbers = #tpu.dot_dimension_numbers<[1], [0], [0], [1], [0, 0, 1, 1], [], []>} : vector<16x16xbf16>, vector<16x16xbf16>, vector<16x16xf32> -> vector<16x16xf32>
    %198 = vector.extract_strided_slice %158 {offsets = [0, 0], sizes = [16, 32], strides = [1, 1]} : vector<32x32xf32> to vector<16x32xf32>
    %199 = arith.truncf %197 : vector<16x16xf32> to vector<16x16xbf16>
    %200 = arith.truncf %198 : vector<16x32xf32> to vector<16x32xbf16>
    %cst_94 = arith.constant dense<0.000000e+00> : vector<16x32xf32>
    %201 = tpu.matmul %199, %200, %cst_94 {dimension_numbers = #tpu.dot_dimension_numbers<[1], [0], [0], [1], [0, 0, 1, 1], [], []>} : vector<16x16xbf16>, vector<16x32xbf16>, vector<16x32xf32> -> vector<16x32xf32>
    %202 = vector.extract_strided_slice %173 {offsets = [0, 16], sizes = [16, 16], strides = [1, 1]} : vector<16x32xf32> to vector<16x16xf32>
    %203 = vector.extract_strided_slice %174 {offsets = [0, 16], sizes = [16, 16], strides = [1, 1]} : vector<16x32xf32> to vector<16x16xf32>
    %204 = vector.extract_strided_slice %175 {offsets = [0, 16], sizes = [16, 16], strides = [1, 1]} : vector<16x32xf32> to vector<16x16xf32>
    %205 = arith.truncf %202 : vector<16x16xf32> to vector<16x16xbf16>
    %206 = arith.truncf %203 : vector<16x16xf32> to vector<16x16xbf16>
    %cst_95 = arith.constant dense<0.000000e+00> : vector<16x16xf32>
    %207 = tpu.matmul %205, %206, %cst_95 {dimension_numbers = #tpu.dot_dimension_numbers<[1], [1], [0], [0], [0, 0, 1, 0], [], []>} : vector<16x16xbf16>, vector<16x16xbf16>, vector<16x16xf32> -> vector<16x16xf32>
    %cst_96 = arith.constant 2.500000e-01 : f32
    %208 = vector.broadcast %cst_96 : f32 to vector<16x16xf32>
    %209 = arith.mulf %207, %208 : vector<16x16xf32>
    %210 = arith.addf %209, %16 : vector<16x16xf32>
    %cst_97 = arith.constant dense<0xFF800000> : vector<16xf32>
    %211 = vector.multi_reduction <maximumf>, %210, %cst_97 [1] : vector<16x16xf32> to vector<16xf32>
    %212 = vector.shape_cast %211 : vector<16xf32> to vector<16x1xf32>
    %213 = vector.broadcast %212 : vector<16x1xf32> to vector<16x16xf32>
    %214 = arith.subf %210, %213 : vector<16x16xf32>
    %215 = math.exp %214 : vector<16x16xf32>
    %cst_98 = arith.constant dense<0.000000e+00> : vector<16xf32>
    %216 = vector.multi_reduction <add>, %215, %cst_98 [1] : vector<16x16xf32> to vector<16xf32>
    %217 = vector.shape_cast %216 : vector<16xf32> to vector<16x1xf32>
    %218 = tpu.reciprocal %217 {approx = true} : vector<16x1xf32> -> vector<16x1xf32>
    %219 = vector.broadcast %218 : vector<16x1xf32> to vector<16x16xf32>
    %220 = arith.mulf %215, %219 : vector<16x16xf32>
    %221 = arith.truncf %220 : vector<16x16xf32> to vector<16x16xbf16>
    %222 = arith.truncf %204 : vector<16x16xf32> to vector<16x16xbf16>
    %cst_99 = arith.constant dense<0.000000e+00> : vector<16x16xf32>
    %223 = tpu.matmul %221, %222, %cst_99 {dimension_numbers = #tpu.dot_dimension_numbers<[1], [0], [0], [1], [0, 0, 1, 1], [], []>} : vector<16x16xbf16>, vector<16x16xbf16>, vector<16x16xf32> -> vector<16x16xf32>
    %224 = vector.extract_strided_slice %158 {offsets = [16, 0], sizes = [16, 32], strides = [1, 1]} : vector<32x32xf32> to vector<16x32xf32>
    %225 = arith.truncf %223 : vector<16x16xf32> to vector<16x16xbf16>
    %226 = arith.truncf %224 : vector<16x32xf32> to vector<16x32xbf16>
    %cst_100 = arith.constant dense<0.000000e+00> : vector<16x32xf32>
    %227 = tpu.matmul %225, %226, %cst_100 {dimension_numbers = #tpu.dot_dimension_numbers<[1], [0], [0], [1], [0, 0, 1, 1], [], []>} : vector<16x16xbf16>, vector<16x32xbf16>, vector<16x32xf32> -> vector<16x32xf32>
    %228 = arith.addf %201, %227 : vector<16x32xf32>
    %229 = vector.broadcast %159 : vector<1x32xf32> to vector<16x32xf32>
    %230 = arith.addf %228, %229 : vector<16x32xf32>
    %231 = arith.addf %15, %230 : vector<16x32xf32>
    %cst_101 = arith.constant dense<0.000000e+00> : vector<16xf32>
    %232 = vector.multi_reduction <add>, %231, %cst_101 [1] : vector<16x32xf32> to vector<16xf32>
    %233 = vector.shape_cast %232 : vector<16xf32> to vector<16x1xf32>
    %cst_102 = arith.constant 3.200000e+01 : f32
    %234 = vector.broadcast %cst_102 : f32 to vector<16x1xf32>
    %235 = arith.divf %233, %234 : vector<16x1xf32>
    %236 = vector.broadcast %235 : vector<16x1xf32> to vector<16x32xf32>
    %237 = arith.subf %231, %236 : vector<16x32xf32>
    %238 = vector.broadcast %235 : vector<16x1xf32> to vector<16x32xf32>
    %239 = arith.subf %231, %238 : vector<16x32xf32>
    %240 = arith.mulf %237, %239 : vector<16x32xf32>
    %cst_103 = arith.constant dense<0.000000e+00> : vector<16xf32>
    %241 = vector.multi_reduction <add>, %240, %cst_103 [1] : vector<16x32xf32> to vector<16xf32>
    %242 = vector.shape_cast %241 : vector<16xf32> to vector<16x1xf32>
    %cst_104 = arith.constant 3.200000e+01 : f32
    %243 = vector.broadcast %cst_104 : f32 to vector<16x1xf32>
    %244 = arith.divf %242, %243 : vector<16x1xf32>
    %245 = vector.broadcast %235 : vector<16x1xf32> to vector<16x32xf32>
    %246 = arith.subf %231, %245 : vector<16x32xf32>
    %cst_105 = arith.constant 9.99999974E-6 : f32
    %247 = vector.broadcast %cst_105 : f32 to vector<16x1xf32>
    %248 = arith.addf %244, %247 : vector<16x1xf32>
    %249 = math.rsqrt %248 : vector<16x1xf32>
    %250 = vector.broadcast %249 : vector<16x1xf32> to vector<16x32xf32>
    %251 = arith.mulf %246, %250 : vector<16x32xf32>
    %252 = vector.broadcast %160 : vector<1x32xf32> to vector<16x32xf32>
    %253 = arith.mulf %251, %252 : vector<16x32xf32>
    %254 = vector.broadcast %161 : vector<1x32xf32> to vector<16x32xf32>
    %255 = arith.addf %253, %254 : vector<16x32xf32>
    %256 = arith.truncf %255 : vector<16x32xf32> to vector<16x32xbf16>
    %257 = arith.truncf %162 : vector<32x64xf32> to vector<32x64xbf16>
    %cst_106 = arith.constant dense<0.000000e+00> : vector<16x64xf32>
    %258 = tpu.matmul %256, %257, %cst_106 {dimension_numbers = #tpu.dot_dimension_numbers<[1], [0], [0], [1], [0, 0, 1, 1], [], []>} : vector<16x32xbf16>, vector<32x64xbf16>, vector<16x64xf32> -> vector<16x64xf32>
    %259 = vector.broadcast %163 : vector<1x64xf32> to vector<16x64xf32>
    %260 = arith.addf %258, %259 : vector<16x64xf32>
    %cst_107 = arith.constant 0.000000e+00 : f32
    %261 = vector.broadcast %cst_107 : f32 to vector<16x64xf32>
    %262 = arith.maximumf %260, %261 : vector<16x64xf32>
    %263 = arith.truncf %262 : vector<16x64xf32> to vector<16x64xbf16>
    %264 = arith.truncf %164 : vector<64x32xf32> to vector<64x32xbf16>
    %cst_108 = arith.constant dense<0.000000e+00> : vector<16x32xf32>
    %265 = tpu.matmul %263, %264, %cst_108 {dimension_numbers = #tpu.dot_dimension_numbers<[1], [0], [0], [1], [0, 0, 1, 1], [], []>} : vector<16x64xbf16>, vector<64x32xbf16>, vector<16x32xf32> -> vector<16x32xf32>
    %266 = vector.broadcast %165 : vector<1x32xf32> to vector<16x32xf32>
    %267 = arith.addf %265, %266 : vector<16x32xf32>
    %268 = arith.addf %255, %267 : vector<16x32xf32>
    %cst_109 = arith.constant dense<0.000000e+00> : vector<16xf32>
    %269 = vector.multi_reduction <add>, %268, %cst_109 [1] : vector<16x32xf32> to vector<16xf32>
    %270 = vector.shape_cast %269 : vector<16xf32> to vector<16x1xf32>
    %cst_110 = arith.constant 3.200000e+01 : f32
    %271 = vector.broadcast %cst_110 : f32 to vector<16x1xf32>
    %272 = arith.divf %270, %271 : vector<16x1xf32>
    %273 = vector.broadcast %272 : vector<16x1xf32> to vector<16x32xf32>
    %274 = arith.subf %268, %273 : vector<16x32xf32>
    %275 = vector.broadcast %272 : vector<16x1xf32> to vector<16x32xf32>
    %276 = arith.subf %268, %275 : vector<16x32xf32>
    %277 = arith.mulf %274, %276 : vector<16x32xf32>
    %cst_111 = arith.constant dense<0.000000e+00> : vector<16xf32>
    %278 = vector.multi_reduction <add>, %277, %cst_111 [1] : vector<16x32xf32> to vector<16xf32>
    %279 = vector.shape_cast %278 : vector<16xf32> to vector<16x1xf32>
    %cst_112 = arith.constant 3.200000e+01 : f32
    %280 = vector.broadcast %cst_112 : f32 to vector<16x1xf32>
    %281 = arith.divf %279, %280 : vector<16x1xf32>
    %282 = vector.broadcast %272 : vector<16x1xf32> to vector<16x32xf32>
    %283 = arith.subf %268, %282 : vector<16x32xf32>
    %cst_113 = arith.constant 9.99999974E-6 : f32
    %284 = vector.broadcast %cst_113 : f32 to vector<16x1xf32>
    %285 = arith.addf %281, %284 : vector<16x1xf32>
    %286 = math.rsqrt %285 : vector<16x1xf32>
    %287 = vector.broadcast %286 : vector<16x1xf32> to vector<16x32xf32>
    %288 = arith.mulf %283, %287 : vector<16x32xf32>
    %289 = vector.broadcast %166 : vector<1x32xf32> to vector<16x32xf32>
    %290 = arith.mulf %288, %289 : vector<16x32xf32>
    %291 = vector.broadcast %167 : vector<1x32xf32> to vector<16x32xf32>
    %292 = arith.addf %290, %291 : vector<16x32xf32>
    %c0_114 = arith.constant 0 : index
    %c0_115 = arith.constant 0 : index
    %293 = vector.load %arg31[%c0_114, %c0_115] : memref<32x64xf32, #tpu.memory_space<vmem>>, vector<32x64xf32>
    %c0_116 = arith.constant 0 : index
    %c0_117 = arith.constant 0 : index
    %294 = vector.load %arg32[%c0_116, %c0_117] : memref<1x64xf32, #tpu.memory_space<vmem>>, vector<1x64xf32>
    %c0_118 = arith.constant 0 : index
    %c0_119 = arith.constant 0 : index
    %295 = vector.load %arg33[%c0_118, %c0_119] : memref<32x32xf32, #tpu.memory_space<vmem>>, vector<32x32xf32>
    %c0_120 = arith.constant 0 : index
    %c0_121 = arith.constant 0 : index
    %296 = vector.load %arg34[%c0_120, %c0_121] : memref<1x32xf32, #tpu.memory_space<vmem>>, vector<1x32xf32>
    %c0_122 = arith.constant 0 : index
    %c0_123 = arith.constant 0 : index
    %297 = vector.load %arg35[%c0_122, %c0_123] : memref<32x32xf32, #tpu.memory_space<vmem>>, vector<32x32xf32>
    %c0_124 = arith.constant 0 : index
    %c0_125 = arith.constant 0 : index
    %298 = vector.load %arg36[%c0_124, %c0_125] : memref<1x32xf32, #tpu.memory_space<vmem>>, vector<1x32xf32>
    %c0_126 = arith.constant 0 : index
    %c0_127 = arith.constant 0 : index
    %299 = vector.load %arg37[%c0_126, %c0_127] : memref<1x32xf32, #tpu.memory_space<vmem>>, vector<1x32xf32>
    %c0_128 = arith.constant 0 : index
    %c0_129 = arith.constant 0 : index
    %300 = vector.load %arg38[%c0_128, %c0_129] : memref<1x32xf32, #tpu.memory_space<vmem>>, vector<1x32xf32>
    %c0_130 = arith.constant 0 : index
    %c0_131 = arith.constant 0 : index
    %301 = vector.load %arg39[%c0_130, %c0_131] : memref<32x64xf32, #tpu.memory_space<vmem>>, vector<32x64xf32>
    %c0_132 = arith.constant 0 : index
    %c0_133 = arith.constant 0 : index
    %302 = vector.load %arg40[%c0_132, %c0_133] : memref<1x64xf32, #tpu.memory_space<vmem>>, vector<1x64xf32>
    %c0_134 = arith.constant 0 : index
    %c0_135 = arith.constant 0 : index
    %303 = vector.load %arg41[%c0_134, %c0_135] : memref<64x32xf32, #tpu.memory_space<vmem>>, vector<64x32xf32>
    %c0_136 = arith.constant 0 : index
    %c0_137 = arith.constant 0 : index
    %304 = vector.load %arg42[%c0_136, %c0_137] : memref<1x32xf32, #tpu.memory_space<vmem>>, vector<1x32xf32>
    %c0_138 = arith.constant 0 : index
    %c0_139 = arith.constant 0 : index
    %305 = vector.load %arg43[%c0_138, %c0_139] : memref<1x32xf32, #tpu.memory_space<vmem>>, vector<1x32xf32>
    %c0_140 = arith.constant 0 : index
    %c0_141 = arith.constant 0 : index
    %306 = vector.load %arg44[%c0_140, %c0_141] : memref<1x32xf32, #tpu.memory_space<vmem>>, vector<1x32xf32>
    %307 = arith.truncf %155 : vector<16x32xf32> to vector<16x32xbf16>
    %308 = arith.truncf %293 : vector<32x64xf32> to vector<32x64xbf16>
    %cst_142 = arith.constant dense<0.000000e+00> : vector<16x64xf32>
    %309 = tpu.matmul %307, %308, %cst_142 {dimension_numbers = #tpu.dot_dimension_numbers<[1], [0], [0], [1], [0, 0, 1, 1], [], []>} : vector<16x32xbf16>, vector<32x64xbf16>, vector<16x64xf32> -> vector<16x64xf32>
    %310 = vector.broadcast %294 : vector<1x64xf32> to vector<16x64xf32>
    %311 = arith.addf %309, %310 : vector<16x64xf32>
    %312 = arith.truncf %292 : vector<16x32xf32> to vector<16x32xbf16>
    %313 = arith.truncf %295 : vector<32x32xf32> to vector<32x32xbf16>
    %cst_143 = arith.constant dense<0.000000e+00> : vector<16x32xf32>
    %314 = tpu.matmul %312, %313, %cst_143 {dimension_numbers = #tpu.dot_dimension_numbers<[1], [0], [0], [1], [0, 0, 1, 1], [], []>} : vector<16x32xbf16>, vector<32x32xbf16>, vector<16x32xf32> -> vector<16x32xf32>
    %315 = vector.broadcast %296 : vector<1x32xf32> to vector<16x32xf32>
    %316 = arith.addf %314, %315 : vector<16x32xf32>
    %317 = vector.extract_strided_slice %311 {offsets = [0, 0], sizes = [16, 32], strides = [1, 1]} : vector<16x64xf32> to vector<16x32xf32>
    %318 = vector.extract_strided_slice %311 {offsets = [0, 32], sizes = [16, 32], strides = [1, 1]} : vector<16x64xf32> to vector<16x32xf32>
    %319 = vector.extract_strided_slice %317 {offsets = [0, 0], sizes = [16, 16], strides = [1, 1]} : vector<16x32xf32> to vector<16x16xf32>
    %320 = vector.extract_strided_slice %318 {offsets = [0, 0], sizes = [16, 16], strides = [1, 1]} : vector<16x32xf32> to vector<16x16xf32>
    %321 = vector.extract_strided_slice %316 {offsets = [0, 0], sizes = [16, 16], strides = [1, 1]} : vector<16x32xf32> to vector<16x16xf32>
    %322 = arith.truncf %319 : vector<16x16xf32> to vector<16x16xbf16>
    %323 = arith.truncf %320 : vector<16x16xf32> to vector<16x16xbf16>
    %cst_144 = arith.constant dense<0.000000e+00> : vector<16x16xf32>
    %324 = tpu.matmul %322, %323, %cst_144 {dimension_numbers = #tpu.dot_dimension_numbers<[1], [1], [0], [0], [0, 0, 1, 0], [], []>} : vector<16x16xbf16>, vector<16x16xbf16>, vector<16x16xf32> -> vector<16x16xf32>
    %cst_145 = arith.constant 2.500000e-01 : f32
    %325 = vector.broadcast %cst_145 : f32 to vector<16x16xf32>
    %326 = arith.mulf %324, %325 : vector<16x16xf32>
    %327 = arith.addf %326, %17 : vector<16x16xf32>
    %cst_146 = arith.constant dense<0xFF800000> : vector<16xf32>
    %328 = vector.multi_reduction <maximumf>, %327, %cst_146 [1] : vector<16x16xf32> to vector<16xf32>
    %329 = vector.shape_cast %328 : vector<16xf32> to vector<16x1xf32>
    %330 = vector.broadcast %329 : vector<16x1xf32> to vector<16x16xf32>
    %331 = arith.subf %327, %330 : vector<16x16xf32>
    %332 = math.exp %331 : vector<16x16xf32>
    %cst_147 = arith.constant dense<0.000000e+00> : vector<16xf32>
    %333 = vector.multi_reduction <add>, %332, %cst_147 [1] : vector<16x16xf32> to vector<16xf32>
    %334 = vector.shape_cast %333 : vector<16xf32> to vector<16x1xf32>
    %335 = tpu.reciprocal %334 {approx = true} : vector<16x1xf32> -> vector<16x1xf32>
    %336 = vector.broadcast %335 : vector<16x1xf32> to vector<16x16xf32>
    %337 = arith.mulf %332, %336 : vector<16x16xf32>
    %338 = vector.broadcast %18 : vector<16x1xf32> to vector<16x16xf32>
    %339 = arith.mulf %337, %338 : vector<16x16xf32>
    %340 = arith.truncf %339 : vector<16x16xf32> to vector<16x16xbf16>
    %341 = arith.truncf %321 : vector<16x16xf32> to vector<16x16xbf16>
    %cst_148 = arith.constant dense<0.000000e+00> : vector<16x16xf32>
    %342 = tpu.matmul %340, %341, %cst_148 {dimension_numbers = #tpu.dot_dimension_numbers<[1], [0], [0], [1], [0, 0, 1, 1], [], []>} : vector<16x16xbf16>, vector<16x16xbf16>, vector<16x16xf32> -> vector<16x16xf32>
    %343 = vector.extract_strided_slice %297 {offsets = [0, 0], sizes = [16, 32], strides = [1, 1]} : vector<32x32xf32> to vector<16x32xf32>
    %344 = arith.truncf %342 : vector<16x16xf32> to vector<16x16xbf16>
    %345 = arith.truncf %343 : vector<16x32xf32> to vector<16x32xbf16>
    %cst_149 = arith.constant dense<0.000000e+00> : vector<16x32xf32>
    %346 = tpu.matmul %344, %345, %cst_149 {dimension_numbers = #tpu.dot_dimension_numbers<[1], [0], [0], [1], [0, 0, 1, 1], [], []>} : vector<16x16xbf16>, vector<16x32xbf16>, vector<16x32xf32> -> vector<16x32xf32>
    %347 = vector.extract_strided_slice %317 {offsets = [0, 16], sizes = [16, 16], strides = [1, 1]} : vector<16x32xf32> to vector<16x16xf32>
    %348 = vector.extract_strided_slice %318 {offsets = [0, 16], sizes = [16, 16], strides = [1, 1]} : vector<16x32xf32> to vector<16x16xf32>
    %349 = vector.extract_strided_slice %316 {offsets = [0, 16], sizes = [16, 16], strides = [1, 1]} : vector<16x32xf32> to vector<16x16xf32>
    %350 = arith.truncf %347 : vector<16x16xf32> to vector<16x16xbf16>
    %351 = arith.truncf %348 : vector<16x16xf32> to vector<16x16xbf16>
    %cst_150 = arith.constant dense<0.000000e+00> : vector<16x16xf32>
    %352 = tpu.matmul %350, %351, %cst_150 {dimension_numbers = #tpu.dot_dimension_numbers<[1], [1], [0], [0], [0, 0, 1, 0], [], []>} : vector<16x16xbf16>, vector<16x16xbf16>, vector<16x16xf32> -> vector<16x16xf32>
    %cst_151 = arith.constant 2.500000e-01 : f32
    %353 = vector.broadcast %cst_151 : f32 to vector<16x16xf32>
    %354 = arith.mulf %352, %353 : vector<16x16xf32>
    %355 = arith.addf %354, %17 : vector<16x16xf32>
    %cst_152 = arith.constant dense<0xFF800000> : vector<16xf32>
    %356 = vector.multi_reduction <maximumf>, %355, %cst_152 [1] : vector<16x16xf32> to vector<16xf32>
    %357 = vector.shape_cast %356 : vector<16xf32> to vector<16x1xf32>
    %358 = vector.broadcast %357 : vector<16x1xf32> to vector<16x16xf32>
    %359 = arith.subf %355, %358 : vector<16x16xf32>
    %360 = math.exp %359 : vector<16x16xf32>
    %cst_153 = arith.constant dense<0.000000e+00> : vector<16xf32>
    %361 = vector.multi_reduction <add>, %360, %cst_153 [1] : vector<16x16xf32> to vector<16xf32>
    %362 = vector.shape_cast %361 : vector<16xf32> to vector<16x1xf32>
    %363 = tpu.reciprocal %362 {approx = true} : vector<16x1xf32> -> vector<16x1xf32>
    %364 = vector.broadcast %363 : vector<16x1xf32> to vector<16x16xf32>
    %365 = arith.mulf %360, %364 : vector<16x16xf32>
    %366 = vector.broadcast %18 : vector<16x1xf32> to vector<16x16xf32>
    %367 = arith.mulf %365, %366 : vector<16x16xf32>
    %368 = arith.truncf %367 : vector<16x16xf32> to vector<16x16xbf16>
    %369 = arith.truncf %349 : vector<16x16xf32> to vector<16x16xbf16>
    %cst_154 = arith.constant dense<0.000000e+00> : vector<16x16xf32>
    %370 = tpu.matmul %368, %369, %cst_154 {dimension_numbers = #tpu.dot_dimension_numbers<[1], [0], [0], [1], [0, 0, 1, 1], [], []>} : vector<16x16xbf16>, vector<16x16xbf16>, vector<16x16xf32> -> vector<16x16xf32>
    %371 = vector.extract_strided_slice %297 {offsets = [16, 0], sizes = [16, 32], strides = [1, 1]} : vector<32x32xf32> to vector<16x32xf32>
    %372 = arith.truncf %370 : vector<16x16xf32> to vector<16x16xbf16>
    %373 = arith.truncf %371 : vector<16x32xf32> to vector<16x32xbf16>
    %cst_155 = arith.constant dense<0.000000e+00> : vector<16x32xf32>
    %374 = tpu.matmul %372, %373, %cst_155 {dimension_numbers = #tpu.dot_dimension_numbers<[1], [0], [0], [1], [0, 0, 1, 1], [], []>} : vector<16x16xbf16>, vector<16x32xbf16>, vector<16x32xf32> -> vector<16x32xf32>
    %375 = arith.addf %346, %374 : vector<16x32xf32>
    %376 = vector.broadcast %298 : vector<1x32xf32> to vector<16x32xf32>
    %377 = arith.addf %375, %376 : vector<16x32xf32>
    %378 = arith.addf %155, %377 : vector<16x32xf32>
    %cst_156 = arith.constant dense<0.000000e+00> : vector<16xf32>
    %379 = vector.multi_reduction <add>, %378, %cst_156 [1] : vector<16x32xf32> to vector<16xf32>
    %380 = vector.shape_cast %379 : vector<16xf32> to vector<16x1xf32>
    %cst_157 = arith.constant 3.200000e+01 : f32
    %381 = vector.broadcast %cst_157 : f32 to vector<16x1xf32>
    %382 = arith.divf %380, %381 : vector<16x1xf32>
    %383 = vector.broadcast %382 : vector<16x1xf32> to vector<16x32xf32>
    %384 = arith.subf %378, %383 : vector<16x32xf32>
    %385 = vector.broadcast %382 : vector<16x1xf32> to vector<16x32xf32>
    %386 = arith.subf %378, %385 : vector<16x32xf32>
    %387 = arith.mulf %384, %386 : vector<16x32xf32>
    %cst_158 = arith.constant dense<0.000000e+00> : vector<16xf32>
    %388 = vector.multi_reduction <add>, %387, %cst_158 [1] : vector<16x32xf32> to vector<16xf32>
    %389 = vector.shape_cast %388 : vector<16xf32> to vector<16x1xf32>
    %cst_159 = arith.constant 3.200000e+01 : f32
    %390 = vector.broadcast %cst_159 : f32 to vector<16x1xf32>
    %391 = arith.divf %389, %390 : vector<16x1xf32>
    %392 = vector.broadcast %382 : vector<16x1xf32> to vector<16x32xf32>
    %393 = arith.subf %378, %392 : vector<16x32xf32>
    %cst_160 = arith.constant 9.99999974E-6 : f32
    %394 = vector.broadcast %cst_160 : f32 to vector<16x1xf32>
    %395 = arith.addf %391, %394 : vector<16x1xf32>
    %396 = math.rsqrt %395 : vector<16x1xf32>
    %397 = vector.broadcast %396 : vector<16x1xf32> to vector<16x32xf32>
    %398 = arith.mulf %393, %397 : vector<16x32xf32>
    %399 = vector.broadcast %299 : vector<1x32xf32> to vector<16x32xf32>
    %400 = arith.mulf %398, %399 : vector<16x32xf32>
    %401 = vector.broadcast %300 : vector<1x32xf32> to vector<16x32xf32>
    %402 = arith.addf %400, %401 : vector<16x32xf32>
    %403 = arith.truncf %402 : vector<16x32xf32> to vector<16x32xbf16>
    %404 = arith.truncf %301 : vector<32x64xf32> to vector<32x64xbf16>
    %cst_161 = arith.constant dense<0.000000e+00> : vector<16x64xf32>
    %405 = tpu.matmul %403, %404, %cst_161 {dimension_numbers = #tpu.dot_dimension_numbers<[1], [0], [0], [1], [0, 0, 1, 1], [], []>} : vector<16x32xbf16>, vector<32x64xbf16>, vector<16x64xf32> -> vector<16x64xf32>
    %406 = vector.broadcast %302 : vector<1x64xf32> to vector<16x64xf32>
    %407 = arith.addf %405, %406 : vector<16x64xf32>
    %cst_162 = arith.constant 0.000000e+00 : f32
    %408 = vector.broadcast %cst_162 : f32 to vector<16x64xf32>
    %409 = arith.maximumf %407, %408 : vector<16x64xf32>
    %410 = arith.truncf %409 : vector<16x64xf32> to vector<16x64xbf16>
    %411 = arith.truncf %303 : vector<64x32xf32> to vector<64x32xbf16>
    %cst_163 = arith.constant dense<0.000000e+00> : vector<16x32xf32>
    %412 = tpu.matmul %410, %411, %cst_163 {dimension_numbers = #tpu.dot_dimension_numbers<[1], [0], [0], [1], [0, 0, 1, 1], [], []>} : vector<16x64xbf16>, vector<64x32xbf16>, vector<16x32xf32> -> vector<16x32xf32>
    %413 = vector.broadcast %304 : vector<1x32xf32> to vector<16x32xf32>
    %414 = arith.addf %412, %413 : vector<16x32xf32>
    %415 = arith.addf %402, %414 : vector<16x32xf32>
    %cst_164 = arith.constant dense<0.000000e+00> : vector<16xf32>
    %416 = vector.multi_reduction <add>, %415, %cst_164 [1] : vector<16x32xf32> to vector<16xf32>
    %417 = vector.shape_cast %416 : vector<16xf32> to vector<16x1xf32>
    %cst_165 = arith.constant 3.200000e+01 : f32
    %418 = vector.broadcast %cst_165 : f32 to vector<16x1xf32>
    %419 = arith.divf %417, %418 : vector<16x1xf32>
    %420 = vector.broadcast %419 : vector<16x1xf32> to vector<16x32xf32>
    %421 = arith.subf %415, %420 : vector<16x32xf32>
    %422 = vector.broadcast %419 : vector<16x1xf32> to vector<16x32xf32>
    %423 = arith.subf %415, %422 : vector<16x32xf32>
    %424 = arith.mulf %421, %423 : vector<16x32xf32>
    %cst_166 = arith.constant dense<0.000000e+00> : vector<16xf32>
    %425 = vector.multi_reduction <add>, %424, %cst_166 [1] : vector<16x32xf32> to vector<16xf32>
    %426 = vector.shape_cast %425 : vector<16xf32> to vector<16x1xf32>
    %cst_167 = arith.constant 3.200000e+01 : f32
    %427 = vector.broadcast %cst_167 : f32 to vector<16x1xf32>
    %428 = arith.divf %426, %427 : vector<16x1xf32>
    %429 = vector.broadcast %419 : vector<16x1xf32> to vector<16x32xf32>
    %430 = arith.subf %415, %429 : vector<16x32xf32>
    %cst_168 = arith.constant 9.99999974E-6 : f32
    %431 = vector.broadcast %cst_168 : f32 to vector<16x1xf32>
    %432 = arith.addf %428, %431 : vector<16x1xf32>
    %433 = math.rsqrt %432 : vector<16x1xf32>
    %434 = vector.broadcast %433 : vector<16x1xf32> to vector<16x32xf32>
    %435 = arith.mulf %430, %434 : vector<16x32xf32>
    %436 = vector.broadcast %305 : vector<1x32xf32> to vector<16x32xf32>
    %437 = arith.mulf %435, %436 : vector<16x32xf32>
    %438 = vector.broadcast %306 : vector<1x32xf32> to vector<16x32xf32>
    %439 = arith.addf %437, %438 : vector<16x32xf32>
    %c0_169 = arith.constant 0 : index
    %c0_170 = arith.constant 0 : index
    %440 = vector.load %arg45[%c0_169, %c0_170] : memref<32x32xf32, #tpu.memory_space<vmem>>, vector<32x32xf32>
    %c0_171 = arith.constant 0 : index
    %c0_172 = arith.constant 0 : index
    %441 = vector.load %arg46[%c0_171, %c0_172] : memref<32x32xf32, #tpu.memory_space<vmem>>, vector<32x32xf32>
    %c0_173 = arith.constant 0 : index
    %c0_174 = arith.constant 0 : index
    %442 = vector.load %arg47[%c0_173, %c0_174] : memref<1x32xf32, #tpu.memory_space<vmem>>, vector<1x32xf32>
    %c0_175 = arith.constant 0 : index
    %c0_176 = arith.constant 0 : index
    %443 = vector.load %arg48[%c0_175, %c0_176] : memref<32x16xf32, #tpu.memory_space<vmem>>, vector<32x16xf32>
    %c0_177 = arith.constant 0 : index
    %c0_178 = arith.constant 0 : index
    %444 = vector.load %arg49[%c0_177, %c0_178] : memref<1x16xf32, #tpu.memory_space<vmem>>, vector<1x16xf32>
    %c0_179 = arith.constant 0 : index
    %c0_180 = arith.constant 0 : index
    %445 = vector.load %arg50[%c0_179, %c0_180] : memref<1x16xf32, #tpu.memory_space<vmem>>, vector<1x16xf32>
    %c0_181 = arith.constant 0 : index
    %c0_182 = arith.constant 0 : index
    %446 = vector.load %arg51[%c0_181, %c0_182] : memref<1x1xf32, #tpu.memory_space<vmem>>, vector<1x1xf32>
    %447 = arith.truncf %439 : vector<16x32xf32> to vector<16x32xbf16>
    %448 = arith.truncf %440 : vector<32x32xf32> to vector<32x32xbf16>
    %cst_183 = arith.constant dense<0.000000e+00> : vector<16x32xf32>
    %449 = tpu.matmul %447, %448, %cst_183 {dimension_numbers = #tpu.dot_dimension_numbers<[1], [0], [0], [1], [0, 0, 1, 1], [], []>} : vector<16x32xbf16>, vector<32x32xbf16>, vector<16x32xf32> -> vector<16x32xf32>
    %450 = arith.truncf %13 : vector<16x32xf32> to vector<16x32xbf16>
    %451 = arith.truncf %441 : vector<32x32xf32> to vector<32x32xbf16>
    %cst_184 = arith.constant dense<0.000000e+00> : vector<16x32xf32>
    %452 = tpu.matmul %450, %451, %cst_184 {dimension_numbers = #tpu.dot_dimension_numbers<[1], [0], [0], [1], [0, 0, 1, 1], [], []>} : vector<16x32xbf16>, vector<32x32xbf16>, vector<16x32xf32> -> vector<16x32xf32>
    %453 = arith.addf %449, %452 : vector<16x32xf32>
    %454 = vector.broadcast %442 : vector<1x32xf32> to vector<16x32xf32>
    %455 = arith.addf %453, %454 : vector<16x32xf32>
    %cst_185 = arith.constant 5.000000e-01 : f32
    %456 = vector.broadcast %cst_185 : f32 to vector<16x32xf32>
    %457 = arith.mulf %456, %455 : vector<16x32xf32>
    %cst_186 = arith.constant 0.707106769 : f32
    %458 = vector.broadcast %cst_186 : f32 to vector<16x32xf32>
    %459 = arith.mulf %455, %458 : vector<16x32xf32>
    %460 = math.erf %459 : vector<16x32xf32>
    %cst_187 = arith.constant 1.000000e+00 : f32
    %461 = vector.broadcast %cst_187 : f32 to vector<16x32xf32>
    %462 = arith.addf %461, %460 : vector<16x32xf32>
    %463 = arith.mulf %457, %462 : vector<16x32xf32>
    %464 = arith.truncf %463 : vector<16x32xf32> to vector<16x32xbf16>
    %465 = arith.truncf %443 : vector<32x16xf32> to vector<32x16xbf16>
    %cst_188 = arith.constant dense<0.000000e+00> : vector<16x16xf32>
    %466 = tpu.matmul %464, %465, %cst_188 {dimension_numbers = #tpu.dot_dimension_numbers<[1], [0], [0], [1], [0, 0, 1, 1], [], []>} : vector<16x32xbf16>, vector<32x16xbf16>, vector<16x16xf32> -> vector<16x16xf32>
    %467 = vector.broadcast %444 : vector<1x16xf32> to vector<16x16xf32>
    %468 = arith.addf %466, %467 : vector<16x16xf32>
    %cst_189 = arith.constant 5.000000e-01 : f32
    %469 = vector.broadcast %cst_189 : f32 to vector<16x16xf32>
    %470 = arith.mulf %469, %468 : vector<16x16xf32>
    %cst_190 = arith.constant 0.707106769 : f32
    %471 = vector.broadcast %cst_190 : f32 to vector<16x16xf32>
    %472 = arith.mulf %468, %471 : vector<16x16xf32>
    %473 = math.erf %472 : vector<16x16xf32>
    %cst_191 = arith.constant 1.000000e+00 : f32
    %474 = vector.broadcast %cst_191 : f32 to vector<16x16xf32>
    %475 = arith.addf %474, %473 : vector<16x16xf32>
    %476 = arith.mulf %470, %475 : vector<16x16xf32>
    %477 = arith.truncf %445 : vector<1x16xf32> to vector<1x16xbf16>
    %478 = arith.truncf %476 : vector<16x16xf32> to vector<16x16xbf16>
    %cst_192 = arith.constant dense<0.000000e+00> : vector<1x16xf32>
    %479 = tpu.matmul %477, %478, %cst_192 {dimension_numbers = #tpu.dot_dimension_numbers<[1], [1], [0], [0], [0, 0, 1, 0], [], []>} : vector<1x16xbf16>, vector<16x16xbf16>, vector<1x16xf32> -> vector<1x16xf32>
    %480 = vector.broadcast %446 : vector<1x1xf32> to vector<1x16xf32>
    %481 = arith.addf %479, %480 : vector<1x16xf32>
    %482 = arith.negf %481 : vector<1x16xf32>
    %483 = math.exp %482 : vector<1x16xf32>
    %cst_193 = arith.constant 1.000000e+00 : f32
    %484 = vector.broadcast %cst_193 : f32 to vector<1x16xf32>
    %485 = arith.addf %484, %483 : vector<1x16xf32>
    %486 = arith.divf %484, %485 : vector<1x16xf32>
    %c0_194 = arith.constant 0 : index
    %c0_195 = arith.constant 0 : index
    %487 = vector.load %arg52[%c0_194, %c0_195] : memref<1x16xf32, #tpu.memory_space<vmem>>, vector<1x16xf32>
    tpu.vector_store %arg52[%c0_194, %c0_195], %486 {strides = array<i32>} : memref<1x16xf32, #tpu.memory_space<vmem>>, vector<1x16xf32>,
    return
  }
}

</mosaic_0001>

<llo_original>
// kernel: cl4kt_forward.1
$region0: #{cl4kt_forward.1}
  #allocation0 [shape = 'u32[]', space=smem, size = 0x4, offset = 0x4, fixed_abs, tag = 'smem constant byte address 0x4 - core index']
  #allocation1 [shape = 'u32[144,128]{1,0:T(1,128)}', space=vmem, size = 0x12000, scoped, tag = 'internal scratch']
  #allocation2 [shape = 'f32[1,1]{1,0:T(1,128)S(1)}', space=vmem, size = 0x200, scoped, tag = 'scoped memory for cl4kt_forward.1']
  %s0 = inlined_call_operand.smem [shape: u32[53], index: -1, kind: input, shape index: {}]
  %s1 = sld [smem:[%s0]]
  %s2 = scalar_lea.smem %s0, 1
  %s3 = sld [smem:[%s2]]
  %s4 = scalar_lea.smem %s0, 2
  %s5 = sld [smem:[%s4]]
  %s6 = scalar_lea.smem %s0, 3
  %s7 = sld [smem:[%s6]]
  %s8 = scalar_lea.smem %s0, 4
  %s9 = sld [smem:[%s8]]
  %s10 = scalar_lea.smem %s0, 5
  %s11 = sld [smem:[%s10]]
  %s12 = scalar_lea.smem %s0, 6
  %s13 = sld [smem:[%s12]]
  %s14 = scalar_lea.smem %s0, 7
  %s15 = sld [smem:[%s14]]
  %s16 = scalar_lea.smem %s0, 8
  %s17 = sld [smem:[%s16]]
  %s18 = scalar_lea.smem %s0, 9
  %s19 = sld [smem:[%s18]]
  %s20 = scalar_lea.smem %s0, 10
  %s21 = sld [smem:[%s20]]
  %s22 = scalar_lea.smem %s0, 11
  %s23 = sld [smem:[%s22]]
  %s24 = scalar_lea.smem %s0, 12
  %s25 = sld [smem:[%s24]]
  %s26 = scalar_lea.smem %s0, 13
  %s27 = sld [smem:[%s26]]
  %s28 = scalar_lea.smem %s0, 14
  %s29 = sld [smem:[%s28]]
  %s30 = scalar_lea.smem %s0, 15
  %s31 = sld [smem:[%s30]]
  %s32 = scalar_lea.smem %s0, 16
  %s33 = sld [smem:[%s32]]
  %s34 = scalar_lea.smem %s0, 17
  %s35 = sld [smem:[%s34]]
  %s36 = scalar_lea.smem %s0, 18
  %s37 = sld [smem:[%s36]]
  %s38 = scalar_lea.smem %s0, 19
  %s39 = sld [smem:[%s38]]
  %s40 = scalar_lea.smem %s0, 20
  %s41 = sld [smem:[%s40]]
  %s42 = scalar_lea.smem %s0, 21
  %s43 = sld [smem:[%s42]]
  %s44 = scalar_lea.smem %s0, 22
  %s45 = sld [smem:[%s44]]
  %s46 = scalar_lea.smem %s0, 23
  %s47 = sld [smem:[%s46]]
  %s48 = scalar_lea.smem %s0, 24
  %s49 = sld [smem:[%s48]]
  %s50 = scalar_lea.smem %s0, 25
  %s51 = sld [smem:[%s50]]
  %s52 = scalar_lea.smem %s0, 26
  %s53 = sld [smem:[%s52]]
  %s54 = scalar_lea.smem %s0, 27
  %s55 = sld [smem:[%s54]]
  %s56 = scalar_lea.smem %s0, 28
  %s57 = sld [smem:[%s56]]
  %s58 = scalar_lea.smem %s0, 29
  %s59 = sld [smem:[%s58]]
  %s60 = scalar_lea.smem %s0, 30
  %s61 = sld [smem:[%s60]]
  %s62 = scalar_lea.smem %s0, 31
  %s63 = sld [smem:[%s62]]
  %s64 = scalar_lea.smem %s0, 32
  %s65 = sld [smem:[%s64]]
  %s66 = scalar_lea.smem %s0, 33
  %s67 = sld [smem:[%s66]]
  %s68 = scalar_lea.smem %s0, 34
  %s69 = sld [smem:[%s68]]
  %s70 = scalar_lea.smem %s0, 35
  %s71 = sld [smem:[%s70]]
  %s72 = scalar_lea.smem %s0, 36
  %s73 = sld [smem:[%s72]]
  %s74 = scalar_lea.smem %s0, 37
  %s75 = sld [smem:[%s74]]
  %s76 = scalar_lea.smem %s0, 38
  %s77 = sld [smem:[%s76]]
  %s78 = scalar_lea.smem %s0, 39
  %s79 = sld [smem:[%s78]]
  %s80 = scalar_lea.smem %s0, 40
  %s81 = sld [smem:[%s80]]
  %s82 = scalar_lea.smem %s0, 41
  %s83 = sld [smem:[%s82]]
  %s84 = scalar_lea.smem %s0, 42
  %s85 = sld [smem:[%s84]]
  %s86 = scalar_lea.smem %s0, 43
  %s87 = sld [smem:[%s86]]
  %s88 = scalar_lea.smem %s0, 44
  %s89 = sld [smem:[%s88]]
  %s90 = scalar_lea.smem %s0, 45
  %s91 = sld [smem:[%s90]]
  %s92 = scalar_lea.smem %s0, 46
  %s93 = sld [smem:[%s92]]
  %s94 = scalar_lea.smem %s0, 47
  %s95 = sld [smem:[%s94]]
  %s96 = scalar_lea.smem %s0, 48
  %s97 = sld [smem:[%s96]]
  %s98 = scalar_lea.smem %s0, 49
  %s99 = sld [smem:[%s98]]
  %s100 = scalar_lea.smem %s0, 50
  %s101 = sld [smem:[%s100]]
  %s102 = scalar_lea.smem %s0, 51
  %s103 = sld [smem:[%s102]]
  %s104 = scalar_lea.smem %s0, 52
  %s105 = sld [smem:[%s104]]
  %s106 = sld [smem:[#allocation0]]
  $region266: #{cl4kt_forward.1} parent=0
    _
  %s108 = ssub.s32 1, %s106
  %s109 = scalar_select 0, %s108, %s106
  %v110 = vstv %s103
  %111 = vst [vmem:[#allocation2] sm:$0x1] %v110
  $region1: #{cl4kt_forward.1} parent=0
    #allocation3 [shape = 'u8[512]{0}', space=vmem, size = 0x400, scoped, tag = 'input window, operand 32, single buffered']
    #allocation4 [shape = 's32[1]{0}', space=sflag, size = 0x4, scoped, tag = 'scoped memory for cl4kt_forward.1']
    #allocation5 [shape = 'u8[512]{0}', space=vmem, size = 0x400, scoped, tag = 'input window, operand 34, single buffered']
    #allocation6 [shape = 's32[1]{0}', space=sflag, size = 0x4, scoped, tag = 'scoped memory for cl4kt_forward.1']
    #allocation7 [shape = 'u8[512]{0}', space=vmem, size = 0x400, scoped, tag = 'input window, operand 36, single buffered']
    #allocation8 [shape = 'u8[512]{0}', space=vmem, size = 0x400, scoped, tag = 'input window, operand 37, single buffered']
    #allocation9 [shape = 's32[1]{0}', space=sflag, size = 0x4, scoped, tag = 'scoped memory for cl4kt_forward.1']
    #allocation10 [shape = 'u8[512]{0}', space=vmem, size = 0x400, scoped, tag = 'input window, operand 38, single buffered']
    #allocation11 [shape = 'u8[512]{0}', space=vmem, size = 0x400, scoped, tag = 'input window, operand 40, single buffered']
    #allocation12 [shape = 's32[1]{0}', space=sflag, size = 0x4, scoped, tag = 'scoped memory for cl4kt_forward.1']
    #allocation13 [shape = 'u8[512]{0}', space=vmem, size = 0x400, scoped, tag = 'input window, operand 42, single buffered']
    #allocation14 [shape = 'u8[512]{0}', space=vmem, size = 0x400, scoped, tag = 'input window, operand 43, single buffered']
    #allocation15 [shape = 's32[1]{0}', space=sflag, size = 0x4, scoped, tag = 'scoped memory for cl4kt_forward.1']
    #allocation16 [shape = 'u8[512]{0}', space=vmem, size = 0x400, scoped, tag = 'input window, operand 44, single buffered']
    #allocation17 [shape = 'u8[512]{0}', space=vmem, size = 0x400, scoped, tag = 'input window, operand 47, single buffered']
    #allocation18 [shape = 's32[1]{0}', space=sflag, size = 0x4, scoped, tag = 'scoped memory for cl4kt_forward.1']
    #allocation19 [shape = 'u8[512]{0}', space=vmem, size = 0x400, scoped, tag = 'input window, operand 49, single buffered']
    #allocation20 [shape = 'u8[512]{0}', space=vmem, size = 0x400, scoped, tag = 'input window, operand 50, single buffered']
    #allocation21 [shape = 's32[1]{0}', space=sflag, size = 0x4, scoped, tag = 'scoped memory for cl4kt_forward.1']
    %112 = vsyncpa [#allocation4], 0
    %113 = vsyncpa [#allocation6], 0
    %114 = vsyncpa [#allocation9], 0
    %115 = vsyncpa [#allocation12], 0
    %116 = vsyncpa [#allocation15], 0
    %117 = vsyncpa [#allocation18], 0
    %118 = vsyncpa [#allocation21], 0
    // Predicated region
    $region2: #{cl4kt_forward.1} parent=1 // pred_check
      _
    $region3: #{cl4kt_forward.1} parent=1 // pred_check_branch
      %120 = sbr.rel (0) target = $region5
    $region4: #{cl4kt_forward.1} parent=1 // pred_region
      _
    $region5: #{cl4kt_forward.1} parent=1 // pred_fallthru
      _
    // Predicated region
    $region6: #{cl4kt_forward.1} parent=1 // pred_check
      _
    $region7: #{cl4kt_forward.1} parent=1 // pred_check_branch
      %122 = sbr.rel (0) target = $region9
    $region8: #{cl4kt_forward.1} parent=1 // pred_region
      _
    $region9: #{cl4kt_forward.1} parent=1 // pred_fallthru
      _
    // Predicated region
    $region10: #{cl4kt_forward.1} parent=1 // pred_check
      _
    $region11: #{cl4kt_forward.1} parent=1 // pred_check_branch
      %124 = sbr.rel (0) target = $region13
    $region12: #{cl4kt_forward.1} parent=1 // pred_region
      _
    $region13: #{cl4kt_forward.1} parent=1 // pred_fallthru
      _
    // Predicated region
    $region14: #{cl4kt_forward.1} parent=1 // pred_check
      _
    $region15: #{cl4kt_forward.1} parent=1 // pred_check_branch
      %126 = sbr.rel (0) target = $region17
    $region16: #{cl4kt_forward.1} parent=1 // pred_region
      _
    $region17: #{cl4kt_forward.1} parent=1 // pred_fallthru
      _
    // Predicated region
    $region18: #{cl4kt_forward.1} parent=1 // pred_check
      _
    $region19: #{cl4kt_forward.1} parent=1 // pred_check_branch
      %128 = sbr.rel (0) target = $region21
    $region20: #{cl4kt_forward.1} parent=1 // pred_region
      _
    $region21: #{cl4kt_forward.1} parent=1 // pred_fallthru
      _
    // Predicated region
    $region22: #{cl4kt_forward.1} parent=1 // pred_check
      _
    $region23: #{cl4kt_forward.1} parent=1 // pred_check_branch
      %130 = sbr.rel (0) target = $region25
    $region24: #{cl4kt_forward.1} parent=1 // pred_region
      _
    $region25: #{cl4kt_forward.1} parent=1 // pred_fallthru
      _
    // Predicated region
    $region26: #{cl4kt_forward.1} parent=1 // pred_check
      _
    $region27: #{cl4kt_forward.1} parent=1 // pred_check_branch
      %132 = sbr.rel (0) target = $region29
    $region28: #{cl4kt_forward.1} parent=1 // pred_region
      _
    $region29: #{cl4kt_forward.1} parent=1 // pred_fallthru
      _
    // Predicated region
    $region30: #{cl4kt_forward.1} parent=1 // pred_check
      _
    $region31: #{cl4kt_forward.1} parent=1 // pred_check_branch
      %134 = sbr.rel (0) target = $region33
    $region32: #{cl4kt_forward.1} parent=1 // pred_region
      _
    $region33: #{cl4kt_forward.1} parent=1 // pred_fallthru
      _
    // Predicated region
    $region34: #{cl4kt_forward.1} parent=1 // pred_check
      _
    $region35: #{cl4kt_forward.1} parent=1 // pred_check_branch
      %136 = sbr.rel (0) target = $region37
    $region36: #{cl4kt_forward.1} parent=1 // pred_region
      _
    $region37: #{cl4kt_forward.1} parent=1 // pred_fallthru
      _
    // Predicated region
    $region38: #{cl4kt_forward.1} parent=1 // pred_check
      _
    $region39: #{cl4kt_forward.1} parent=1 // pred_check_branch
      %138 = sbr.rel (0) target = $region41
    $region40: #{cl4kt_forward.1} parent=1 // pred_region
      _
    $region41: #{cl4kt_forward.1} parent=1 // pred_fallthru
      _
    // Predicated region
    $region42: #{cl4kt_forward.1} parent=1 // pred_check
      _
    $region43: #{cl4kt_forward.1} parent=1 // pred_check_branch
      %140 = sbr.rel (0) target = $region45
    $region44: #{cl4kt_forward.1} parent=1 // pred_region
      _
    $region45: #{cl4kt_forward.1} parent=1 // pred_fallthru
      _
    // Predicated region
    $region46: #{cl4kt_forward.1} parent=1 // pred_check
      _
    $region47: #{cl4kt_forward.1} parent=1 // pred_check_branch
      %142 = sbr.rel (0) target = $region49
    $region48: #{cl4kt_forward.1} parent=1 // pred_region
      _
    $region49: #{cl4kt_forward.1} parent=1 // pred_fallthru
      _
    // Predicated region
    $region50: #{cl4kt_forward.1} parent=1 // pred_check
      _
    $region51: #{cl4kt_forward.1} parent=1 // pred_check_branch
      %144 = sbr.rel (0) target = $region53
    $region52: #{cl4kt_forward.1} parent=1 // pred_region
      _
    $region53: #{cl4kt_forward.1} parent=1 // pred_fallthru
      _
    // Predicated region
    $region54: #{cl4kt_forward.1} parent=1 // pred_check
      _
    $region55: #{cl4kt_forward.1} parent=1 // pred_check_branch
      %146 = sbr.rel (0) target = $region57
    $region56: #{cl4kt_forward.1} parent=1 // pred_region
      _
    $region57: #{cl4kt_forward.1} parent=1 // pred_fallthru
      _
    // Predicated region
    $region58: #{cl4kt_forward.1} parent=1 // pred_check
      _
    $region59: #{cl4kt_forward.1} parent=1 // pred_check_branch
      %148 = sbr.rel (0) target = $region61
    $region60: #{cl4kt_forward.1} parent=1 // pred_region
      _
    $region61: #{cl4kt_forward.1} parent=1 // pred_fallthru
      _
    // Predicated region
    $region62: #{cl4kt_forward.1} parent=1 // pred_check
      _
    $region63: #{cl4kt_forward.1} parent=1 // pred_check_branch
      %150 = sbr.rel (0) target = $region65
    $region64: #{cl4kt_forward.1} parent=1 // pred_region
      _
    $region65: #{cl4kt_forward.1} parent=1 // pred_fallthru
      _
    // Predicated region
    $region66: #{cl4kt_forward.1} parent=1 // pred_check
      _
    $region67: #{cl4kt_forward.1} parent=1 // pred_check_branch
      %152 = sbr.rel (0) target = $region69
    $region68: #{cl4kt_forward.1} parent=1 // pred_region
      _
    $region69: #{cl4kt_forward.1} parent=1 // pred_fallthru
      _
    // Predicated region
    $region70: #{cl4kt_forward.1} parent=1 // pred_check
      _
    $region71: #{cl4kt_forward.1} parent=1 // pred_check_branch
      %154 = sbr.rel (0) target = $region73
    $region72: #{cl4kt_forward.1} parent=1 // pred_region
      _
    $region73: #{cl4kt_forward.1} parent=1 // pred_fallthru
      _
    // Predicated region
    $region74: #{cl4kt_forward.1} parent=1 // pred_check
      _
    $region75: #{cl4kt_forward.1} parent=1 // pred_check_branch
      %156 = sbr.rel (0) target = $region77
    $region76: #{cl4kt_forward.1} parent=1 // pred_region
      _
    $region77: #{cl4kt_forward.1} parent=1 // pred_fallthru
      _
    // Predicated region
    $region78: #{cl4kt_forward.1} parent=1 // pred_check
      _
    $region79: #{cl4kt_forward.1} parent=1 // pred_check_branch
      %158 = sbr.rel (0) target = $region81
    $region80: #{cl4kt_forward.1} parent=1 // pred_region
      _
    $region81: #{cl4kt_forward.1} parent=1 // pred_fallthru
      _
    // Predicated region
    $region82: #{cl4kt_forward.1} parent=1 // pred_check
      _
    $region83: #{cl4kt_forward.1} parent=1 // pred_check_branch
      %160 = sbr.rel (0) target = $region85
    $region84: #{cl4kt_forward.1} parent=1 // pred_region
      _
    $region85: #{cl4kt_forward.1} parent=1 // pred_fallthru
      _
    // Predicated region
    $region86: #{cl4kt_forward.1} parent=1 // pred_check
      _
    $region87: #{cl4kt_forward.1} parent=1 // pred_check_branch
      %162 = sbr.rel (0) target = $region89
    $region88: #{cl4kt_forward.1} parent=1 // pred_region
      _
    $region89: #{cl4kt_forward.1} parent=1 // pred_fallthru
      _
    // Predicated region
    $region90: #{cl4kt_forward.1} parent=1 // pred_check
      _
    $region91: #{cl4kt_forward.1} parent=1 // pred_check_branch
      %164 = sbr.rel (0) target = $region93
    $region92: #{cl4kt_forward.1} parent=1 // pred_region
      _
    $region93: #{cl4kt_forward.1} parent=1 // pred_fallthru
      _
    // Predicated region
    $region94: #{cl4kt_forward.1} parent=1 // pred_check
      _
    $region95: #{cl4kt_forward.1} parent=1 // pred_check_branch
      %166 = sbr.rel (0) target = $region97
    $region96: #{cl4kt_forward.1} parent=1 // pred_region
      _
    $region97: #{cl4kt_forward.1} parent=1 // pred_fallthru
      _
    // Predicated region
    $region98: #{cl4kt_forward.1} parent=1 // pred_check
      _
    $region99: #{cl4kt_forward.1} parent=1 // pred_check_branch
      %168 = sbr.rel (0) target = $region101
    $region100: #{cl4kt_forward.1} parent=1 // pred_region
      _
    $region101: #{cl4kt_forward.1} parent=1 // pred_fallthru
      _
    // Predicated region
    $region102: #{cl4kt_forward.1} parent=1 // pred_check
      _
    $region103: #{cl4kt_forward.1} parent=1 // pred_check_branch
      %170 = sbr.rel (0) target = $region105
    $region104: #{cl4kt_forward.1} parent=1 // pred_region
      _
    $region105: #{cl4kt_forward.1} parent=1 // pred_fallthru
      _
    // Predicated region
    $region106: #{cl4kt_forward.1} parent=1 // pred_check
      _
    $region107: #{cl4kt_forward.1} parent=1 // pred_check_branch
      %172 = sbr.rel (0) target = $region109
    $region108: #{cl4kt_forward.1} parent=1 // pred_region
      _
    $region109: #{cl4kt_forward.1} parent=1 // pred_fallthru
      _
    // Predicated region
    $region110: #{cl4kt_forward.1} parent=1 // pred_check
      _
    $region111: #{cl4kt_forward.1} parent=1 // pred_check_branch
      %174 = sbr.rel (0) target = $region113
    $region112: #{cl4kt_forward.1} parent=1 // pred_region
      _
    $region113: #{cl4kt_forward.1} parent=1 // pred_fallthru
      _
    // Predicated region
    $region114: #{cl4kt_forward.1} parent=1 // pred_check
      _
    $region115: #{cl4kt_forward.1} parent=1 // pred_check_branch
      %176 = sbr.rel (0) target = $region117
    $region116: #{cl4kt_forward.1} parent=1 // pred_region
      _
    $region117: #{cl4kt_forward.1} parent=1 // pred_fallthru
      _
    // Predicated region
    $region118: #{cl4kt_forward.1} parent=1 // pred_check
      _
    $region119: #{cl4kt_forward.1} parent=1 // pred_check_branch
      %178 = sbr.rel (0) target = $region121
    $region120: #{cl4kt_forward.1} parent=1 // pred_region
      _
    $region121: #{cl4kt_forward.1} parent=1 // pred_fallthru
      _
    // Predicated region
    $region122: #{cl4kt_forward.1} parent=1 // pred_check
      _
    $region123: #{cl4kt_forward.1} parent=1 // pred_check_branch
      %180 = sbr.rel (0) target = $region125
    $region124: #{cl4kt_forward.1} parent=1 // pred_region
      _
    $region125: #{cl4kt_forward.1} parent=1 // pred_fallthru
      _
    // Predicated region
    $region126: #{cl4kt_forward.1} parent=1 // pred_check
      _
    $region127: #{cl4kt_forward.1} parent=1 // pred_check_branch
      %182 = sbr.rel (0) target = $region129
    $region128: #{cl4kt_forward.1} parent=1 // pred_region
      _
    $region129: #{cl4kt_forward.1} parent=1 // pred_fallthru
      _
    // Predicated region
    $region130: #{cl4kt_forward.1} parent=1 // pred_check
      _
    $region131: #{cl4kt_forward.1} parent=1 // pred_check_branch
      %184 = sbr.rel (0) target = $region133
    $region132: #{cl4kt_forward.1} parent=1 // pred_region
      %s186 = ssub.s32 16, 16
      %187 = vsyncadd [#allocation4], %s186
      %s189 = sshll.u32 [#allocation3], 4
      %s190 = int_to_ptr.vmem [resolvable:$true] %s189
      %192 = dma.hbm_to_vmem [thread:$0]  %s65, 16, %s190, [#allocation4]
    $region133: #{cl4kt_forward.1} parent=1 // pred_fallthru
      _
    // Predicated region
    $region134: #{cl4kt_forward.1} parent=1 // pred_check
      _
    $region135: #{cl4kt_forward.1} parent=1 // pred_check_branch
      %194 = sbr.rel (0) target = $region137
    $region136: #{cl4kt_forward.1} parent=1 // pred_region
      _
    $region137: #{cl4kt_forward.1} parent=1 // pred_fallthru
      _
    // Predicated region
    $region138: #{cl4kt_forward.1} parent=1 // pred_check
      _
    $region139: #{cl4kt_forward.1} parent=1 // pred_check_branch
      %196 = sbr.rel (0) target = $region141
    $region140: #{cl4kt_forward.1} parent=1 // pred_region
      %s198 = ssub.s32 16, 16
      %199 = vsyncadd [#allocation6], %s198
      %s201 = sshll.u32 [#allocation5], 4
      %s202 = int_to_ptr.vmem [resolvable:$true] %s201
      %204 = dma.hbm_to_vmem [thread:$0]  %s69, 16, %s202, [#allocation6]
    $region141: #{cl4kt_forward.1} parent=1 // pred_fallthru
      _
    // Predicated region
    $region142: #{cl4kt_forward.1} parent=1 // pred_check
      _
    $region143: #{cl4kt_forward.1} parent=1 // pred_check_branch
      %206 = sbr.rel (0) target = $region145
    $region144: #{cl4kt_forward.1} parent=1 // pred_region
      _
    $region145: #{cl4kt_forward.1} parent=1 // pred_fallthru
      _
    // Predicated region
    $region146: #{cl4kt_forward.1} parent=1 // pred_check
      _
    $region147: #{cl4kt_forward.1} parent=1 // pred_check_branch
      %208 = sbr.rel (0) target = $region149
    $region148: #{cl4kt_forward.1} parent=1 // pred_region
      %s210 = ssub.s32 16, 16
      %211 = vsyncadd [#allocation6], %s210
      %s213 = sshll.u32 [#allocation7], 4
      %s214 = int_to_ptr.vmem [resolvable:$true] %s213
      %216 = dma.hbm_to_vmem [thread:$0]  %s73, 16, %s214, [#allocation6]
    $region149: #{cl4kt_forward.1} parent=1 // pred_fallthru
      _
    // Predicated region
    $region150: #{cl4kt_forward.1} parent=1 // pred_check
      _
    $region151: #{cl4kt_forward.1} parent=1 // pred_check_branch
      %218 = sbr.rel (0) target = $region153
    $region152: #{cl4kt_forward.1} parent=1 // pred_region
      %s220 = ssub.s32 16, 16
      %221 = vsyncadd [#allocation9], %s220
      %s223 = sshll.u32 [#allocation8], 4
      %s224 = int_to_ptr.vmem [resolvable:$true] %s223
      %226 = dma.hbm_to_vmem [thread:$0]  %s75, 16, %s224, [#allocation9]
    $region153: #{cl4kt_forward.1} parent=1 // pred_fallthru
      _
    // Predicated region
    $region154: #{cl4kt_forward.1} parent=1 // pred_check
      _
    $region155: #{cl4kt_forward.1} parent=1 // pred_check_branch
      %228 = sbr.rel (0) target = $region157
    $region156: #{cl4kt_forward.1} parent=1 // pred_region
      %s230 = ssub.s32 16, 16
      %231 = vsyncadd [#allocation9], %s230
      %s233 = sshll.u32 [#allocation10], 4
      %s234 = int_to_ptr.vmem [resolvable:$true] %s233
      %236 = dma.hbm_to_vmem [thread:$0]  %s77, 16, %s234, [#allocation9]
    $region157: #{cl4kt_forward.1} parent=1 // pred_fallthru
      _
    // Predicated region
    $region158: #{cl4kt_forward.1} parent=1 // pred_check
      _
    $region159: #{cl4kt_forward.1} parent=1 // pred_check_branch
      %238 = sbr.rel (0) target = $region161
    $region160: #{cl4kt_forward.1} parent=1 // pred_region
      _
    $region161: #{cl4kt_forward.1} parent=1 // pred_fallthru
      _
    // Predicated region
    $region162: #{cl4kt_forward.1} parent=1 // pred_check
      _
    $region163: #{cl4kt_forward.1} parent=1 // pred_check_branch
      %240 = sbr.rel (0) target = $region165
    $region164: #{cl4kt_forward.1} parent=1 // pred_region
      %s242 = ssub.s32 16, 16
      %243 = vsyncadd [#allocation12], %s242
      %s245 = sshll.u32 [#allocation11], 4
      %s246 = int_to_ptr.vmem [resolvable:$true] %s245
      %248 = dma.hbm_to_vmem [thread:$0]  %s81, 16, %s246, [#allocation12]
    $region165: #{cl4kt_forward.1} parent=1 // pred_fallthru
      _
    // Predicated region
    $region166: #{cl4kt_forward.1} parent=1 // pred_check
      _
    $region167: #{cl4kt_forward.1} parent=1 // pred_check_branch
      %250 = sbr.rel (0) target = $region169
    $region168: #{cl4kt_forward.1} parent=1 // pred_region
      _
    $region169: #{cl4kt_forward.1} parent=1 // pred_fallthru
      _
    // Predicated region
    $region170: #{cl4kt_forward.1} parent=1 // pred_check
      _
    $region171: #{cl4kt_forward.1} parent=1 // pred_check_branch
      %252 = sbr.rel (0) target = $region173
    $region172: #{cl4kt_forward.1} parent=1 // pred_region
      %s254 = ssub.s32 16, 16
      %255 = vsyncadd [#allocation12], %s254
      %s257 = sshll.u32 [#allocation13], 4
      %s258 = int_to_ptr.vmem [resolvable:$true] %s257
      %260 = dma.hbm_to_vmem [thread:$0]  %s85, 16, %s258, [#allocation12]
    $region173: #{cl4kt_forward.1} parent=1 // pred_fallthru
      _
    // Predicated region
    $region174: #{cl4kt_forward.1} parent=1 // pred_check
      _
    $region175: #{cl4kt_forward.1} parent=1 // pred_check_branch
      %262 = sbr.rel (0) target = $region177
    $region176: #{cl4kt_forward.1} parent=1 // pred_region
      %s264 = ssub.s32 16, 16
      %265 = vsyncadd [#allocation15], %s264
      %s267 = sshll.u32 [#allocation14], 4
      %s268 = int_to_ptr.vmem [resolvable:$true] %s267
      %270 = dma.hbm_to_vmem [thread:$0]  %s87, 16, %s268, [#allocation15]
    $region177: #{cl4kt_forward.1} parent=1 // pred_fallthru
      _
    // Predicated region
    $region178: #{cl4kt_forward.1} parent=1 // pred_check
      _
    $region179: #{cl4kt_forward.1} parent=1 // pred_check_branch
      %272 = sbr.rel (0) target = $region181
    $region180: #{cl4kt_forward.1} parent=1 // pred_region
      %s274 = ssub.s32 16, 16
      %275 = vsyncadd [#allocation15], %s274
      %s277 = sshll.u32 [#allocation16], 4
      %s278 = int_to_ptr.vmem [resolvable:$true] %s277
      %280 = dma.hbm_to_vmem [thread:$0]  %s89, 16, %s278, [#allocation15]
    $region181: #{cl4kt_forward.1} parent=1 // pred_fallthru
      _
    // Predicated region
    $region182: #{cl4kt_forward.1} parent=1 // pred_check
      _
    $region183: #{cl4kt_forward.1} parent=1 // pred_check_branch
      %282 = sbr.rel (0) target = $region185
    $region184: #{cl4kt_forward.1} parent=1 // pred_region
      _
    $region185: #{cl4kt_forward.1} parent=1 // pred_fallthru
      _
    // Predicated region
    $region186: #{cl4kt_forward.1} parent=1 // pred_check
      _
    $region187: #{cl4kt_forward.1} parent=1 // pred_check_branch
      %284 = sbr.rel (0) target = $region189
    $region188: #{cl4kt_forward.1} parent=1 // pred_region
      _
    $region189: #{cl4kt_forward.1} parent=1 // pred_fallthru
      _
    // Predicated region
    $region190: #{cl4kt_forward.1} parent=1 // pred_check
      _
    $region191: #{cl4kt_forward.1} parent=1 // pred_check_branch
      %286 = sbr.rel (0) target = $region193
    $region192: #{cl4kt_forward.1} parent=1 // pred_region
      %s288 = ssub.s32 16, 16
      %289 = vsyncadd [#allocation18], %s288
      %s291 = sshll.u32 [#allocation17], 4
      %s292 = int_to_ptr.vmem [resolvable:$true] %s291
      %294 = dma.hbm_to_vmem [thread:$0]  %s95, 16, %s292, [#allocation18]
    $region193: #{cl4kt_forward.1} parent=1 // pred_fallthru
      _
    // Predicated region
    $region194: #{cl4kt_forward.1} parent=1 // pred_check
      _
    $region195: #{cl4kt_forward.1} parent=1 // pred_check_branch
      %296 = sbr.rel (0) target = $region197
    $region196: #{cl4kt_forward.1} parent=1 // pred_region
      _
    $region197: #{cl4kt_forward.1} parent=1 // pred_fallthru
      _
    // Predicated region
    $region198: #{cl4kt_forward.1} parent=1 // pred_check
      _
    $region199: #{cl4kt_forward.1} parent=1 // pred_check_branch
      %298 = sbr.rel (0) target = $region201
    $region200: #{cl4kt_forward.1} parent=1 // pred_region
      %s300 = ssub.s32 16, 16
      %301 = vsyncadd [#allocation18], %s300
      %s303 = sshll.u32 [#allocation19], 4
      %s304 = int_to_ptr.vmem [resolvable:$true] %s303
      %306 = dma.hbm_to_vmem [thread:$0]  %s99, 16, %s304, [#allocation18]
    $region201: #{cl4kt_forward.1} parent=1 // pred_fallthru
      _
    // Predicated region
    $region202: #{cl4kt_forward.1} parent=1 // pred_check
      _
    $region203: #{cl4kt_forward.1} parent=1 // pred_check_branch
      %308 = sbr.rel (0) target = $region205
    $region204: #{cl4kt_forward.1} parent=1 // pred_region
      %s310 = ssub.s32 16, 16
      %311 = vsyncadd [#allocation21], %s310
      %s313 = sshll.u32 [#allocation20], 4
      %s314 = int_to_ptr.vmem [resolvable:$true] %s313
      %316 = dma.hbm_to_vmem [thread:$0]  %s101, 16, %s314, [#allocation21]
    $region205: #{cl4kt_forward.1} parent=1 // pred_fallthru
      _
    // Predicated region
    $region206: #{cl4kt_forward.1} parent=1 // pred_check
      _
    $region207: #{cl4kt_forward.1} parent=1 // pred_check_branch
      %318 = sbr.rel (0) target = $region209
    $region208: #{cl4kt_forward.1} parent=1 // pred_region
      _
    $region209: #{cl4kt_forward.1} parent=1 // pred_fallthru
      _
    // Predicated region
    $region210: #{cl4kt_forward.1} parent=1 // pred_check
      _
    $region211: #{cl4kt_forward.1} parent=1 // pred_check_branch
      %320 = sbr.rel (0) target = $region213
    $region212: #{cl4kt_forward.1} parent=1 // pred_region
      %321 = dma.done [#allocation4], 16
    $region213: #{cl4kt_forward.1} parent=1 // pred_fallthru
      _
    // Predicated region
    $region214: #{cl4kt_forward.1} parent=1 // pred_check
      _
    $region215: #{cl4kt_forward.1} parent=1 // pred_check_branch
      %323 = sbr.rel (0) target = $region217
    $region216: #{cl4kt_forward.1} parent=1 // pred_region
      %324 = dma.done [#allocation6], 16
    $region217: #{cl4kt_forward.1} parent=1 // pred_fallthru
      _
    // Predicated region
    $region218: #{cl4kt_forward.1} parent=1 // pred_check
      _
    $region219: #{cl4kt_forward.1} parent=1 // pred_check_branch
      %326 = sbr.rel (0) target = $region221
    $region220: #{cl4kt_forward.1} parent=1 // pred_region
      %327 = dma.done [#allocation6], 16
    $region221: #{cl4kt_forward.1} parent=1 // pred_fallthru
      _
    // Predicated region
    $region222: #{cl4kt_forward.1} parent=1 // pred_check
      _
    $region223: #{cl4kt_forward.1} parent=1 // pred_check_branch
      %329 = sbr.rel (0) target = $region225
    $region224: #{cl4kt_forward.1} parent=1 // pred_region
      %330 = dma.done [#allocation9], 16
    $region225: #{cl4kt_forward.1} parent=1 // pred_fallthru
      _
    // Predicated region
    $region226: #{cl4kt_forward.1} parent=1 // pred_check
      _
    $region227: #{cl4kt_forward.1} parent=1 // pred_check_branch
      %332 = sbr.rel (0) target = $region229
    $region228: #{cl4kt_forward.1} parent=1 // pred_region
      %333 = dma.done [#allocation9], 16
    $region229: #{cl4kt_forward.1} parent=1 // pred_fallthru
      _
    // Predicated region
    $region230: #{cl4kt_forward.1} parent=1 // pred_check
      _
    $region231: #{cl4kt_forward.1} parent=1 // pred_check_branch
      %335 = sbr.rel (0) target = $region233
    $region232: #{cl4kt_forward.1} parent=1 // pred_region
      %336 = dma.done [#allocation12], 16
    $region233: #{cl4kt_forward.1} parent=1 // pred_fallthru
      _
    // Predicated region
    $region234: #{cl4kt_forward.1} parent=1 // pred_check
      _
    $region235: #{cl4kt_forward.1} parent=1 // pred_check_branch
      %338 = sbr.rel (0) target = $region237
    $region236: #{cl4kt_forward.1} parent=1 // pred_region
      %339 = dma.done [#allocation12], 16
    $region237: #{cl4kt_forward.1} parent=1 // pred_fallthru
      _
    // Predicated region
    $region238: #{cl4kt_forward.1} parent=1 // pred_check
      _
    $region239: #{cl4kt_forward.1} parent=1 // pred_check_branch
      %341 = sbr.rel (0) target = $region241
    $region240: #{cl4kt_forward.1} parent=1 // pred_region
      %342 = dma.done [#allocation15], 16
    $region241: #{cl4kt_forward.1} parent=1 // pred_fallthru
      _
    // Predicated region
    $region242: #{cl4kt_forward.1} parent=1 // pred_check
      _
    $region243: #{cl4kt_forward.1} parent=1 // pred_check_branch
      %344 = sbr.rel (0) target = $region245
    $region244: #{cl4kt_forward.1} parent=1 // pred_region
      %345 = dma.done [#allocation15], 16
    $region245: #{cl4kt_forward.1} parent=1 // pred_fallthru
      _
    // Predicated region
    $region246: #{cl4kt_forward.1} parent=1 // pred_check
      _
    $region247: #{cl4kt_forward.1} parent=1 // pred_check_branch
      %347 = sbr.rel (0) target = $region249
    $region248: #{cl4kt_forward.1} parent=1 // pred_region
      %348 = dma.done [#allocation18], 16
    $region249: #{cl4kt_forward.1} parent=1 // pred_fallthru
      _
    // Predicated region
    $region250: #{cl4kt_forward.1} parent=1 // pred_check
      _
    $region251: #{cl4kt_forward.1} parent=1 // pred_check_branch
      %350 = sbr.rel (0) target = $region253
    $region252: #{cl4kt_forward.1} parent=1 // pred_region
      %351 = dma.done [#allocation18], 16
    $region253: #{cl4kt_forward.1} parent=1 // pred_fallthru
      _
    // Predicated region
    $region254: #{cl4kt_forward.1} parent=1 // pred_check
      _
    $region255: #{cl4kt_forward.1} parent=1 // pred_check_branch
      %353 = sbr.rel (0) target = $region257
    $region256: #{cl4kt_forward.1} parent=1 // pred_region
      %354 = dma.done [#allocation21], 16
    $region257: #{cl4kt_forward.1} parent=1 // pred_fallthru
      _
    %v356 = vld [vmem:[%s1] sm:$0xff]
    %v357 = vld [vmem:[%s1 + $0x8] sm:$0xff]
    %v358 = vld [vmem:[%s3] sm:$0xff]
    %v359 = vld [vmem:[%s3 + $0x8] sm:$0xff]
    %v360 = vlaneseq
    %v361 = vand.u32 %v360, 127
    %362 = vset.pattern.permute.xlu0 0
    %363 = vperm.xlu0 %362, %v356
    %v364 = vpop.permute.xlu0 %363
    %365 = vset.pattern.permute.xlu0 0
    %366 = vperm.xlu0 %365, %v357
    %v367 = vpop.permute.xlu0 %366
    %vm368 = vcmp.eq.s32.totalorder %v364, %v361
    %vm369 = vcmp.eq.s32.totalorder %v367, %v361
    %v370 = vsel %vm368, 1, 0
    %v371 = vsel %vm369, 1, 0
    %v372 = vcvt.s32.f32 %v370
    %v373 = vcvt.s32.f32 %v371
    %374 = vset.pattern.permute.xlu0 0
    %375 = vperm.xlu0 %374, %v358
    %v376 = vpop.permute.xlu0 %375
    %377 = vset.pattern.permute.xlu0 0
    %378 = vperm.xlu0 %377, %v359
    %v379 = vpop.permute.xlu0 %378
    %vm380 = vcmp.eq.s32.totalorder %v376, %v361
    %vm381 = vcmp.eq.s32.totalorder %v379, %v361
    %v382 = vsel %vm380, 1, 0
    %v383 = vsel %vm381, 1, 0
    %v384 = vcvt.s32.f32 %v382
    %v385 = vcvt.s32.f32 %v383
    %v386 = vld [vmem:[%s5] sm:$0xff]
    %v387 = vld [vmem:[%s5 + $0x8] sm:$0xff]
    %vm388 = vcmask 130048
    %v390 = vsel %vm388, %v372, 0
    %v393 = vsel %vm388, %v373, 0
    %395 = vmatprep.subr.mxu0 0.0
    %396 = vmatpush1.msra.mxu0 0.0
    %397 = vmatprep.subr.mxu0 0.0
    %398 = vmatpush1.msra.mxu0 0.0
    %399 = vmatprep.subr.mxu0 0.0
    %400 = vmatpush1.msra.mxu0 0.0
    %401 = vmatprep.subr.mxu0 0.0
    %402 = vmatpush1.msra.mxu0 0.0
    %403 = vmatprep.subr.mxu0 0.0
    %404 = vmatpush1.msra.mxu0 0.0
    %405 = vmatprep.subr.mxu0 0.0
    %406 = vmatpush1.msra.mxu0 0.0
    %407 = vmatprep.subr.mxu0 0.0
    %408 = vmatpush1.msra.mxu0 0.0
    %409 = vmatprep.subr.mxu0 0.0
    %410 = vmatpush1.msra.mxu0 0.0
    %411 = vmatprep.subr.mxu0 0.0
    %412 = vmatpush1.msra.mxu0 0.0
    %413 = vmatprep.subr.mxu0 0.0
    %414 = vmatpush1.msra.mxu0 0.0
    %415 = vmatprep.subr.mxu0 0.0
    %416 = vmatpush1.msra.mxu0 0.0
    %417 = vmatprep.subr.mxu0 0.0
    %418 = vmatpush1.msra.mxu0 0.0
    %419 = vmatprep.subr.mxu0 0.0
    %420 = vmatpush1.msra.mxu0 0.0
    %421 = vmatprep.subr.mxu0 0.0
    %422 = vmatpush1.msra.mxu0 0.0
    %423 = vmatprep.subr.mxu0 0.0
    %424 = vmatpush1.msra.mxu0 %v387
    %425 = vmatprep.subr.mxu0 0.0
    %426 = vmatpush1.msra.mxu0 %v386
    %427 = vmatprep.subr.mxu0 0.0
    %428 = vmatpush2.msra.mxu0 0.0
    %429 = vmatprep.subr.mxu0 0.0
    %430 = vmatpush2.msra.mxu0 0.0
    %431 = vmatprep.subr.mxu0 0.0
    %432 = vmatpush2.msra.mxu0 0.0
    %433 = vmatprep.subr.mxu0 0.0
    %434 = vmatpush2.msra.mxu0 0.0
    %435 = vmatprep.subr.mxu0 0.0
    %436 = vmatpush2.msra.mxu0 0.0
    %437 = vmatprep.subr.mxu0 0.0
    %438 = vmatpush2.msra.mxu0 0.0
    %439 = vmatprep.subr.mxu0 0.0
    %440 = vmatpush2.msra.mxu0 0.0
    %441 = vmatprep.subr.mxu0 0.0
    %442 = vmatpush2.msra.mxu0 0.0
    %443 = vmatprep.subr.mxu0 0.0
    %444 = vmatpush2.msra.mxu0 0.0
    %445 = vmatprep.subr.mxu0 0.0
    %446 = vmatpush2.msra.mxu0 0.0
    %447 = vmatprep.subr.mxu0 0.0
    %448 = vmatpush2.msra.mxu0 0.0
    %449 = vmatprep.subr.mxu0 0.0
    %450 = vmatpush2.msra.mxu0 0.0
    %451 = vmatprep.subr.mxu0 0.0
    %452 = vmatpush2.msra.mxu0 0.0
    %453 = vmatprep.subr.mxu0 0.0
    %454 = vmatpush2.msra.mxu0 0.0
    %455 = vmatprep.subr.mxu0 0.0
    %456 = vmatpush2.msra.mxu0 0.0
    %457 = vmatprep.subr.mxu0 0.0
    %458 = vmatpush2.msra.mxu0 0.0
    %459 = vmatprep.mubr.f32.mxu0 0.0
    %460 = vmatmul.mubr.f32.gmra.mxu0 %v390
    %v461 = vpop.f32.mrf.mxu0
    %v462 = vadd.f32 0.0, %v461
    %v463 = vpop.f32.mrf.mxu0
    %464 = vmatprep.mubr.f32.mxu0 0.0
    %465 = vmatmul.mubr.f32.gmra.mxu0 %v393
    %v466 = vpop.f32.mrf.mxu0
    %v467 = vadd.f32 0.0, %v466
    %v468 = vpop.f32.mrf.mxu0
    %469 = vdwg.mxu0
    %v470 = vld [vmem:[%s7] sm:$0xff]
    %v471 = vld [vmem:[%s7 + $0x8] sm:$0xff]
    %v472 = vld [vmem:[%s7 + $0x10] sm:$0xff]
    %vm473 = vcmask 195584
    %v475 = vsel %vm473, %v384, 0
    %v478 = vsel %vm473, %v385, 0
    %480 = vmatprep.subr.mxu0 0.0
    %481 = vmatpush1.msra.mxu0 0.0
    %482 = vmatprep.subr.mxu0 0.0
    %483 = vmatpush1.msra.mxu0 0.0
    %484 = vmatprep.subr.mxu0 0.0
    %485 = vmatpush1.msra.mxu0 0.0
    %486 = vmatprep.subr.mxu0 0.0
    %487 = vmatpush1.msra.mxu0 0.0
    %488 = vmatprep.subr.mxu0 0.0
    %489 = vmatpush1.msra.mxu0 0.0
    %490 = vmatprep.subr.mxu0 0.0
    %491 = vmatpush1.msra.mxu0 0.0
    %492 = vmatprep.subr.mxu0 0.0
    %493 = vmatpush1.msra.mxu0 0.0
    %494 = vmatprep.subr.mxu0 0.0
    %495 = vmatpush1.msra.mxu0 0.0
    %496 = vmatprep.subr.mxu0 0.0
    %497 = vmatpush1.msra.mxu0 0.0
    %498 = vmatprep.subr.mxu0 0.0
    %499 = vmatpush1.msra.mxu0 0.0
    %500 = vmatprep.subr.mxu0 0.0
    %501 = vmatpush1.msra.mxu0 0.0
    %502 = vmatprep.subr.mxu0 0.0
    %503 = vmatpush1.msra.mxu0 0.0
    %504 = vmatprep.subr.mxu0 0.0
    %505 = vmatpush1.msra.mxu0 0.0
    %506 = vmatprep.subr.mxu0 0.0
    %507 = vmatpush1.msra.mxu0 %v472
    %508 = vmatprep.subr.mxu0 0.0
    %509 = vmatpush1.msra.mxu0 %v471
    %510 = vmatprep.subr.mxu0 0.0
    %511 = vmatpush1.msra.mxu0 %v470
    %512 = vmatprep.subr.mxu0 0.0
    %513 = vmatpush2.msra.mxu0 0.0
    %514 = vmatprep.subr.mxu0 0.0
    %515 = vmatpush2.msra.mxu0 0.0
    %516 = vmatprep.subr.mxu0 0.0
    %517 = vmatpush2.msra.mxu0 0.0
    %518 = vmatprep.subr.mxu0 0.0
    %519 = vmatpush2.msra.mxu0 0.0
    %520 = vmatprep.subr.mxu0 0.0
    %521 = vmatpush2.msra.mxu0 0.0
    %522 = vmatprep.subr.mxu0 0.0
    %523 = vmatpush2.msra.mxu0 0.0
    %524 = vmatprep.subr.mxu0 0.0
    %525 = vmatpush2.msra.mxu0 0.0
    %526 = vmatprep.subr.mxu0 0.0
    %527 = vmatpush2.msra.mxu0 0.0
    %528 = vmatprep.subr.mxu0 0.0
    %529 = vmatpush2.msra.mxu0 0.0
    %530 = vmatprep.subr.mxu0 0.0
    %531 = vmatpush2.msra.mxu0 0.0
    %532 = vmatprep.subr.mxu0 0.0
    %533 = vmatpush2.msra.mxu0 0.0
    %534 = vmatprep.subr.mxu0 0.0
    %535 = vmatpush2.msra.mxu0 0.0
    %536 = vmatprep.subr.mxu0 0.0
    %537 = vmatpush2.msra.mxu0 0.0
    %538 = vmatprep.subr.mxu0 0.0
    %539 = vmatpush2.msra.mxu0 0.0
    %540 = vmatprep.subr.mxu0 0.0
    %541 = vmatpush2.msra.mxu0 0.0
    %542 = vmatprep.subr.mxu0 0.0
    %543 = vmatpush2.msra.mxu0 0.0
    %544 = vmatprep.mubr.f32.mxu0 0.0
    %545 = vmatmul.mubr.f32.gmra.mxu0 %v475
    %v546 = vpop.f32.mrf.mxu0
    %v547 = vadd.f32 0.0, %v546
    %v548 = vpop.f32.mrf.mxu0
    %549 = vmatprep.mubr.f32.mxu0 0.0
    %550 = vmatmul.mubr.f32.gmra.mxu0 %v478
    %v551 = vpop.f32.mrf.mxu0
    %v552 = vadd.f32 0.0, %v551
    %v553 = vpop.f32.mrf.mxu0
    %554 = vdwg.mxu0
    %v555 = vld [vmem:[%s9] sm:$0xff]
    %v556 = vld [vmem:[%s9 + $0x8] sm:$0xff]
    %v557 = vld [vmem:[%s11] sm:$0xff]
    %v558 = vld [vmem:[%s11 + $0x8] sm:$0xff]
    %v559 = vld [vmem:[%s13] sm:$0xff]
    %v560 = vld [vmem:[%s13 + $0x8] sm:$0xff]
    %v561 = vld [vmem:[%s15] sm:$0xff]
    %v562 = vld [vmem:[%s15 + $0x8] sm:$0xff]
    %v563 = vld [vmem:[%s15 + $0x10] sm:$0xff]
    %v564 = vld [vmem:[%s15 + $0x18] sm:$0xff]
    %v565 = vld [vmem:[%s17] sm:$0x1]
    %v566 = vld [vmem:[%s19] sm:$0xff]
    %v567 = vld [vmem:[%s19 + $0x8] sm:$0xff]
    %v568 = vld [vmem:[%s19 + $0x10] sm:$0xff]
    %v569 = vld [vmem:[%s19 + $0x18] sm:$0xff]
    %v570 = vld [vmem:[%s21] sm:$0x1]
    %v571 = vld [vmem:[%s23] sm:$0x1]
    %v572 = vld [vmem:[%s25] sm:$0x1]
    %v573 = vld [vmem:[%s27] sm:$0xff]
    %v574 = vld [vmem:[%s27 + $0x8] sm:$0xff]
    %v575 = vld [vmem:[%s27 + $0x10] sm:$0xff]
    %v576 = vld [vmem:[%s27 + $0x18] sm:$0xff]
    %v577 = vld [vmem:[%s29] sm:$0x1]
    %v578 = vld [vmem:[%s31] sm:$0xff]
    %v579 = vld [vmem:[%s31 + $0x8] sm:$0xff]
    %v580 = vld [vmem:[%s31 + $0x10] sm:$0xff]
    %v581 = vld [vmem:[%s31 + $0x18] sm:$0xff]
    %v582 = vld [vmem:[%s31 + $0x20] sm:$0xff]
    %v583 = vld [vmem:[%s31 + $0x28] sm:$0xff]
    %v584 = vld [vmem:[%s31 + $0x30] sm:$0xff]
    %v585 = vld [vmem:[%s31 + $0x38] sm:$0xff]
    %v586 = vld [vmem:[%s33] sm:$0x1]
    %v587 = vld [vmem:[%s35] sm:$0x1]
    %v588 = vld [vmem:[%s37] sm:$0x1]
    %v589 = vpack.c.bf16 %v467, %v462
    %v590 = vpack.c.bf16 %v562, %v561
    %v591 = vpack.c.bf16 %v564, %v563
    %v593 = vlaneseq
    %v594 = vshrl.u32 %v593, 7
    %v595 = vsub.s32 0, %v594
    %v596 = vrot.slane %v565, %v595
    %vm598 = vcmask 261120
    %v600 = vsel %vm598, %v589, 0
    %602 = vmatprep.subr.bf16.mxu0 0
    %603 = vmatpush1.bf16.msra.mxu0 0
    %604 = vmatprep.subr.bf16.mxu0 0
    %605 = vmatpush1.bf16.msra.mxu0 0
    %606 = vmatprep.subr.bf16.mxu0 0
    %607 = vmatpush1.bf16.msra.mxu0 0
    %608 = vmatprep.subr.bf16.mxu0 0
    %609 = vmatpush1.bf16.msra.mxu0 0
    %610 = vmatprep.subr.bf16.mxu0 0
    %611 = vmatpush1.bf16.msra.mxu0 0
    %612 = vmatprep.subr.bf16.mxu0 0
    %613 = vmatpush1.bf16.msra.mxu0 0
    %614 = vmatprep.subr.bf16.mxu0 0
    %615 = vmatpush1.bf16.msra.mxu0 %v591
    %616 = vmatprep.subr.bf16.mxu0 0
    %617 = vmatpush1.bf16.msra.mxu0 %v590
    %618 = vmatprep.subr.bf16.mxu0 0
    %619 = vmatpush2.bf16.msra.mxu0 0
    %620 = vmatprep.subr.bf16.mxu0 0
    %621 = vmatpush2.bf16.msra.mxu0 0
    %622 = vmatprep.subr.bf16.mxu0 0
    %623 = vmatpush2.bf16.msra.mxu0 0
    %624 = vmatprep.subr.bf16.mxu0 0
    %625 = vmatpush2.bf16.msra.mxu0 0
    %626 = vmatprep.subr.bf16.mxu0 0
    %627 = vmatpush2.bf16.msra.mxu0 0
    %628 = vmatprep.subr.bf16.mxu0 0
    %629 = vmatpush2.bf16.msra.mxu0 0
    %630 = vmatprep.subr.bf16.mxu0 0
    %631 = vmatpush2.bf16.msra.mxu0 0
    %632 = vmatprep.subr.bf16.mxu0 0
    %633 = vmatpush2.bf16.msra.mxu0 0
    %634 = vmatprep.mubr.bf16.mxu0 0
    %635 = vmatmul.mubr.bf16.gmra.mxu0 %v600
    %v636 = vpop.f32.mrf.mxu0
    %v637 = vadd.f32 %v596, %v636
    %v638 = vpop.f32.mrf.mxu0
    %v639 = vpop.f32.mrf.mxu0
    %v640 = vadd.f32 %v596, %v639
    %v641 = vpop.f32.mrf.mxu0
    %642 = vdwg.mxu0
    %v643 = vpack.c.bf16 %v640, %v637
    %645 = vrot.lane.b32.xlu0 %v643, 96
    %v646 = vpop.permute.xlu0 %645
    %v648 = vsel %vm388, %v643, 0
    %v651 = vsel %vm388, %v646, 0
    %653 = vmatprep.subr.bf16.mxu0 0
    %654 = vmatpush1.bf16.xpose.msra.mxu0 0
    %655 = vmatprep.subr.bf16.mxu0 0
    %656 = vmatpush1.bf16.xpose.msra.mxu0 0
    %657 = vmatprep.subr.bf16.mxu0 0
    %658 = vmatpush1.bf16.xpose.msra.mxu0 0
    %659 = vmatprep.subr.bf16.mxu0 0
    %660 = vmatpush1.bf16.xpose.msra.mxu0 0
    %661 = vmatprep.subr.bf16.mxu0 0
    %662 = vmatpush1.bf16.xpose.msra.mxu0 0
    %663 = vmatprep.subr.bf16.mxu0 0
    %664 = vmatpush1.bf16.xpose.msra.mxu0 0
    %665 = vmatprep.subr.bf16.mxu0 0
    %666 = vmatpush1.bf16.xpose.msra.mxu0 0
    %667 = vmatprep.subr.bf16.mxu0 0
    %668 = vmatpush1.bf16.xpose.msra.mxu0 %v651
    %669 = vmatprep.subr.bf16.mxu0 0
    %670 = vmatpush2.bf16.xpose.msra.mxu0 0
    %671 = vmatprep.subr.bf16.mxu0 0
    %672 = vmatpush2.bf16.xpose.msra.mxu0 0
    %673 = vmatprep.subr.bf16.mxu0 0
    %674 = vmatpush2.bf16.xpose.msra.mxu0 0
    %675 = vmatprep.subr.bf16.mxu0 0
    %676 = vmatpush2.bf16.xpose.msra.mxu0 0
    %677 = vmatprep.subr.bf16.mxu0 0
    %678 = vmatpush2.bf16.xpose.msra.mxu0 0
    %679 = vmatprep.subr.bf16.mxu0 0
    %680 = vmatpush2.bf16.xpose.msra.mxu0 0
    %681 = vmatprep.subr.bf16.mxu0 0
    %682 = vmatpush2.bf16.xpose.msra.mxu0 0
    %683 = vmatprep.subr.bf16.mxu0 0
    %684 = vmatpush2.bf16.xpose.msra.mxu0 0
    %685 = vmatprep.mubr.bf16.mxu0 0
    %686 = vmatmul.mubr.bf16.gmra.mxu0 %v648
    %v687 = vpop.f32.mrf.mxu0
    %v688 = vadd.f32 0.0, %v687
    %v689 = vpop.f32.mrf.mxu0
    %v690 = vpop.f32.mrf.mxu0
    %v691 = vadd.f32 0.0, %v690
    %v692 = vpop.f32.mrf.mxu0
    %693 = vdwg.mxu0
    %v694 = vmul.f32 %v688, 0.25
    %v695 = vmul.f32 %v691, 0.25
    %v696 = vadd.f32 %v694, %v555
    %v697 = vadd.f32 %v695, %v556
    %v698 = vsel %vm388, %v696, -inf
    %699 = vmax.xlane.f32.xlu0 %v698
    %v700 = vpop.xlane.xlu0 %699
    %v701 = vsel %vm388, %v697, -inf
    %702 = vmax.xlane.f32.xlu0 %v701
    %v703 = vpop.xlane.xlu0 %702
    %v704 = vsub.f32 %v696, %v700
    %v705 = vsub.f32 %v697, %v703
    %v706 = vmul.f32 %v704, 1.442695
    %v707 = vpow.pop %v706
    %v708 = vmul.f32 %v705, 1.442695
    %v709 = vpow.pop %v708
    %v710 = vsel %vm388, %v707, 0.0
    %711 = vadd.xlane.f32.xlu0 %v710
    %v712 = vpop.xlane.xlu0 %711
    %v713 = vsel %vm388, %v709, 0.0
    %714 = vadd.xlane.f32.xlu0 %v713
    %v715 = vpop.xlane.xlu0 %714
    %v716 = vrcp.pop %v712
    %v717 = vrcp.pop %v715
    %v718 = vmul.f32 %v707, %v716
    %v719 = vmul.f32 %v709, %v717
    %v720 = vpack.c.bf16 %v719, %v718
    %721 = vrot.lane.b32.xlu0 %v643, 64
    %v722 = vpop.permute.xlu0 %721
    %v725 = vsel %vm388, %v720, 0
    %727 = vmatprep.subr.bf16.mxu0 0
    %728 = vmatpush1.bf16.msra.mxu0 0
    %729 = vmatprep.subr.bf16.mxu0 0
    %730 = vmatpush1.bf16.msra.mxu0 0
    %731 = vmatprep.subr.bf16.mxu0 0
    %732 = vmatpush1.bf16.msra.mxu0 0
    %733 = vmatprep.subr.bf16.mxu0 0
    %734 = vmatpush1.bf16.msra.mxu0 0
    %735 = vmatprep.subr.bf16.mxu0 0
    %736 = vmatpush1.bf16.msra.mxu0 0
    %737 = vmatprep.subr.bf16.mxu0 0
    %738 = vmatpush1.bf16.msra.mxu0 0
    %739 = vmatprep.subr.bf16.mxu0 0
    %740 = vmatpush1.bf16.msra.mxu0 0
    %741 = vmatprep.subr.bf16.mxu0 0
    %742 = vmatpush1.bf16.msra.mxu0 %v722
    %743 = vmatprep.subr.bf16.mxu0 0
    %744 = vmatpush2.bf16.msra.mxu0 0
    %745 = vmatprep.subr.bf16.mxu0 0
    %746 = vmatpush2.bf16.msra.mxu0 0
    %747 = vmatprep.subr.bf16.mxu0 0
    %748 = vmatpush2.bf16.msra.mxu0 0
    %749 = vmatprep.subr.bf16.mxu0 0
    %750 = vmatpush2.bf16.msra.mxu0 0
    %751 = vmatprep.subr.bf16.mxu0 0
    %752 = vmatpush2.bf16.msra.mxu0 0
    %753 = vmatprep.subr.bf16.mxu0 0
    %754 = vmatpush2.bf16.msra.mxu0 0
    %755 = vmatprep.subr.bf16.mxu0 0
    %756 = vmatpush2.bf16.msra.mxu0 0
    %757 = vmatprep.subr.bf16.mxu0 0
    %758 = vmatpush2.bf16.msra.mxu0 0
    %759 = vmatprep.mubr.bf16.mxu0 0
    %760 = vmatmul.mubr.bf16.gmra.mxu0 %v725
    %v761 = vpop.f32.mrf.mxu0
    %v762 = vadd.f32 0.0, %v761
    %v763 = vpop.f32.mrf.mxu0
    %v764 = vpop.f32.mrf.mxu0
    %v765 = vadd.f32 0.0, %v764
    %v766 = vpop.f32.mrf.mxu0
    %767 = vdwg.mxu0
    %v768 = vpack.c.bf16 %v765, %v762
    %v769 = vpack.c.bf16 %v567, %v566
    %770 = vrot.lane.b32.xlu0 %v643, 112
    %v771 = vpop.permute.xlu0 %770
    %772 = vrot.lane.b32.xlu0 %v643, 80
    %v773 = vpop.permute.xlu0 %772
    %v775 = vsel %vm388, %v771, 0
    %v778 = vsel %vm388, %v773, 0
    %780 = vmatprep.subr.bf16.mxu0 0
    %781 = vmatpush1.bf16.xpose.msra.mxu0 0
    %782 = vmatprep.subr.bf16.mxu0 0
    %783 = vmatpush1.bf16.xpose.msra.mxu0 0
    %784 = vmatprep.subr.bf16.mxu0 0
    %785 = vmatpush1.bf16.xpose.msra.mxu0 0
    %786 = vmatprep.subr.bf16.mxu0 0
    %787 = vmatpush1.bf16.xpose.msra.mxu0 0
    %788 = vmatprep.subr.bf16.mxu0 0
    %789 = vmatpush1.bf16.xpose.msra.mxu0 0
    %790 = vmatprep.subr.bf16.mxu0 0
    %791 = vmatpush1.bf16.xpose.msra.mxu0 0
    %792 = vmatprep.subr.bf16.mxu0 0
    %793 = vmatpush1.bf16.xpose.msra.mxu0 0
    %794 = vmatprep.subr.bf16.mxu0 0
    %795 = vmatpush1.bf16.xpose.msra.mxu0 %v778
    %796 = vmatprep.subr.bf16.mxu0 0
    %797 = vmatpush2.bf16.xpose.msra.mxu0 0
    %798 = vmatprep.subr.bf16.mxu0 0
    %799 = vmatpush2.bf16.xpose.msra.mxu0 0
    %800 = vmatprep.subr.bf16.mxu0 0
    %801 = vmatpush2.bf16.xpose.msra.mxu0 0
    %802 = vmatprep.subr.bf16.mxu0 0
    %803 = vmatpush2.bf16.xpose.msra.mxu0 0
    %804 = vmatprep.subr.bf16.mxu0 0
    %805 = vmatpush2.bf16.xpose.msra.mxu0 0
    %806 = vmatprep.subr.bf16.mxu0 0
    %807 = vmatpush2.bf16.xpose.msra.mxu0 0
    %808 = vmatprep.subr.bf16.mxu0 0
    %809 = vmatpush2.bf16.xpose.msra.mxu0 0
    %810 = vmatprep.subr.bf16.mxu0 0
    %811 = vmatpush2.bf16.xpose.msra.mxu0 0
    %812 = vmatprep.mubr.bf16.mxu0 0
    %813 = vmatmul.mubr.bf16.gmra.mxu0 %v775
    %v814 = vpop.f32.mrf.mxu0
    %v815 = vadd.f32 0.0, %v814
    %v816 = vpop.f32.mrf.mxu0
    %v817 = vpop.f32.mrf.mxu0
    %v818 = vadd.f32 0.0, %v817
    %v819 = vpop.f32.mrf.mxu0
    %820 = vdwg.mxu0
    %v821 = vmul.f32 %v815, 0.25
    %v822 = vmul.f32 %v818, 0.25
    %v823 = vadd.f32 %v821, %v555
    %v824 = vadd.f32 %v822, %v556
    %v825 = vsel %vm388, %v823, -inf
    %826 = vmax.xlane.f32.xlu0 %v825
    %v827 = vpop.xlane.xlu0 %826
    %v828 = vsel %vm388, %v824, -inf
    %829 = vmax.xlane.f32.xlu0 %v828
    %v830 = vpop.xlane.xlu0 %829
    %v831 = vsub.f32 %v823, %v827
    %v832 = vsub.f32 %v824, %v830
    %v833 = vmul.f32 %v831, 1.442695
    %v834 = vpow.pop %v833
    %v835 = vmul.f32 %v832, 1.442695
    %v836 = vpow.pop %v835
    %v837 = vsel %vm388, %v834, 0.0
    %838 = vadd.xlane.f32.xlu0 %v837
    %v839 = vpop.xlane.xlu0 %838
    %v840 = vsel %vm388, %v836, 0.0
    %841 = vadd.xlane.f32.xlu0 %v840
    %v842 = vpop.xlane.xlu0 %841
    %v843 = vrcp.pop %v839
    %v844 = vrcp.pop %v842
    %v845 = vmul.f32 %v834, %v843
    %v846 = vmul.f32 %v836, %v844
    %v847 = vpack.c.bf16 %v846, %v845
    %848 = vrot.lane.b32.xlu0 %v643, 48
    %v849 = vpop.permute.xlu0 %848
    %v852 = vsel %vm388, %v847, 0
    %854 = vmatprep.subr.bf16.mxu0 0
    %855 = vmatpush1.bf16.msra.mxu0 0
    %856 = vmatprep.subr.bf16.mxu0 0
    %857 = vmatpush1.bf16.msra.mxu0 0
    %858 = vmatprep.subr.bf16.mxu0 0
    %859 = vmatpush1.bf16.msra.mxu0 0
    %860 = vmatprep.subr.bf16.mxu0 0
    %861 = vmatpush1.bf16.msra.mxu0 0
    %862 = vmatprep.subr.bf16.mxu0 0
    %863 = vmatpush1.bf16.msra.mxu0 0
    %864 = vmatprep.subr.bf16.mxu0 0
    %865 = vmatpush1.bf16.msra.mxu0 0
    %866 = vmatprep.subr.bf16.mxu0 0
    %867 = vmatpush1.bf16.msra.mxu0 0
    %868 = vmatprep.subr.bf16.mxu0 0
    %869 = vmatpush1.bf16.msra.mxu0 %v849
    %870 = vmatprep.subr.bf16.mxu0 0
    %871 = vmatpush2.bf16.msra.mxu0 0
    %872 = vmatprep.subr.bf16.mxu0 0
    %873 = vmatpush2.bf16.msra.mxu0 0
    %874 = vmatprep.subr.bf16.mxu0 0
    %875 = vmatpush2.bf16.msra.mxu0 0
    %876 = vmatprep.subr.bf16.mxu0 0
    %877 = vmatpush2.bf16.msra.mxu0 0
    %878 = vmatprep.subr.bf16.mxu0 0
    %879 = vmatpush2.bf16.msra.mxu0 0
    %880 = vmatprep.subr.bf16.mxu0 0
    %881 = vmatpush2.bf16.msra.mxu0 0
    %882 = vmatprep.subr.bf16.mxu0 0
    %883 = vmatpush2.bf16.msra.mxu0 0
    %884 = vmatprep.subr.bf16.mxu0 0
    %885 = vmatpush2.bf16.msra.mxu0 0
    %886 = vmatprep.mubr.bf16.mxu0 0
    %887 = vmatmul.mubr.bf16.gmra.mxu0 %v852
    %v888 = vpop.f32.mrf.mxu0
    %v889 = vadd.f32 0.0, %v888
    %v890 = vpop.f32.mrf.mxu0
    %v891 = vpop.f32.mrf.mxu0
    %v892 = vadd.f32 0.0, %v891
    %v893 = vpop.f32.mrf.mxu0
    %894 = vdwg.mxu0
    %v895 = vpack.c.bf16 %v892, %v889
    %v896 = vpack.c.bf16 %v569, %v568
    %v898 = vsel %vm388, %v895, 0
    %900 = vmatprep.subr.bf16.mxu0 0
    %901 = vmatpush1.bf16.msra.mxu0 0
    %902 = vmatprep.subr.bf16.mxu0 0
    %903 = vmatpush1.bf16.msra.mxu0 0
    %904 = vmatprep.subr.bf16.mxu0 0
    %905 = vmatpush1.bf16.msra.mxu0 0
    %906 = vmatprep.subr.bf16.mxu0 0
    %907 = vmatpush1.bf16.msra.mxu0 0
    %908 = vmatprep.subr.bf16.mxu0 0
    %909 = vmatpush1.bf16.msra.mxu0 0
    %910 = vmatprep.subr.bf16.mxu0 0
    %911 = vmatpush1.bf16.msra.mxu0 0
    %912 = vmatprep.subr.bf16.mxu0 0
    %913 = vmatpush1.bf16.msra.mxu0 0
    %914 = vmatprep.subr.bf16.mxu0 0
    %915 = vmatpush1.bf16.msra.mxu0 %v896
    %916 = vmatprep.subr.bf16.mxu0 0
    %917 = vmatpush2.bf16.msra.mxu0 0
    %918 = vmatprep.subr.bf16.mxu0 0
    %919 = vmatpush2.bf16.msra.mxu0 0
    %920 = vmatprep.subr.bf16.mxu0 0
    %921 = vmatpush2.bf16.msra.mxu0 0
    %922 = vmatprep.subr.bf16.mxu0 0
    %923 = vmatpush2.bf16.msra.mxu0 0
    %924 = vmatprep.subr.bf16.mxu0 0
    %925 = vmatpush2.bf16.msra.mxu0 0
    %926 = vmatprep.subr.bf16.mxu0 0
    %927 = vmatpush2.bf16.msra.mxu0 0
    %928 = vmatprep.subr.bf16.mxu0 0
    %929 = vmatpush2.bf16.msra.mxu0 0
    %930 = vmatprep.subr.bf16.mxu0 0
    %931 = vmatpush2.bf16.msra.mxu0 0
    %932 = vmatprep.mubr.bf16.mxu0 0
    %933 = vmatmul.mubr.bf16.gmra.mxu0 %v898
    %v934 = vpop.f32.mrf.mxu0
    %v935 = vadd.f32 0.0, %v934
    %v936 = vpop.f32.mrf.mxu0
    %v937 = vpop.f32.mrf.mxu0
    %v938 = vadd.f32 0.0, %v937
    %v939 = vpop.f32.mrf.mxu0
    %940 = vdwg.mxu0
    %v942 = vsel %vm388, %v768, 0
    %944 = vmatprep.subr.bf16.mxu0 0
    %945 = vmatpush1.bf16.msra.mxu0 0
    %946 = vmatprep.subr.bf16.mxu0 0
    %947 = vmatpush1.bf16.msra.mxu0 0
    %948 = vmatprep.subr.bf16.mxu0 0
    %949 = vmatpush1.bf16.msra.mxu0 0
    %950 = vmatprep.subr.bf16.mxu0 0
    %951 = vmatpush1.bf16.msra.mxu0 0
    %952 = vmatprep.subr.bf16.mxu0 0
    %953 = vmatpush1.bf16.msra.mxu0 0
    %954 = vmatprep.subr.bf16.mxu0 0
    %955 = vmatpush1.bf16.msra.mxu0 0
    %956 = vmatprep.subr.bf16.mxu0 0
    %957 = vmatpush1.bf16.msra.mxu0 0
    %958 = vmatprep.subr.bf16.mxu0 0
    %959 = vmatpush1.bf16.msra.mxu0 %v769
    %960 = vmatprep.subr.bf16.mxu0 0
    %961 = vmatpush2.bf16.msra.mxu0 0
    %962 = vmatprep.subr.bf16.mxu0 0
    %963 = vmatpush2.bf16.msra.mxu0 0
    %964 = vmatprep.subr.bf16.mxu0 0
    %965 = vmatpush2.bf16.msra.mxu0 0
    %966 = vmatprep.subr.bf16.mxu0 0
    %967 = vmatpush2.bf16.msra.mxu0 0
    %968 = vmatprep.subr.bf16.mxu0 0
    %969 = vmatpush2.bf16.msra.mxu0 0
    %970 = vmatprep.subr.bf16.mxu0 0
    %971 = vmatpush2.bf16.msra.mxu0 0
    %972 = vmatprep.subr.bf16.mxu0 0
    %973 = vmatpush2.bf16.msra.mxu0 0
    %974 = vmatprep.subr.bf16.mxu0 0
    %975 = vmatpush2.bf16.msra.mxu0 0
    %976 = vmatprep.mubr.bf16.mxu0 0
    %977 = vmatmul.mubr.bf16.gmra.mxu0 %v942
    %v978 = vpop.f32.mrf.mxu0
    %v979 = vadd.f32 %v935, %v978
    %v980 = vpop.f32.mrf.mxu0
    %v981 = vpop.f32.mrf.mxu0
    %v982 = vadd.f32 %v938, %v981
    %v983 = vpop.f32.mrf.mxu0
    %984 = vdwg.mxu0
    %v986 = vlaneseq
    %v987 = vshrl.u32 %v986, 7
    %v988 = vsub.s32 0, %v987
    %v989 = vrot.slane %v570, %v988
    %v991 = vadd.f32 %v979, %v989
    %v992 = vadd.f32 %v982, %v989
    %v993 = vadd.f32 %v462, %v991
    %v994 = vadd.f32 %v467, %v992
    %v995 = vsel %vm598, %v993, 0.0
    %996 = vadd.xlane.f32.xlu0 %v995
    %v997 = vpop.xlane.xlu0 %996
    %v998 = vsel %vm598, %v994, 0.0
    %999 = vadd.xlane.f32.xlu0 %v998
    %v1000 = vpop.xlane.xlu0 %999
    %v1001 = vrcp.pop 32.0
    %v1002 = vmul.f32 %v997, %v1001
    %v1003 = vmul.f32 %v1000, %v1001
    %v1004 = vsub.f32 %v993, %v1002
    %v1005 = vsub.f32 %v994, %v1003
    %v1006 = vmul.f32 %v1004, %v1004
    %v1007 = vmul.f32 %v1005, %v1005
    %v1008 = vsel %vm598, %v1006, 0.0
    %1009 = vadd.xlane.f32.xlu0 %v1008
    %v1010 = vpop.xlane.xlu0 %1009
    %v1011 = vsel %vm598, %v1007, 0.0
    %1012 = vadd.xlane.f32.xlu0 %v1011
    %v1013 = vpop.xlane.xlu0 %1012
    %v1014 = vmul.f32 %v1010, %v1001
    %v1015 = vmul.f32 %v1013, %v1001
    %v1016 = vadd.f32 %v1014, 1e-05
    %v1017 = vadd.f32 %v1015, 1e-05
    %v1018 = vrsqrt.pop %v1016
    %v1019 = vrsqrt.pop %v1017
    %v1020 = vmul.f32 %v1004, %v1018
    %v1021 = vmul.f32 %v1005, %v1019
    %v1023 = vlaneseq
    %v1024 = vshrl.u32 %v1023, 7
    %v1025 = vsub.s32 0, %v1024
    %v1026 = vrot.slane %v571, %v1025
    %v1028 = vmul.f32 %v1020, %v1026
    %v1029 = vmul.f32 %v1021, %v1026
    %v1031 = vlaneseq
    %v1032 = vshrl.u32 %v1031, 7
    %v1033 = vsub.s32 0, %v1032
    %v1034 = vrot.slane %v572, %v1033
    %v1036 = vadd.f32 %v1028, %v1034
    %v1037 = vadd.f32 %v1029, %v1034
    %v1038 = vpack.c.bf16 %v1037, %v1036
    %v1039 = vpack.c.bf16 %v574, %v573
    %v1040 = vpack.c.bf16 %v576, %v575
    %v1042 = vlaneseq
    %v1043 = vshrl.u32 %v1042, 7
    %v1044 = vsub.s32 0, %v1043
    %v1045 = vrot.slane %v577, %v1044
    %v1048 = vsel %vm598, %v1038, 0
    %1050 = vmatprep.subr.bf16.mxu0 0
    %1051 = vmatpush1.bf16.msra.mxu0 0
    %1052 = vmatprep.subr.bf16.mxu0 0
    %1053 = vmatpush1.bf16.msra.mxu0 0
    %1054 = vmatprep.subr.bf16.mxu0 0
    %1055 = vmatpush1.bf16.msra.mxu0 0
    %1056 = vmatprep.subr.bf16.mxu0 0
    %1057 = vmatpush1.bf16.msra.mxu0 0
    %1058 = vmatprep.subr.bf16.mxu0 0
    %1059 = vmatpush1.bf16.msra.mxu0 0
    %1060 = vmatprep.subr.bf16.mxu0 0
    %1061 = vmatpush1.bf16.msra.mxu0 0
    %1062 = vmatprep.subr.bf16.mxu0 0
    %1063 = vmatpush1.bf16.msra.mxu0 %v1040
    %1064 = vmatprep.subr.bf16.mxu0 0
    %1065 = vmatpush1.bf16.msra.mxu0 %v1039
    %1066 = vmatprep.subr.bf16.mxu0 0
    %1067 = vmatpush2.bf16.msra.mxu0 0
    %1068 = vmatprep.subr.bf16.mxu0 0
    %1069 = vmatpush2.bf16.msra.mxu0 0
    %1070 = vmatprep.subr.bf16.mxu0 0
    %1071 = vmatpush2.bf16.msra.mxu0 0
    %1072 = vmatprep.subr.bf16.mxu0 0
    %1073 = vmatpush2.bf16.msra.mxu0 0
    %1074 = vmatprep.subr.bf16.mxu0 0
    %1075 = vmatpush2.bf16.msra.mxu0 0
    %1076 = vmatprep.subr.bf16.mxu0 0
    %1077 = vmatpush2.bf16.msra.mxu0 0
    %1078 = vmatprep.subr.bf16.mxu0 0
    %1079 = vmatpush2.bf16.msra.mxu0 0
    %1080 = vmatprep.subr.bf16.mxu0 0
    %1081 = vmatpush2.bf16.msra.mxu0 0
    %1082 = vmatprep.mubr.bf16.mxu0 0
    %1083 = vmatmul.mubr.bf16.gmra.mxu0 %v1048
    %v1084 = vpop.f32.mrf.mxu0
    %v1085 = vadd.f32 %v1045, %v1084
    %v1086 = vpop.f32.mrf.mxu0
    %v1087 = vpop.f32.mrf.mxu0
    %v1088 = vadd.f32 %v1045, %v1087
    %v1089 = vpop.f32.mrf.mxu0
    %1090 = vdwg.mxu0
    %v1091 = vmax.f32 %v1085, 0.0
    %v1092 = vmax.f32 %v1088, 0.0
    %v1093 = vpack.c.bf16 %v1092, %v1091
    %v1094 = vpack.c.bf16 %v579, %v578
    %v1095 = vpack.c.bf16 %v581, %v580
    %v1096 = vpack.c.bf16 %v583, %v582
    %v1097 = vpack.c.bf16 %v585, %v584
    %v1099 = vlaneseq
    %v1100 = vshrl.u32 %v1099, 7
    %v1101 = vsub.s32 0, %v1100
    %v1102 = vrot.slane %v586, %v1101
    %vm1104 = vcmask 523264
    %v1106 = vsel %vm1104, %v1093, 0
    %1108 = vmatprep.subr.bf16.mxu0 0
    %1109 = vmatpush1.bf16.msra.mxu0 0
    %1110 = vmatprep.subr.bf16.mxu0 0
    %1111 = vmatpush1.bf16.msra.mxu0 0
    %1112 = vmatprep.subr.bf16.mxu0 0
    %1113 = vmatpush1.bf16.msra.mxu0 0
    %1114 = vmatprep.subr.bf16.mxu0 0
    %1115 = vmatpush1.bf16.msra.mxu0 0
    %1116 = vmatprep.subr.bf16.mxu0 0
    %1117 = vmatpush1.bf16.msra.mxu0 %v1097
    %1118 = vmatprep.subr.bf16.mxu0 0
    %1119 = vmatpush1.bf16.msra.mxu0 %v1096
    %1120 = vmatprep.subr.bf16.mxu0 0
    %1121 = vmatpush1.bf16.msra.mxu0 %v1095
    %1122 = vmatprep.subr.bf16.mxu0 0
    %1123 = vmatpush1.bf16.msra.mxu0 %v1094
    %1124 = vmatprep.subr.bf16.mxu0 0
    %1125 = vmatpush2.bf16.msra.mxu0 0
    %1126 = vmatprep.subr.bf16.mxu0 0
    %1127 = vmatpush2.bf16.msra.mxu0 0
    %1128 = vmatprep.subr.bf16.mxu0 0
    %1129 = vmatpush2.bf16.msra.mxu0 0
    %1130 = vmatprep.subr.bf16.mxu0 0
    %1131 = vmatpush2.bf16.msra.mxu0 0
    %1132 = vmatprep.subr.bf16.mxu0 0
    %1133 = vmatpush2.bf16.msra.mxu0 0
    %1134 = vmatprep.subr.bf16.mxu0 0
    %1135 = vmatpush2.bf16.msra.mxu0 0
    %1136 = vmatprep.subr.bf16.mxu0 0
    %1137 = vmatpush2.bf16.msra.mxu0 0
    %1138 = vmatprep.subr.bf16.mxu0 0
    %1139 = vmatpush2.bf16.msra.mxu0 0
    %1140 = vmatprep.mubr.bf16.mxu0 0
    %1141 = vmatmul.mubr.bf16.gmra.mxu0 %v1106
    %v1142 = vpop.f32.mrf.mxu0
    %v1143 = vadd.f32 %v1102, %v1142
    %v1144 = vpop.f32.mrf.mxu0
    %v1145 = vpop.f32.mrf.mxu0
    %v1146 = vadd.f32 %v1102, %v1145
    %v1147 = vpop.f32.mrf.mxu0
    %1148 = vdwg.mxu0
    %v1149 = vadd.f32 %v1036, %v1143
    %v1150 = vadd.f32 %v1037, %v1146
    %v1151 = vsel %vm598, %v1149, 0.0
    %1152 = vadd.xlane.f32.xlu0 %v1151
    %v1153 = vpop.xlane.xlu0 %1152
    %v1154 = vsel %vm598, %v1150, 0.0
    %1155 = vadd.xlane.f32.xlu0 %v1154
    %v1156 = vpop.xlane.xlu0 %1155
    %v1157 = vmul.f32 %v1153, %v1001
    %v1158 = vmul.f32 %v1156, %v1001
    %v1159 = vsub.f32 %v1149, %v1157
    %v1160 = vsub.f32 %v1150, %v1158
    %v1161 = vmul.f32 %v1159, %v1159
    %v1162 = vmul.f32 %v1160, %v1160
    %v1163 = vsel %vm598, %v1161, 0.0
    %1164 = vadd.xlane.f32.xlu0 %v1163
    %v1165 = vpop.xlane.xlu0 %1164
    %v1166 = vsel %vm598, %v1162, 0.0
    %1167 = vadd.xlane.f32.xlu0 %v1166
    %v1168 = vpop.xlane.xlu0 %1167
    %v1169 = vmul.f32 %v1165, %v1001
    %v1170 = vmul.f32 %v1168, %v1001
    %v1171 = vadd.f32 %v1169, 1e-05
    %v1172 = vadd.f32 %v1170, 1e-05
    %v1173 = vrsqrt.pop %v1171
    %v1174 = vrsqrt.pop %v1172
    %v1175 = vmul.f32 %v1159, %v1173
    %v1176 = vmul.f32 %v1160, %v1174
    %v1178 = vlaneseq
    %v1179 = vshrl.u32 %v1178, 7
    %v1180 = vsub.s32 0, %v1179
    %v1181 = vrot.slane %v587, %v1180
    %v1183 = vmul.f32 %v1175, %v1181
    %v1184 = vmul.f32 %v1176, %v1181
    %v1186 = vlaneseq
    %v1187 = vshrl.u32 %v1186, 7
    %v1188 = vsub.s32 0, %v1187
    %v1189 = vrot.slane %v588, %v1188
    %v1191 = vadd.f32 %v1183, %v1189
    %v1192 = vadd.f32 %v1184, %v1189
    %v1193 = vld [vmem:[%s39] sm:$0xff]
    %v1194 = vld [vmem:[%s39 + $0x8] sm:$0xff]
    %v1195 = vld [vmem:[%s39 + $0x10] sm:$0xff]
    %v1196 = vld [vmem:[%s39 + $0x18] sm:$0xff]
    %v1197 = vld [vmem:[%s41] sm:$0x1]
    %v1198 = vld [vmem:[%s43] sm:$0xff]
    %v1199 = vld [vmem:[%s43 + $0x8] sm:$0xff]
    %v1200 = vld [vmem:[%s43 + $0x10] sm:$0xff]
    %v1201 = vld [vmem:[%s43 + $0x18] sm:$0xff]
    %v1202 = vld [vmem:[%s45] sm:$0x1]
    %v1203 = vld [vmem:[%s47] sm:$0x1]
    %v1204 = vld [vmem:[%s49] sm:$0x1]
    %v1205 = vld [vmem:[%s51] sm:$0xff]
    %v1206 = vld [vmem:[%s51 + $0x8] sm:$0xff]
    %v1207 = vld [vmem:[%s51 + $0x10] sm:$0xff]
    %v1208 = vld [vmem:[%s51 + $0x18] sm:$0xff]
    %v1209 = vld [vmem:[%s53] sm:$0x1]
    %v1210 = vld [vmem:[%s55] sm:$0xff]
    %v1211 = vld [vmem:[%s55 + $0x8] sm:$0xff]
    %v1212 = vld [vmem:[%s55 + $0x10] sm:$0xff]
    %v1213 = vld [vmem:[%s55 + $0x18] sm:$0xff]
    %v1214 = vld [vmem:[%s55 + $0x20] sm:$0xff]
    %v1215 = vld [vmem:[%s55 + $0x28] sm:$0xff]
    %v1216 = vld [vmem:[%s55 + $0x30] sm:$0xff]
    %v1217 = vld [vmem:[%s55 + $0x38] sm:$0xff]
    %v1218 = vld [vmem:[%s57] sm:$0x1]
    %v1219 = vld [vmem:[%s59] sm:$0x1]
    %v1220 = vld [vmem:[%s61] sm:$0x1]
    %v1221 = vpack.c.bf16 %v552, %v547
    %v1222 = vpack.c.bf16 %v1194, %v1193
    %v1223 = vpack.c.bf16 %v1196, %v1195
    %v1225 = vlaneseq
    %v1226 = vshrl.u32 %v1225, 7
    %v1227 = vsub.s32 0, %v1226
    %v1228 = vrot.slane %v1197, %v1227
    %v1231 = vsel %vm598, %v1221, 0
    %1233 = vmatprep.subr.bf16.mxu0 0
    %1234 = vmatpush1.bf16.msra.mxu0 0
    %1235 = vmatprep.subr.bf16.mxu0 0
    %1236 = vmatpush1.bf16.msra.mxu0 0
    %1237 = vmatprep.subr.bf16.mxu0 0
    %1238 = vmatpush1.bf16.msra.mxu0 0
    %1239 = vmatprep.subr.bf16.mxu0 0
    %1240 = vmatpush1.bf16.msra.mxu0 0
    %1241 = vmatprep.subr.bf16.mxu0 0
    %1242 = vmatpush1.bf16.msra.mxu0 0
    %1243 = vmatprep.subr.bf16.mxu0 0
    %1244 = vmatpush1.bf16.msra.mxu0 0
    %1245 = vmatprep.subr.bf16.mxu0 0
    %1246 = vmatpush1.bf16.msra.mxu0 %v1223
    %1247 = vmatprep.subr.bf16.mxu0 0
    %1248 = vmatpush1.bf16.msra.mxu0 %v1222
    %1249 = vmatprep.subr.bf16.mxu0 0
    %1250 = vmatpush2.bf16.msra.mxu0 0
    %1251 = vmatprep.subr.bf16.mxu0 0
    %1252 = vmatpush2.bf16.msra.mxu0 0
    %1253 = vmatprep.subr.bf16.mxu0 0
    %1254 = vmatpush2.bf16.msra.mxu0 0
    %1255 = vmatprep.subr.bf16.mxu0 0
    %1256 = vmatpush2.bf16.msra.mxu0 0
    %1257 = vmatprep.subr.bf16.mxu0 0
    %1258 = vmatpush2.bf16.msra.mxu0 0
    %1259 = vmatprep.subr.bf16.mxu0 0
    %1260 = vmatpush2.bf16.msra.mxu0 0
    %1261 = vmatprep.subr.bf16.mxu0 0
    %1262 = vmatpush2.bf16.msra.mxu0 0
    %1263 = vmatprep.subr.bf16.mxu0 0
    %1264 = vmatpush2.bf16.msra.mxu0 0
    %1265 = vmatprep.mubr.bf16.mxu0 0
    %1266 = vmatmul.mubr.bf16.gmra.mxu0 %v1231
    %v1267 = vpop.f32.mrf.mxu0
    %v1268 = vadd.f32 %v1228, %v1267
    %v1269 = vpop.f32.mrf.mxu0
    %v1270 = vpop.f32.mrf.mxu0
    %v1271 = vadd.f32 %v1228, %v1270
    %v1272 = vpop.f32.mrf.mxu0
    %1273 = vdwg.mxu0
    %v1274 = vpack.c.bf16 %v1271, %v1268
    %1276 = vrot.lane.b32.xlu0 %v1274, 96
    %v1277 = vpop.permute.xlu0 %1276
    %v1279 = vsel %vm388, %v1274, 0
    %v1282 = vsel %vm388, %v1277, 0
    %1284 = vmatprep.subr.bf16.mxu0 0
    %1285 = vmatpush1.bf16.xpose.msra.mxu0 0
    %1286 = vmatprep.subr.bf16.mxu0 0
    %1287 = vmatpush1.bf16.xpose.msra.mxu0 0
    %1288 = vmatprep.subr.bf16.mxu0 0
    %1289 = vmatpush1.bf16.xpose.msra.mxu0 0
    %1290 = vmatprep.subr.bf16.mxu0 0
    %1291 = vmatpush1.bf16.xpose.msra.mxu0 0
    %1292 = vmatprep.subr.bf16.mxu0 0
    %1293 = vmatpush1.bf16.xpose.msra.mxu0 0
    %1294 = vmatprep.subr.bf16.mxu0 0
    %1295 = vmatpush1.bf16.xpose.msra.mxu0 0
    %1296 = vmatprep.subr.bf16.mxu0 0
    %1297 = vmatpush1.bf16.xpose.msra.mxu0 0
    %1298 = vmatprep.subr.bf16.mxu0 0
    %1299 = vmatpush1.bf16.xpose.msra.mxu0 %v1282
    %1300 = vmatprep.subr.bf16.mxu0 0
    %1301 = vmatpush2.bf16.xpose.msra.mxu0 0
    %1302 = vmatprep.subr.bf16.mxu0 0
    %1303 = vmatpush2.bf16.xpose.msra.mxu0 0
    %1304 = vmatprep.subr.bf16.mxu0 0
    %1305 = vmatpush2.bf16.xpose.msra.mxu0 0
    %1306 = vmatprep.subr.bf16.mxu0 0
    %1307 = vmatpush2.bf16.xpose.msra.mxu0 0
    %1308 = vmatprep.subr.bf16.mxu0 0
    %1309 = vmatpush2.bf16.xpose.msra.mxu0 0
    %1310 = vmatprep.subr.bf16.mxu0 0
    %1311 = vmatpush2.bf16.xpose.msra.mxu0 0
    %1312 = vmatprep.subr.bf16.mxu0 0
    %1313 = vmatpush2.bf16.xpose.msra.mxu0 0
    %1314 = vmatprep.subr.bf16.mxu0 0
    %1315 = vmatpush2.bf16.xpose.msra.mxu0 0
    %1316 = vmatprep.mubr.bf16.mxu0 0
    %1317 = vmatmul.mubr.bf16.gmra.mxu0 %v1279
    %v1318 = vpop.f32.mrf.mxu0
    %v1319 = vadd.f32 0.0, %v1318
    %v1320 = vpop.f32.mrf.mxu0
    %v1321 = vpop.f32.mrf.mxu0
    %v1322 = vadd.f32 0.0, %v1321
    %v1323 = vpop.f32.mrf.mxu0
    %1324 = vdwg.mxu0
    %v1325 = vmul.f32 %v1319, 0.25
    %v1326 = vmul.f32 %v1322, 0.25
    %v1327 = vadd.f32 %v1325, %v555
    %v1328 = vadd.f32 %v1326, %v556
    %v1329 = vsel %vm388, %v1327, -inf
    %1330 = vmax.xlane.f32.xlu0 %v1329
    %v1331 = vpop.xlane.xlu0 %1330
    %v1332 = vsel %vm388, %v1328, -inf
    %1333 = vmax.xlane.f32.xlu0 %v1332
    %v1334 = vpop.xlane.xlu0 %1333
    %v1335 = vsub.f32 %v1327, %v1331
    %v1336 = vsub.f32 %v1328, %v1334
    %v1337 = vmul.f32 %v1335, 1.442695
    %v1338 = vpow.pop %v1337
    %v1339 = vmul.f32 %v1336, 1.442695
    %v1340 = vpow.pop %v1339
    %v1341 = vsel %vm388, %v1338, 0.0
    %1342 = vadd.xlane.f32.xlu0 %v1341
    %v1343 = vpop.xlane.xlu0 %1342
    %v1344 = vsel %vm388, %v1340, 0.0
    %1345 = vadd.xlane.f32.xlu0 %v1344
    %v1346 = vpop.xlane.xlu0 %1345
    %v1347 = vrcp.pop %v1343
    %v1348 = vrcp.pop %v1346
    %v1349 = vmul.f32 %v1338, %v1347
    %v1350 = vmul.f32 %v1340, %v1348
    %v1351 = vpack.c.bf16 %v1350, %v1349
    %1352 = vrot.lane.b32.xlu0 %v1274, 64
    %v1353 = vpop.permute.xlu0 %1352
    %v1356 = vsel %vm388, %v1351, 0
    %1358 = vmatprep.subr.bf16.mxu0 0
    %1359 = vmatpush1.bf16.msra.mxu0 0
    %1360 = vmatprep.subr.bf16.mxu0 0
    %1361 = vmatpush1.bf16.msra.mxu0 0
    %1362 = vmatprep.subr.bf16.mxu0 0
    %1363 = vmatpush1.bf16.msra.mxu0 0
    %1364 = vmatprep.subr.bf16.mxu0 0
    %1365 = vmatpush1.bf16.msra.mxu0 0
    %1366 = vmatprep.subr.bf16.mxu0 0
    %1367 = vmatpush1.bf16.msra.mxu0 0
    %1368 = vmatprep.subr.bf16.mxu0 0
    %1369 = vmatpush1.bf16.msra.mxu0 0
    %1370 = vmatprep.subr.bf16.mxu0 0
    %1371 = vmatpush1.bf16.msra.mxu0 0
    %1372 = vmatprep.subr.bf16.mxu0 0
    %1373 = vmatpush1.bf16.msra.mxu0 %v1353
    %1374 = vmatprep.subr.bf16.mxu0 0
    %1375 = vmatpush2.bf16.msra.mxu0 0
    %1376 = vmatprep.subr.bf16.mxu0 0
    %1377 = vmatpush2.bf16.msra.mxu0 0
    %1378 = vmatprep.subr.bf16.mxu0 0
    %1379 = vmatpush2.bf16.msra.mxu0 0
    %1380 = vmatprep.subr.bf16.mxu0 0
    %1381 = vmatpush2.bf16.msra.mxu0 0
    %1382 = vmatprep.subr.bf16.mxu0 0
    %1383 = vmatpush2.bf16.msra.mxu0 0
    %1384 = vmatprep.subr.bf16.mxu0 0
    %1385 = vmatpush2.bf16.msra.mxu0 0
    %1386 = vmatprep.subr.bf16.mxu0 0
    %1387 = vmatpush2.bf16.msra.mxu0 0
    %1388 = vmatprep.subr.bf16.mxu0 0
    %1389 = vmatpush2.bf16.msra.mxu0 0
    %1390 = vmatprep.mubr.bf16.mxu0 0
    %1391 = vmatmul.mubr.bf16.gmra.mxu0 %v1356
    %v1392 = vpop.f32.mrf.mxu0
    %v1393 = vadd.f32 0.0, %v1392
    %v1394 = vpop.f32.mrf.mxu0
    %v1395 = vpop.f32.mrf.mxu0
    %v1396 = vadd.f32 0.0, %v1395
    %v1397 = vpop.f32.mrf.mxu0
    %1398 = vdwg.mxu0
    %v1399 = vpack.c.bf16 %v1396, %v1393
    %v1400 = vpack.c.bf16 %v1199, %v1198
    %1401 = vrot.lane.b32.xlu0 %v1274, 112
    %v1402 = vpop.permute.xlu0 %1401
    %1403 = vrot.lane.b32.xlu0 %v1274, 80
    %v1404 = vpop.permute.xlu0 %1403
    %v1406 = vsel %vm388, %v1402, 0
    %v1409 = vsel %vm388, %v1404, 0
    %1411 = vmatprep.subr.bf16.mxu0 0
    %1412 = vmatpush1.bf16.xpose.msra.mxu0 0
    %1413 = vmatprep.subr.bf16.mxu0 0
    %1414 = vmatpush1.bf16.xpose.msra.mxu0 0
    %1415 = vmatprep.subr.bf16.mxu0 0
    %1416 = vmatpush1.bf16.xpose.msra.mxu0 0
    %1417 = vmatprep.subr.bf16.mxu0 0
    %1418 = vmatpush1.bf16.xpose.msra.mxu0 0
    %1419 = vmatprep.subr.bf16.mxu0 0
    %1420 = vmatpush1.bf16.xpose.msra.mxu0 0
    %1421 = vmatprep.subr.bf16.mxu0 0
    %1422 = vmatpush1.bf16.xpose.msra.mxu0 0
    %1423 = vmatprep.subr.bf16.mxu0 0
    %1424 = vmatpush1.bf16.xpose.msra.mxu0 0
    %1425 = vmatprep.subr.bf16.mxu0 0
    %1426 = vmatpush1.bf16.xpose.msra.mxu0 %v1409
    %1427 = vmatprep.subr.bf16.mxu0 0
    %1428 = vmatpush2.bf16.xpose.msra.mxu0 0
    %1429 = vmatprep.subr.bf16.mxu0 0
    %1430 = vmatpush2.bf16.xpose.msra.mxu0 0
    %1431 = vmatprep.subr.bf16.mxu0 0
    %1432 = vmatpush2.bf16.xpose.msra.mxu0 0
    %1433 = vmatprep.subr.bf16.mxu0 0
    %1434 = vmatpush2.bf16.xpose.msra.mxu0 0
    %1435 = vmatprep.subr.bf16.mxu0 0
    %1436 = vmatpush2.bf16.xpose.msra.mxu0 0
    %1437 = vmatprep.subr.bf16.mxu0 0
    %1438 = vmatpush2.bf16.xpose.msra.mxu0 0
    %1439 = vmatprep.subr.bf16.mxu0 0
    %1440 = vmatpush2.bf16.xpose.msra.mxu0 0
    %1441 = vmatprep.subr.bf16.mxu0 0
    %1442 = vmatpush2.bf16.xpose.msra.mxu0 0
    %1443 = vmatprep.mubr.bf16.mxu0 0
    %1444 = vmatmul.mubr.bf16.gmra.mxu0 %v1406
    %v1445 = vpop.f32.mrf.mxu0
    %v1446 = vadd.f32 0.0, %v1445
    %v1447 = vpop.f32.mrf.mxu0
    %v1448 = vpop.f32.mrf.mxu0
    %v1449 = vadd.f32 0.0, %v1448
    %v1450 = vpop.f32.mrf.mxu0
    %1451 = vdwg.mxu0
    %v1452 = vmul.f32 %v1446, 0.25
    %v1453 = vmul.f32 %v1449, 0.25
    %v1454 = vadd.f32 %v1452, %v555
    %v1455 = vadd.f32 %v1453, %v556
    %v1456 = vsel %vm388, %v1454, -inf
    %1457 = vmax.xlane.f32.xlu0 %v1456
    %v1458 = vpop.xlane.xlu0 %1457
    %v1459 = vsel %vm388, %v1455, -inf
    %1460 = vmax.xlane.f32.xlu0 %v1459
    %v1461 = vpop.xlane.xlu0 %1460
    %v1462 = vsub.f32 %v1454, %v1458
    %v1463 = vsub.f32 %v1455, %v1461
    %v1464 = vmul.f32 %v1462, 1.442695
    %v1465 = vpow.pop %v1464
    %v1466 = vmul.f32 %v1463, 1.442695
    %v1467 = vpow.pop %v1466
    %v1468 = vsel %vm388, %v1465, 0.0
    %1469 = vadd.xlane.f32.xlu0 %v1468
    %v1470 = vpop.xlane.xlu0 %1469
    %v1471 = vsel %vm388, %v1467, 0.0
    %1472 = vadd.xlane.f32.xlu0 %v1471
    %v1473 = vpop.xlane.xlu0 %1472
    %v1474 = vrcp.pop %v1470
    %v1475 = vrcp.pop %v1473
    %v1476 = vmul.f32 %v1465, %v1474
    %v1477 = vmul.f32 %v1467, %v1475
    %v1478 = vpack.c.bf16 %v1477, %v1476
    %1479 = vrot.lane.b32.xlu0 %v1274, 48
    %v1480 = vpop.permute.xlu0 %1479
    %v1483 = vsel %vm388, %v1478, 0
    %1485 = vmatprep.subr.bf16.mxu0 0
    %1486 = vmatpush1.bf16.msra.mxu0 0
    %1487 = vmatprep.subr.bf16.mxu0 0
    %1488 = vmatpush1.bf16.msra.mxu0 0
    %1489 = vmatprep.subr.bf16.mxu0 0
    %1490 = vmatpush1.bf16.msra.mxu0 0
    %1491 = vmatprep.subr.bf16.mxu0 0
    %1492 = vmatpush1.bf16.msra.mxu0 0
    %1493 = vmatprep.subr.bf16.mxu0 0
    %1494 = vmatpush1.bf16.msra.mxu0 0
    %1495 = vmatprep.subr.bf16.mxu0 0
    %1496 = vmatpush1.bf16.msra.mxu0 0
    %1497 = vmatprep.subr.bf16.mxu0 0
    %1498 = vmatpush1.bf16.msra.mxu0 0
    %1499 = vmatprep.subr.bf16.mxu0 0
    %1500 = vmatpush1.bf16.msra.mxu0 %v1480
    %1501 = vmatprep.subr.bf16.mxu0 0
    %1502 = vmatpush2.bf16.msra.mxu0 0
    %1503 = vmatprep.subr.bf16.mxu0 0
    %1504 = vmatpush2.bf16.msra.mxu0 0
    %1505 = vmatprep.subr.bf16.mxu0 0
    %1506 = vmatpush2.bf16.msra.mxu0 0
    %1507 = vmatprep.subr.bf16.mxu0 0
    %1508 = vmatpush2.bf16.msra.mxu0 0
    %1509 = vmatprep.subr.bf16.mxu0 0
    %1510 = vmatpush2.bf16.msra.mxu0 0
    %1511 = vmatprep.subr.bf16.mxu0 0
    %1512 = vmatpush2.bf16.msra.mxu0 0
    %1513 = vmatprep.subr.bf16.mxu0 0
    %1514 = vmatpush2.bf16.msra.mxu0 0
    %1515 = vmatprep.subr.bf16.mxu0 0
    %1516 = vmatpush2.bf16.msra.mxu0 0
    %1517 = vmatprep.mubr.bf16.mxu0 0
    %1518 = vmatmul.mubr.bf16.gmra.mxu0 %v1483
    %v1519 = vpop.f32.mrf.mxu0
    %v1520 = vadd.f32 0.0, %v1519
    %v1521 = vpop.f32.mrf.mxu0
    %v1522 = vpop.f32.mrf.mxu0
    %v1523 = vadd.f32 0.0, %v1522
    %v1524 = vpop.f32.mrf.mxu0
    %1525 = vdwg.mxu0
    %v1526 = vpack.c.bf16 %v1523, %v1520
    %v1527 = vpack.c.bf16 %v1201, %v1200
    %v1529 = vsel %vm388, %v1526, 0
    %1531 = vmatprep.subr.bf16.mxu0 0
    %1532 = vmatpush1.bf16.msra.mxu0 0
    %1533 = vmatprep.subr.bf16.mxu0 0
    %1534 = vmatpush1.bf16.msra.mxu0 0
    %1535 = vmatprep.subr.bf16.mxu0 0
    %1536 = vmatpush1.bf16.msra.mxu0 0
    %1537 = vmatprep.subr.bf16.mxu0 0
    %1538 = vmatpush1.bf16.msra.mxu0 0
    %1539 = vmatprep.subr.bf16.mxu0 0
    %1540 = vmatpush1.bf16.msra.mxu0 0
    %1541 = vmatprep.subr.bf16.mxu0 0
    %1542 = vmatpush1.bf16.msra.mxu0 0
    %1543 = vmatprep.subr.bf16.mxu0 0
    %1544 = vmatpush1.bf16.msra.mxu0 0
    %1545 = vmatprep.subr.bf16.mxu0 0
    %1546 = vmatpush1.bf16.msra.mxu0 %v1527
    %1547 = vmatprep.subr.bf16.mxu0 0
    %1548 = vmatpush2.bf16.msra.mxu0 0
    %1549 = vmatprep.subr.bf16.mxu0 0
    %1550 = vmatpush2.bf16.msra.mxu0 0
    %1551 = vmatprep.subr.bf16.mxu0 0
    %1552 = vmatpush2.bf16.msra.mxu0 0
    %1553 = vmatprep.subr.bf16.mxu0 0
    %1554 = vmatpush2.bf16.msra.mxu0 0
    %1555 = vmatprep.subr.bf16.mxu0 0
    %1556 = vmatpush2.bf16.msra.mxu0 0
    %1557 = vmatprep.subr.bf16.mxu0 0
    %1558 = vmatpush2.bf16.msra.mxu0 0
    %1559 = vmatprep.subr.bf16.mxu0 0
    %1560 = vmatpush2.bf16.msra.mxu0 0
    %1561 = vmatprep.subr.bf16.mxu0 0
    %1562 = vmatpush2.bf16.msra.mxu0 0
    %1563 = vmatprep.mubr.bf16.mxu0 0
    %1564 = vmatmul.mubr.bf16.gmra.mxu0 %v1529
    %v1565 = vpop.f32.mrf.mxu0
    %v1566 = vadd.f32 0.0, %v1565
    %v1567 = vpop.f32.mrf.mxu0
    %v1568 = vpop.f32.mrf.mxu0
    %v1569 = vadd.f32 0.0, %v1568
    %v1570 = vpop.f32.mrf.mxu0
    %1571 = vdwg.mxu0
    %v1573 = vsel %vm388, %v1399, 0
    %1575 = vmatprep.subr.bf16.mxu0 0
    %1576 = vmatpush1.bf16.msra.mxu0 0
    %1577 = vmatprep.subr.bf16.mxu0 0
    %1578 = vmatpush1.bf16.msra.mxu0 0
    %1579 = vmatprep.subr.bf16.mxu0 0
    %1580 = vmatpush1.bf16.msra.mxu0 0
    %1581 = vmatprep.subr.bf16.mxu0 0
    %1582 = vmatpush1.bf16.msra.mxu0 0
    %1583 = vmatprep.subr.bf16.mxu0 0
    %1584 = vmatpush1.bf16.msra.mxu0 0
    %1585 = vmatprep.subr.bf16.mxu0 0
    %1586 = vmatpush1.bf16.msra.mxu0 0
    %1587 = vmatprep.subr.bf16.mxu0 0
    %1588 = vmatpush1.bf16.msra.mxu0 0
    %1589 = vmatprep.subr.bf16.mxu0 0
    %1590 = vmatpush1.bf16.msra.mxu0 %v1400
    %1591 = vmatprep.subr.bf16.mxu0 0
    %1592 = vmatpush2.bf16.msra.mxu0 0
    %1593 = vmatprep.subr.bf16.mxu0 0
    %1594 = vmatpush2.bf16.msra.mxu0 0
    %1595 = vmatprep.subr.bf16.mxu0 0
    %1596 = vmatpush2.bf16.msra.mxu0 0
    %1597 = vmatprep.subr.bf16.mxu0 0
    %1598 = vmatpush2.bf16.msra.mxu0 0
    %1599 = vmatprep.subr.bf16.mxu0 0
    %1600 = vmatpush2.bf16.msra.mxu0 0
    %1601 = vmatprep.subr.bf16.mxu0 0
    %1602 = vmatpush2.bf16.msra.mxu0 0
    %1603 = vmatprep.subr.bf16.mxu0 0
    %1604 = vmatpush2.bf16.msra.mxu0 0
    %1605 = vmatprep.subr.bf16.mxu0 0
    %1606 = vmatpush2.bf16.msra.mxu0 0
    %1607 = vmatprep.mubr.bf16.mxu0 0
    %1608 = vmatmul.mubr.bf16.gmra.mxu0 %v1573
    %v1609 = vpop.f32.mrf.mxu0
    %v1610 = vadd.f32 %v1566, %v1609
    %v1611 = vpop.f32.mrf.mxu0
    %v1612 = vpop.f32.mrf.mxu0
    %v1613 = vadd.f32 %v1569, %v1612
    %v1614 = vpop.f32.mrf.mxu0
    %1615 = vdwg.mxu0
    %v1617 = vlaneseq
    %v1618 = vshrl.u32 %v1617, 7
    %v1619 = vsub.s32 0, %v1618
    %v1620 = vrot.slane %v1202, %v1619
    %v1622 = vadd.f32 %v1610, %v1620
    %v1623 = vadd.f32 %v1613, %v1620
    %v1624 = vadd.f32 %v547, %v1622
    %v1625 = vadd.f32 %v552, %v1623
    %v1626 = vsel %vm598, %v1624, 0.0
    %1627 = vadd.xlane.f32.xlu0 %v1626
    %v1628 = vpop.xlane.xlu0 %1627
    %v1629 = vsel %vm598, %v1625, 0.0
    %1630 = vadd.xlane.f32.xlu0 %v1629
    %v1631 = vpop.xlane.xlu0 %1630
    %v1632 = vmul.f32 %v1628, %v1001
    %v1633 = vmul.f32 %v1631, %v1001
    %v1634 = vsub.f32 %v1624, %v1632
    %v1635 = vsub.f32 %v1625, %v1633
    %v1636 = vmul.f32 %v1634, %v1634
    %v1637 = vmul.f32 %v1635, %v1635
    %v1638 = vsel %vm598, %v1636, 0.0
    %1639 = vadd.xlane.f32.xlu0 %v1638
    %v1640 = vpop.xlane.xlu0 %1639
    %v1641 = vsel %vm598, %v1637, 0.0
    %1642 = vadd.xlane.f32.xlu0 %v1641
    %v1643 = vpop.xlane.xlu0 %1642
    %v1644 = vmul.f32 %v1640, %v1001
    %v1645 = vmul.f32 %v1643, %v1001
    %v1646 = vadd.f32 %v1644, 1e-05
    %v1647 = vadd.f32 %v1645, 1e-05
    %v1648 = vrsqrt.pop %v1646
    %v1649 = vrsqrt.pop %v1647
    %v1650 = vmul.f32 %v1634, %v1648
    %v1651 = vmul.f32 %v1635, %v1649
    %v1653 = vlaneseq
    %v1654 = vshrl.u32 %v1653, 7
    %v1655 = vsub.s32 0, %v1654
    %v1656 = vrot.slane %v1203, %v1655
    %v1658 = vmul.f32 %v1650, %v1656
    %v1659 = vmul.f32 %v1651, %v1656
    %v1661 = vlaneseq
    %v1662 = vshrl.u32 %v1661, 7
    %v1663 = vsub.s32 0, %v1662
    %v1664 = vrot.slane %v1204, %v1663
    %v1666 = vadd.f32 %v1658, %v1664
    %v1667 = vadd.f32 %v1659, %v1664
    %v1668 = vpack.c.bf16 %v1667, %v1666
    %v1669 = vpack.c.bf16 %v1206, %v1205
    %v1670 = vpack.c.bf16 %v1208, %v1207
    %v1672 = vlaneseq
    %v1673 = vshrl.u32 %v1672, 7
    %v1674 = vsub.s32 0, %v1673
    %v1675 = vrot.slane %v1209, %v1674
    %v1678 = vsel %vm598, %v1668, 0
    %1680 = vmatprep.subr.bf16.mxu0 0
    %1681 = vmatpush1.bf16.msra.mxu0 0
    %1682 = vmatprep.subr.bf16.mxu0 0
    %1683 = vmatpush1.bf16.msra.mxu0 0
    %1684 = vmatprep.subr.bf16.mxu0 0
    %1685 = vmatpush1.bf16.msra.mxu0 0
    %1686 = vmatprep.subr.bf16.mxu0 0
    %1687 = vmatpush1.bf16.msra.mxu0 0
    %1688 = vmatprep.subr.bf16.mxu0 0
    %1689 = vmatpush1.bf16.msra.mxu0 0
    %1690 = vmatprep.subr.bf16.mxu0 0
    %1691 = vmatpush1.bf16.msra.mxu0 0
    %1692 = vmatprep.subr.bf16.mxu0 0
    %1693 = vmatpush1.bf16.msra.mxu0 %v1670
    %1694 = vmatprep.subr.bf16.mxu0 0
    %1695 = vmatpush1.bf16.msra.mxu0 %v1669
    %1696 = vmatprep.subr.bf16.mxu0 0
    %1697 = vmatpush2.bf16.msra.mxu0 0
    %1698 = vmatprep.subr.bf16.mxu0 0
    %1699 = vmatpush2.bf16.msra.mxu0 0
    %1700 = vmatprep.subr.bf16.mxu0 0
    %1701 = vmatpush2.bf16.msra.mxu0 0
    %1702 = vmatprep.subr.bf16.mxu0 0
    %1703 = vmatpush2.bf16.msra.mxu0 0
    %1704 = vmatprep.subr.bf16.mxu0 0
    %1705 = vmatpush2.bf16.msra.mxu0 0
    %1706 = vmatprep.subr.bf16.mxu0 0
    %1707 = vmatpush2.bf16.msra.mxu0 0
    %1708 = vmatprep.subr.bf16.mxu0 0
    %1709 = vmatpush2.bf16.msra.mxu0 0
    %1710 = vmatprep.subr.bf16.mxu0 0
    %1711 = vmatpush2.bf16.msra.mxu0 0
    %1712 = vmatprep.mubr.bf16.mxu0 0
    %1713 = vmatmul.mubr.bf16.gmra.mxu0 %v1678
    %v1714 = vpop.f32.mrf.mxu0
    %v1715 = vadd.f32 %v1675, %v1714
    %v1716 = vpop.f32.mrf.mxu0
    %v1717 = vpop.f32.mrf.mxu0
    %v1718 = vadd.f32 %v1675, %v1717
    %v1719 = vpop.f32.mrf.mxu0
    %1720 = vdwg.mxu0
    %v1721 = vmax.f32 %v1715, 0.0
    %v1722 = vmax.f32 %v1718, 0.0
    %v1723 = vpack.c.bf16 %v1722, %v1721
    %v1724 = vpack.c.bf16 %v1211, %v1210
    %v1725 = vpack.c.bf16 %v1213, %v1212
    %v1726 = vpack.c.bf16 %v1215, %v1214
    %v1727 = vpack.c.bf16 %v1217, %v1216
    %v1729 = vlaneseq
    %v1730 = vshrl.u32 %v1729, 7
    %v1731 = vsub.s32 0, %v1730
    %v1732 = vrot.slane %v1218, %v1731
    %v1735 = vsel %vm1104, %v1723, 0
    %1737 = vmatprep.subr.bf16.mxu0 0
    %1738 = vmatpush1.bf16.msra.mxu0 0
    %1739 = vmatprep.subr.bf16.mxu0 0
    %1740 = vmatpush1.bf16.msra.mxu0 0
    %1741 = vmatprep.subr.bf16.mxu0 0
    %1742 = vmatpush1.bf16.msra.mxu0 0
    %1743 = vmatprep.subr.bf16.mxu0 0
    %1744 = vmatpush1.bf16.msra.mxu0 0
    %1745 = vmatprep.subr.bf16.mxu0 0
    %1746 = vmatpush1.bf16.msra.mxu0 %v1727
    %1747 = vmatprep.subr.bf16.mxu0 0
    %1748 = vmatpush1.bf16.msra.mxu0 %v1726
    %1749 = vmatprep.subr.bf16.mxu0 0
    %1750 = vmatpush1.bf16.msra.mxu0 %v1725
    %1751 = vmatprep.subr.bf16.mxu0 0
    %1752 = vmatpush1.bf16.msra.mxu0 %v1724
    %1753 = vmatprep.subr.bf16.mxu0 0
    %1754 = vmatpush2.bf16.msra.mxu0 0
    %1755 = vmatprep.subr.bf16.mxu0 0
    %1756 = vmatpush2.bf16.msra.mxu0 0
    %1757 = vmatprep.subr.bf16.mxu0 0
    %1758 = vmatpush2.bf16.msra.mxu0 0
    %1759 = vmatprep.subr.bf16.mxu0 0
    %1760 = vmatpush2.bf16.msra.mxu0 0
    %1761 = vmatprep.subr.bf16.mxu0 0
    %1762 = vmatpush2.bf16.msra.mxu0 0
    %1763 = vmatprep.subr.bf16.mxu0 0
    %1764 = vmatpush2.bf16.msra.mxu0 0
    %1765 = vmatprep.subr.bf16.mxu0 0
    %1766 = vmatpush2.bf16.msra.mxu0 0
    %1767 = vmatprep.subr.bf16.mxu0 0
    %1768 = vmatpush2.bf16.msra.mxu0 0
    %1769 = vmatprep.mubr.bf16.mxu0 0
    %1770 = vmatmul.mubr.bf16.gmra.mxu0 %v1735
    %v1771 = vpop.f32.mrf.mxu0
    %v1772 = vadd.f32 %v1732, %v1771
    %v1773 = vpop.f32.mrf.mxu0
    %v1774 = vpop.f32.mrf.mxu0
    %v1775 = vadd.f32 %v1732, %v1774
    %v1776 = vpop.f32.mrf.mxu0
    %1777 = vdwg.mxu0
    %v1778 = vadd.f32 %v1666, %v1772
    %v1779 = vadd.f32 %v1667, %v1775
    %v1780 = vsel %vm598, %v1778, 0.0
    %1781 = vadd.xlane.f32.xlu0 %v1780
    %v1782 = vpop.xlane.xlu0 %1781
    %v1783 = vsel %vm598, %v1779, 0.0
    %1784 = vadd.xlane.f32.xlu0 %v1783
    %v1785 = vpop.xlane.xlu0 %1784
    %v1786 = vmul.f32 %v1782, %v1001
    %v1787 = vmul.f32 %v1785, %v1001
    %v1788 = vsub.f32 %v1778, %v1786
    %v1789 = vsub.f32 %v1779, %v1787
    %v1790 = vmul.f32 %v1788, %v1788
    %v1791 = vmul.f32 %v1789, %v1789
    %v1792 = vsel %vm598, %v1790, 0.0
    %1793 = vadd.xlane.f32.xlu0 %v1792
    %v1794 = vpop.xlane.xlu0 %1793
    %v1795 = vsel %vm598, %v1791, 0.0
    %1796 = vadd.xlane.f32.xlu0 %v1795
    %v1797 = vpop.xlane.xlu0 %1796
    %v1798 = vmul.f32 %v1794, %v1001
    %v1799 = vmul.f32 %v1797, %v1001
    %v1800 = vadd.f32 %v1798, 1e-05
    %v1801 = vadd.f32 %v1799, 1e-05
    %v1802 = vrsqrt.pop %v1800
    %v1803 = vrsqrt.pop %v1801
    %v1804 = vmul.f32 %v1788, %v1802
    %v1805 = vmul.f32 %v1789, %v1803
    %v1807 = vlaneseq
    %v1808 = vshrl.u32 %v1807, 7
    %v1809 = vsub.s32 0, %v1808
    %v1810 = vrot.slane %v1219, %v1809
    %v1812 = vmul.f32 %v1804, %v1810
    %v1813 = vmul.f32 %v1805, %v1810
    %v1815 = vlaneseq
    %v1816 = vshrl.u32 %v1815, 7
    %v1817 = vsub.s32 0, %v1816
    %v1818 = vrot.slane %v1220, %v1817
    %v1820 = vadd.f32 %v1812, %v1818
    %v1821 = vadd.f32 %v1813, %v1818
    %v1822 = vld [vmem:[%s63] sm:$0xff]
    %v1823 = vld [vmem:[%s63 + $0x8] sm:$0xff]
    %v1824 = vld [vmem:[%s63 + $0x10] sm:$0xff]
    %v1825 = vld [vmem:[%s63 + $0x18] sm:$0xff]
    %v1826 = vld [vmem:[#allocation3] sm:$0x1]
    %v1827 = vld [vmem:[%s67] sm:$0xff]
    %v1828 = vld [vmem:[%s67 + $0x8] sm:$0xff]
    %v1829 = vld [vmem:[%s67 + $0x10] sm:$0xff]
    %v1830 = vld [vmem:[%s67 + $0x18] sm:$0xff]
    %v1831 = vld [vmem:[#allocation5] sm:$0x1]
    %v1832 = vld [vmem:[%s71] sm:$0xff]
    %v1833 = vld [vmem:[%s71 + $0x8] sm:$0xff]
    %v1834 = vld [vmem:[%s71 + $0x10] sm:$0xff]
    %v1835 = vld [vmem:[%s71 + $0x18] sm:$0xff]
    %v1836 = vld [vmem:[#allocation7] sm:$0x1]
    %v1837 = vld [vmem:[#allocation8] sm:$0x1]
    %v1838 = vld [vmem:[#allocation10] sm:$0x1]
    %v1839 = vld [vmem:[%s79] sm:$0xff]
    %v1840 = vld [vmem:[%s79 + $0x8] sm:$0xff]
    %v1841 = vld [vmem:[%s79 + $0x10] sm:$0xff]
    %v1842 = vld [vmem:[%s79 + $0x18] sm:$0xff]
    %v1843 = vld [vmem:[#allocation11] sm:$0x1]
    %v1844 = vld [vmem:[%s83] sm:$0xff]
    %v1845 = vld [vmem:[%s83 + $0x8] sm:$0xff]
    %v1846 = vld [vmem:[%s83 + $0x10] sm:$0xff]
    %v1847 = vld [vmem:[%s83 + $0x18] sm:$0xff]
    %v1848 = vld [vmem:[%s83 + $0x20] sm:$0xff]
    %v1849 = vld [vmem:[%s83 + $0x28] sm:$0xff]
    %v1850 = vld [vmem:[%s83 + $0x30] sm:$0xff]
    %v1851 = vld [vmem:[%s83 + $0x38] sm:$0xff]
    %v1852 = vld [vmem:[#allocation13] sm:$0x1]
    %v1853 = vld [vmem:[#allocation14] sm:$0x1]
    %v1854 = vld [vmem:[#allocation16] sm:$0x1]
    %v1855 = vpack.c.bf16 %v1192, %v1191
    %v1856 = vpack.c.bf16 %v1823, %v1822
    %v1857 = vpack.c.bf16 %v1825, %v1824
    %v1859 = vlaneseq
    %v1860 = vshrl.u32 %v1859, 7
    %v1861 = vsub.s32 0, %v1860
    %v1862 = vrot.slane %v1826, %v1861
    %v1865 = vsel %vm598, %v1855, 0
    %1867 = vmatprep.subr.bf16.mxu0 0
    %1868 = vmatpush1.bf16.msra.mxu0 0
    %1869 = vmatprep.subr.bf16.mxu0 0
    %1870 = vmatpush1.bf16.msra.mxu0 0
    %1871 = vmatprep.subr.bf16.mxu0 0
    %1872 = vmatpush1.bf16.msra.mxu0 0
    %1873 = vmatprep.subr.bf16.mxu0 0
    %1874 = vmatpush1.bf16.msra.mxu0 0
    %1875 = vmatprep.subr.bf16.mxu0 0
    %1876 = vmatpush1.bf16.msra.mxu0 0
    %1877 = vmatprep.subr.bf16.mxu0 0
    %1878 = vmatpush1.bf16.msra.mxu0 0
    %1879 = vmatprep.subr.bf16.mxu0 0
    %1880 = vmatpush1.bf16.msra.mxu0 %v1857
    %1881 = vmatprep.subr.bf16.mxu0 0
    %1882 = vmatpush1.bf16.msra.mxu0 %v1856
    %1883 = vmatprep.subr.bf16.mxu0 0
    %1884 = vmatpush2.bf16.msra.mxu0 0
    %1885 = vmatprep.subr.bf16.mxu0 0
    %1886 = vmatpush2.bf16.msra.mxu0 0
    %1887 = vmatprep.subr.bf16.mxu0 0
    %1888 = vmatpush2.bf16.msra.mxu0 0
    %1889 = vmatprep.subr.bf16.mxu0 0
    %1890 = vmatpush2.bf16.msra.mxu0 0
    %1891 = vmatprep.subr.bf16.mxu0 0
    %1892 = vmatpush2.bf16.msra.mxu0 0
    %1893 = vmatprep.subr.bf16.mxu0 0
    %1894 = vmatpush2.bf16.msra.mxu0 0
    %1895 = vmatprep.subr.bf16.mxu0 0
    %1896 = vmatpush2.bf16.msra.mxu0 0
    %1897 = vmatprep.subr.bf16.mxu0 0
    %1898 = vmatpush2.bf16.msra.mxu0 0
    %1899 = vmatprep.mubr.bf16.mxu0 0
    %1900 = vmatmul.mubr.bf16.gmra.mxu0 %v1865
    %v1901 = vpop.f32.mrf.mxu0
    %v1902 = vadd.f32 %v1862, %v1901
    %v1903 = vpop.f32.mrf.mxu0
    %v1904 = vpop.f32.mrf.mxu0
    %v1905 = vadd.f32 %v1862, %v1904
    %v1906 = vpop.f32.mrf.mxu0
    %1907 = vdwg.mxu0
    %v1908 = vpack.c.bf16 %v1821, %v1820
    %v1909 = vpack.c.bf16 %v1828, %v1827
    %v1910 = vpack.c.bf16 %v1830, %v1829
    %v1912 = vlaneseq
    %v1913 = vshrl.u32 %v1912, 7
    %v1914 = vsub.s32 0, %v1913
    %v1915 = vrot.slane %v1831, %v1914
    %v1918 = vsel %vm598, %v1908, 0
    %1920 = vmatprep.subr.bf16.mxu0 0
    %1921 = vmatpush1.bf16.msra.mxu0 0
    %1922 = vmatprep.subr.bf16.mxu0 0
    %1923 = vmatpush1.bf16.msra.mxu0 0
    %1924 = vmatprep.subr.bf16.mxu0 0
    %1925 = vmatpush1.bf16.msra.mxu0 0
    %1926 = vmatprep.subr.bf16.mxu0 0
    %1927 = vmatpush1.bf16.msra.mxu0 0
    %1928 = vmatprep.subr.bf16.mxu0 0
    %1929 = vmatpush1.bf16.msra.mxu0 0
    %1930 = vmatprep.subr.bf16.mxu0 0
    %1931 = vmatpush1.bf16.msra.mxu0 0
    %1932 = vmatprep.subr.bf16.mxu0 0
    %1933 = vmatpush1.bf16.msra.mxu0 %v1910
    %1934 = vmatprep.subr.bf16.mxu0 0
    %1935 = vmatpush1.bf16.msra.mxu0 %v1909
    %1936 = vmatprep.subr.bf16.mxu0 0
    %1937 = vmatpush2.bf16.msra.mxu0 0
    %1938 = vmatprep.subr.bf16.mxu0 0
    %1939 = vmatpush2.bf16.msra.mxu0 0
    %1940 = vmatprep.subr.bf16.mxu0 0
    %1941 = vmatpush2.bf16.msra.mxu0 0
    %1942 = vmatprep.subr.bf16.mxu0 0
    %1943 = vmatpush2.bf16.msra.mxu0 0
    %1944 = vmatprep.subr.bf16.mxu0 0
    %1945 = vmatpush2.bf16.msra.mxu0 0
    %1946 = vmatprep.subr.bf16.mxu0 0
    %1947 = vmatpush2.bf16.msra.mxu0 0
    %1948 = vmatprep.subr.bf16.mxu0 0
    %1949 = vmatpush2.bf16.msra.mxu0 0
    %1950 = vmatprep.subr.bf16.mxu0 0
    %1951 = vmatpush2.bf16.msra.mxu0 0
    %1952 = vmatprep.mubr.bf16.mxu0 0
    %1953 = vmatmul.mubr.bf16.gmra.mxu0 %v1918
    %v1954 = vpop.f32.mrf.mxu0
    %v1955 = vadd.f32 %v1915, %v1954
    %v1956 = vpop.f32.mrf.mxu0
    %v1957 = vpop.f32.mrf.mxu0
    %v1958 = vadd.f32 %v1915, %v1957
    %v1959 = vpop.f32.mrf.mxu0
    %1960 = vdwg.mxu0
    %v1961 = vpack.c.bf16 %v1905, %v1902
    %1963 = vrot.lane.b32.xlu0 %v1961, 96
    %v1964 = vpop.permute.xlu0 %1963
    %v1966 = vsel %vm388, %v1961, 0
    %v1969 = vsel %vm388, %v1964, 0
    %1971 = vmatprep.subr.bf16.mxu0 0
    %1972 = vmatpush1.bf16.xpose.msra.mxu0 0
    %1973 = vmatprep.subr.bf16.mxu0 0
    %1974 = vmatpush1.bf16.xpose.msra.mxu0 0
    %1975 = vmatprep.subr.bf16.mxu0 0
    %1976 = vmatpush1.bf16.xpose.msra.mxu0 0
    %1977 = vmatprep.subr.bf16.mxu0 0
    %1978 = vmatpush1.bf16.xpose.msra.mxu0 0
    %1979 = vmatprep.subr.bf16.mxu0 0
    %1980 = vmatpush1.bf16.xpose.msra.mxu0 0
    %1981 = vmatprep.subr.bf16.mxu0 0
    %1982 = vmatpush1.bf16.xpose.msra.mxu0 0
    %1983 = vmatprep.subr.bf16.mxu0 0
    %1984 = vmatpush1.bf16.xpose.msra.mxu0 0
    %1985 = vmatprep.subr.bf16.mxu0 0
    %1986 = vmatpush1.bf16.xpose.msra.mxu0 %v1969
    %1987 = vmatprep.subr.bf16.mxu0 0
    %1988 = vmatpush2.bf16.xpose.msra.mxu0 0
    %1989 = vmatprep.subr.bf16.mxu0 0
    %1990 = vmatpush2.bf16.xpose.msra.mxu0 0
    %1991 = vmatprep.subr.bf16.mxu0 0
    %1992 = vmatpush2.bf16.xpose.msra.mxu0 0
    %1993 = vmatprep.subr.bf16.mxu0 0
    %1994 = vmatpush2.bf16.xpose.msra.mxu0 0
    %1995 = vmatprep.subr.bf16.mxu0 0
    %1996 = vmatpush2.bf16.xpose.msra.mxu0 0
    %1997 = vmatprep.subr.bf16.mxu0 0
    %1998 = vmatpush2.bf16.xpose.msra.mxu0 0
    %1999 = vmatprep.subr.bf16.mxu0 0
    %2000 = vmatpush2.bf16.xpose.msra.mxu0 0
    %2001 = vmatprep.subr.bf16.mxu0 0
    %2002 = vmatpush2.bf16.xpose.msra.mxu0 0
    %2003 = vmatprep.mubr.bf16.mxu0 0
    %2004 = vmatmul.mubr.bf16.gmra.mxu0 %v1966
    %v2005 = vpop.f32.mrf.mxu0
    %v2006 = vadd.f32 0.0, %v2005
    %v2007 = vpop.f32.mrf.mxu0
    %v2008 = vpop.f32.mrf.mxu0
    %v2009 = vadd.f32 0.0, %v2008
    %v2010 = vpop.f32.mrf.mxu0
    %2011 = vdwg.mxu0
    %v2012 = vmul.f32 %v2006, 0.25
    %v2013 = vmul.f32 %v2009, 0.25
    %v2014 = vadd.f32 %v2012, %v557
    %v2015 = vadd.f32 %v2013, %v558
    %v2016 = vsel %vm388, %v2014, -inf
    %2017 = vmax.xlane.f32.xlu0 %v2016
    %v2018 = vpop.xlane.xlu0 %2017
    %v2019 = vsel %vm388, %v2015, -inf
    %2020 = vmax.xlane.f32.xlu0 %v2019
    %v2021 = vpop.xlane.xlu0 %2020
    %v2022 = vsub.f32 %v2014, %v2018
    %v2023 = vsub.f32 %v2015, %v2021
    %v2024 = vmul.f32 %v2022, 1.442695
    %v2025 = vpow.pop %v2024
    %v2026 = vmul.f32 %v2023, 1.442695
    %v2027 = vpow.pop %v2026
    %v2028 = vsel %vm388, %v2025, 0.0
    %2029 = vadd.xlane.f32.xlu0 %v2028
    %v2030 = vpop.xlane.xlu0 %2029
    %v2031 = vsel %vm388, %v2027, 0.0
    %2032 = vadd.xlane.f32.xlu0 %v2031
    %v2033 = vpop.xlane.xlu0 %2032
    %v2034 = vrcp.pop %v2030
    %v2035 = vrcp.pop %v2033
    %v2036 = vmul.f32 %v2025, %v2034
    %v2037 = vmul.f32 %v2027, %v2035
    %2039 = vset.pattern.permute.xlu0 0
    %2040 = vperm.xlu0 %2039, %v559
    %v2041 = vpop.permute.xlu0 %2040
    %2044 = vset.pattern.permute.xlu0 0
    %2045 = vperm.xlu0 %2044, %v560
    %v2046 = vpop.permute.xlu0 %2045
    %v2048 = vmul.f32 %v2036, %v2041
    %v2049 = vmul.f32 %v2037, %v2046
    %v2050 = vpack.c.bf16 %v2049, %v2048
    %v2051 = vpack.c.bf16 %v1958, %v1955
    %v2053 = vsel %vm388, %v2050, 0
    %2055 = vmatprep.subr.bf16.mxu0 0
    %2056 = vmatpush1.bf16.msra.mxu0 0
    %2057 = vmatprep.subr.bf16.mxu0 0
    %2058 = vmatpush1.bf16.msra.mxu0 0
    %2059 = vmatprep.subr.bf16.mxu0 0
    %2060 = vmatpush1.bf16.msra.mxu0 0
    %2061 = vmatprep.subr.bf16.mxu0 0
    %2062 = vmatpush1.bf16.msra.mxu0 0
    %2063 = vmatprep.subr.bf16.mxu0 0
    %2064 = vmatpush1.bf16.msra.mxu0 0
    %2065 = vmatprep.subr.bf16.mxu0 0
    %2066 = vmatpush1.bf16.msra.mxu0 0
    %2067 = vmatprep.subr.bf16.mxu0 0
    %2068 = vmatpush1.bf16.msra.mxu0 0
    %2069 = vmatprep.subr.bf16.mxu0 0
    %2070 = vmatpush1.bf16.msra.mxu0 %v2051
    %2071 = vmatprep.subr.bf16.mxu0 0
    %2072 = vmatpush2.bf16.msra.mxu0 0
    %2073 = vmatprep.subr.bf16.mxu0 0
    %2074 = vmatpush2.bf16.msra.mxu0 0
    %2075 = vmatprep.subr.bf16.mxu0 0
    %2076 = vmatpush2.bf16.msra.mxu0 0
    %2077 = vmatprep.subr.bf16.mxu0 0
    %2078 = vmatpush2.bf16.msra.mxu0 0
    %2079 = vmatprep.subr.bf16.mxu0 0
    %2080 = vmatpush2.bf16.msra.mxu0 0
    %2081 = vmatprep.subr.bf16.mxu0 0
    %2082 = vmatpush2.bf16.msra.mxu0 0
    %2083 = vmatprep.subr.bf16.mxu0 0
    %2084 = vmatpush2.bf16.msra.mxu0 0
    %2085 = vmatprep.subr.bf16.mxu0 0
    %2086 = vmatpush2.bf16.msra.mxu0 0
    %2087 = vmatprep.mubr.bf16.mxu0 0
    %2088 = vmatmul.mubr.bf16.gmra.mxu0 %v2053
    %v2089 = vpop.f32.mrf.mxu0
    %v2090 = vadd.f32 0.0, %v2089
    %v2091 = vpop.f32.mrf.mxu0
    %v2092 = vpop.f32.mrf.mxu0
    %v2093 = vadd.f32 0.0, %v2092
    %v2094 = vpop.f32.mrf.mxu0
    %2095 = vdwg.mxu0
    %v2096 = vpack.c.bf16 %v2093, %v2090
    %v2097 = vpack.c.bf16 %v1833, %v1832
    %2098 = vrot.lane.b32.xlu0 %v1961, 112
    %v2099 = vpop.permute.xlu0 %2098
    %2100 = vrot.lane.b32.xlu0 %v1961, 80
    %v2101 = vpop.permute.xlu0 %2100
    %v2103 = vsel %vm388, %v2099, 0
    %v2106 = vsel %vm388, %v2101, 0
    %2108 = vmatprep.subr.bf16.mxu0 0
    %2109 = vmatpush1.bf16.xpose.msra.mxu0 0
    %2110 = vmatprep.subr.bf16.mxu0 0
    %2111 = vmatpush1.bf16.xpose.msra.mxu0 0
    %2112 = vmatprep.subr.bf16.mxu0 0
    %2113 = vmatpush1.bf16.xpose.msra.mxu0 0
    %2114 = vmatprep.subr.bf16.mxu0 0
    %2115 = vmatpush1.bf16.xpose.msra.mxu0 0
    %2116 = vmatprep.subr.bf16.mxu0 0
    %2117 = vmatpush1.bf16.xpose.msra.mxu0 0
    %2118 = vmatprep.subr.bf16.mxu0 0
    %2119 = vmatpush1.bf16.xpose.msra.mxu0 0
    %2120 = vmatprep.subr.bf16.mxu0 0
    %2121 = vmatpush1.bf16.xpose.msra.mxu0 0
    %2122 = vmatprep.subr.bf16.mxu0 0
    %2123 = vmatpush1.bf16.xpose.msra.mxu0 %v2106
    %2124 = vmatprep.subr.bf16.mxu0 0
    %2125 = vmatpush2.bf16.xpose.msra.mxu0 0
    %2126 = vmatprep.subr.bf16.mxu0 0
    %2127 = vmatpush2.bf16.xpose.msra.mxu0 0
    %2128 = vmatprep.subr.bf16.mxu0 0
    %2129 = vmatpush2.bf16.xpose.msra.mxu0 0
    %2130 = vmatprep.subr.bf16.mxu0 0
    %2131 = vmatpush2.bf16.xpose.msra.mxu0 0
    %2132 = vmatprep.subr.bf16.mxu0 0
    %2133 = vmatpush2.bf16.xpose.msra.mxu0 0
    %2134 = vmatprep.subr.bf16.mxu0 0
    %2135 = vmatpush2.bf16.xpose.msra.mxu0 0
    %2136 = vmatprep.subr.bf16.mxu0 0
    %2137 = vmatpush2.bf16.xpose.msra.mxu0 0
    %2138 = vmatprep.subr.bf16.mxu0 0
    %2139 = vmatpush2.bf16.xpose.msra.mxu0 0
    %2140 = vmatprep.mubr.bf16.mxu0 0
    %2141 = vmatmul.mubr.bf16.gmra.mxu0 %v2103
    %v2142 = vpop.f32.mrf.mxu0
    %v2143 = vadd.f32 0.0, %v2142
    %v2144 = vpop.f32.mrf.mxu0
    %v2145 = vpop.f32.mrf.mxu0
    %v2146 = vadd.f32 0.0, %v2145
    %v2147 = vpop.f32.mrf.mxu0
    %2148 = vdwg.mxu0
    %v2149 = vmul.f32 %v2143, 0.25
    %v2150 = vmul.f32 %v2146, 0.25
    %v2151 = vadd.f32 %v2149, %v557
    %v2152 = vadd.f32 %v2150, %v558
    %v2153 = vsel %vm388, %v2151, -inf
    %2154 = vmax.xlane.f32.xlu0 %v2153
    %v2155 = vpop.xlane.xlu0 %2154
    %v2156 = vsel %vm388, %v2152, -inf
    %2157 = vmax.xlane.f32.xlu0 %v2156
    %v2158 = vpop.xlane.xlu0 %2157
    %v2159 = vsub.f32 %v2151, %v2155
    %v2160 = vsub.f32 %v2152, %v2158
    %v2161 = vmul.f32 %v2159, 1.442695
    %v2162 = vpow.pop %v2161
    %v2163 = vmul.f32 %v2160, 1.442695
    %v2164 = vpow.pop %v2163
    %v2165 = vsel %vm388, %v2162, 0.0
    %2166 = vadd.xlane.f32.xlu0 %v2165
    %v2167 = vpop.xlane.xlu0 %2166
    %v2168 = vsel %vm388, %v2164, 0.0
    %2169 = vadd.xlane.f32.xlu0 %v2168
    %v2170 = vpop.xlane.xlu0 %2169
    %v2171 = vrcp.pop %v2167
    %v2172 = vrcp.pop %v2170
    %v2173 = vmul.f32 %v2162, %v2171
    %v2174 = vmul.f32 %v2164, %v2172
    %v2175 = vmul.f32 %v2173, %v2041
    %v2176 = vmul.f32 %v2174, %v2046
    %v2177 = vpack.c.bf16 %v2176, %v2175
    %2179 = vrot.lane.b32.xlu0 %v2051, 112
    %v2180 = vpop.permute.xlu0 %2179
    %v2183 = vsel %vm388, %v2177, 0
    %2185 = vmatprep.subr.bf16.mxu0 0
    %2186 = vmatpush1.bf16.msra.mxu0 0
    %2187 = vmatprep.subr.bf16.mxu0 0
    %2188 = vmatpush1.bf16.msra.mxu0 0
    %2189 = vmatprep.subr.bf16.mxu0 0
    %2190 = vmatpush1.bf16.msra.mxu0 0
    %2191 = vmatprep.subr.bf16.mxu0 0
    %2192 = vmatpush1.bf16.msra.mxu0 0
    %2193 = vmatprep.subr.bf16.mxu0 0
    %2194 = vmatpush1.bf16.msra.mxu0 0
    %2195 = vmatprep.subr.bf16.mxu0 0
    %2196 = vmatpush1.bf16.msra.mxu0 0
    %2197 = vmatprep.subr.bf16.mxu0 0
    %2198 = vmatpush1.bf16.msra.mxu0 0
    %2199 = vmatprep.subr.bf16.mxu0 0
    %2200 = vmatpush1.bf16.msra.mxu0 %v2180
    %2201 = vmatprep.subr.bf16.mxu0 0
    %2202 = vmatpush2.bf16.msra.mxu0 0
    %2203 = vmatprep.subr.bf16.mxu0 0
    %2204 = vmatpush2.bf16.msra.mxu0 0
    %2205 = vmatprep.subr.bf16.mxu0 0
    %2206 = vmatpush2.bf16.msra.mxu0 0
    %2207 = vmatprep.subr.bf16.mxu0 0
    %2208 = vmatpush2.bf16.msra.mxu0 0
    %2209 = vmatprep.subr.bf16.mxu0 0
    %2210 = vmatpush2.bf16.msra.mxu0 0
    %2211 = vmatprep.subr.bf16.mxu0 0
    %2212 = vmatpush2.bf16.msra.mxu0 0
    %2213 = vmatprep.subr.bf16.mxu0 0
    %2214 = vmatpush2.bf16.msra.mxu0 0
    %2215 = vmatprep.subr.bf16.mxu0 0
    %2216 = vmatpush2.bf16.msra.mxu0 0
    %2217 = vmatprep.mubr.bf16.mxu0 0
    %2218 = vmatmul.mubr.bf16.gmra.mxu0 %v2183
    %v2219 = vpop.f32.mrf.mxu0
    %v2220 = vadd.f32 0.0, %v2219
    %v2221 = vpop.f32.mrf.mxu0
    %v2222 = vpop.f32.mrf.mxu0
    %v2223 = vadd.f32 0.0, %v2222
    %v2224 = vpop.f32.mrf.mxu0
    %2225 = vdwg.mxu0
    %v2226 = vpack.c.bf16 %v2223, %v2220
    %v2227 = vpack.c.bf16 %v1835, %v1834
    %v2229 = vsel %vm388, %v2226, 0
    %2231 = vmatprep.subr.bf16.mxu0 0
    %2232 = vmatpush1.bf16.msra.mxu0 0
    %2233 = vmatprep.subr.bf16.mxu0 0
    %2234 = vmatpush1.bf16.msra.mxu0 0
    %2235 = vmatprep.subr.bf16.mxu0 0
    %2236 = vmatpush1.bf16.msra.mxu0 0
    %2237 = vmatprep.subr.bf16.mxu0 0
    %2238 = vmatpush1.bf16.msra.mxu0 0
    %2239 = vmatprep.subr.bf16.mxu0 0
    %2240 = vmatpush1.bf16.msra.mxu0 0
    %2241 = vmatprep.subr.bf16.mxu0 0
    %2242 = vmatpush1.bf16.msra.mxu0 0
    %2243 = vmatprep.subr.bf16.mxu0 0
    %2244 = vmatpush1.bf16.msra.mxu0 0
    %2245 = vmatprep.subr.bf16.mxu0 0
    %2246 = vmatpush1.bf16.msra.mxu0 %v2227
    %2247 = vmatprep.subr.bf16.mxu0 0
    %2248 = vmatpush2.bf16.msra.mxu0 0
    %2249 = vmatprep.subr.bf16.mxu0 0
    %2250 = vmatpush2.bf16.msra.mxu0 0
    %2251 = vmatprep.subr.bf16.mxu0 0
    %2252 = vmatpush2.bf16.msra.mxu0 0
    %2253 = vmatprep.subr.bf16.mxu0 0
    %2254 = vmatpush2.bf16.msra.mxu0 0
    %2255 = vmatprep.subr.bf16.mxu0 0
    %2256 = vmatpush2.bf16.msra.mxu0 0
    %2257 = vmatprep.subr.bf16.mxu0 0
    %2258 = vmatpush2.bf16.msra.mxu0 0
    %2259 = vmatprep.subr.bf16.mxu0 0
    %2260 = vmatpush2.bf16.msra.mxu0 0
    %2261 = vmatprep.subr.bf16.mxu0 0
    %2262 = vmatpush2.bf16.msra.mxu0 0
    %2263 = vmatprep.mubr.bf16.mxu0 0
    %2264 = vmatmul.mubr.bf16.gmra.mxu0 %v2229
    %v2265 = vpop.f32.mrf.mxu0
    %v2266 = vadd.f32 0.0, %v2265
    %v2267 = vpop.f32.mrf.mxu0
    %v2268 = vpop.f32.mrf.mxu0
    %v2269 = vadd.f32 0.0, %v2268
    %v2270 = vpop.f32.mrf.mxu0
    %2271 = vdwg.mxu0
    %v2273 = vsel %vm388, %v2096, 0
    %2275 = vmatprep.subr.bf16.mxu0 0
    %2276 = vmatpush1.bf16.msra.mxu0 0
    %2277 = vmatprep.subr.bf16.mxu0 0
    %2278 = vmatpush1.bf16.msra.mxu0 0
    %2279 = vmatprep.subr.bf16.mxu0 0
    %2280 = vmatpush1.bf16.msra.mxu0 0
    %2281 = vmatprep.subr.bf16.mxu0 0
    %2282 = vmatpush1.bf16.msra.mxu0 0
    %2283 = vmatprep.subr.bf16.mxu0 0
    %2284 = vmatpush1.bf16.msra.mxu0 0
    %2285 = vmatprep.subr.bf16.mxu0 0
    %2286 = vmatpush1.bf16.msra.mxu0 0
    %2287 = vmatprep.subr.bf16.mxu0 0
    %2288 = vmatpush1.bf16.msra.mxu0 0
    %2289 = vmatprep.subr.bf16.mxu0 0
    %2290 = vmatpush1.bf16.msra.mxu0 %v2097
    %2291 = vmatprep.subr.bf16.mxu0 0
    %2292 = vmatpush2.bf16.msra.mxu0 0
    %2293 = vmatprep.subr.bf16.mxu0 0
    %2294 = vmatpush2.bf16.msra.mxu0 0
    %2295 = vmatprep.subr.bf16.mxu0 0
    %2296 = vmatpush2.bf16.msra.mxu0 0
    %2297 = vmatprep.subr.bf16.mxu0 0
    %2298 = vmatpush2.bf16.msra.mxu0 0
    %2299 = vmatprep.subr.bf16.mxu0 0
    %2300 = vmatpush2.bf16.msra.mxu0 0
    %2301 = vmatprep.subr.bf16.mxu0 0
    %2302 = vmatpush2.bf16.msra.mxu0 0
    %2303 = vmatprep.subr.bf16.mxu0 0
    %2304 = vmatpush2.bf16.msra.mxu0 0
    %2305 = vmatprep.subr.bf16.mxu0 0
    %2306 = vmatpush2.bf16.msra.mxu0 0
    %2307 = vmatprep.mubr.bf16.mxu0 0
    %2308 = vmatmul.mubr.bf16.gmra.mxu0 %v2273
    %v2309 = vpop.f32.mrf.mxu0
    %v2310 = vadd.f32 %v2266, %v2309
    %v2311 = vpop.f32.mrf.mxu0
    %v2312 = vpop.f32.mrf.mxu0
    %v2313 = vadd.f32 %v2269, %v2312
    %v2314 = vpop.f32.mrf.mxu0
    %2315 = vdwg.mxu0
    %v2317 = vlaneseq
    %v2318 = vshrl.u32 %v2317, 7
    %v2319 = vsub.s32 0, %v2318
    %v2320 = vrot.slane %v1836, %v2319
    %v2322 = vadd.f32 %v2310, %v2320
    %v2323 = vadd.f32 %v2313, %v2320
    %v2324 = vadd.f32 %v1191, %v2322
    %v2325 = vadd.f32 %v1192, %v2323
    %v2326 = vsel %vm598, %v2324, 0.0
    %2327 = vadd.xlane.f32.xlu0 %v2326
    %v2328 = vpop.xlane.xlu0 %2327
    %v2329 = vsel %vm598, %v2325, 0.0
    %2330 = vadd.xlane.f32.xlu0 %v2329
    %v2331 = vpop.xlane.xlu0 %2330
    %v2332 = vmul.f32 %v2328, %v1001
    %v2333 = vmul.f32 %v2331, %v1001
    %v2334 = vsub.f32 %v2324, %v2332
    %v2335 = vsub.f32 %v2325, %v2333
    %v2336 = vmul.f32 %v2334, %v2334
    %v2337 = vmul.f32 %v2335, %v2335
    %v2338 = vsel %vm598, %v2336, 0.0
    %2339 = vadd.xlane.f32.xlu0 %v2338
    %v2340 = vpop.xlane.xlu0 %2339
    %v2341 = vsel %vm598, %v2337, 0.0
    %2342 = vadd.xlane.f32.xlu0 %v2341
    %v2343 = vpop.xlane.xlu0 %2342
    %v2344 = vmul.f32 %v2340, %v1001
    %v2345 = vmul.f32 %v2343, %v1001
    %v2346 = vadd.f32 %v2344, 1e-05
    %v2347 = vadd.f32 %v2345, 1e-05
    %v2348 = vrsqrt.pop %v2346
    %v2349 = vrsqrt.pop %v2347
    %v2350 = vmul.f32 %v2334, %v2348
    %v2351 = vmul.f32 %v2335, %v2349
    %v2353 = vlaneseq
    %v2354 = vshrl.u32 %v2353, 7
    %v2355 = vsub.s32 0, %v2354
    %v2356 = vrot.slane %v1837, %v2355
    %v2358 = vmul.f32 %v2350, %v2356
    %v2359 = vmul.f32 %v2351, %v2356
    %v2361 = vlaneseq
    %v2362 = vshrl.u32 %v2361, 7
    %v2363 = vsub.s32 0, %v2362
    %v2364 = vrot.slane %v1838, %v2363
    %v2366 = vadd.f32 %v2358, %v2364
    %v2367 = vadd.f32 %v2359, %v2364
    %v2368 = vpack.c.bf16 %v2367, %v2366
    %v2369 = vpack.c.bf16 %v1840, %v1839
    %v2370 = vpack.c.bf16 %v1842, %v1841
    %v2372 = vlaneseq
    %v2373 = vshrl.u32 %v2372, 7
    %v2374 = vsub.s32 0, %v2373
    %v2375 = vrot.slane %v1843, %v2374
    %v2378 = vsel %vm598, %v2368, 0
    %2380 = vmatprep.subr.bf16.mxu0 0
    %2381 = vmatpush1.bf16.msra.mxu0 0
    %2382 = vmatprep.subr.bf16.mxu0 0
    %2383 = vmatpush1.bf16.msra.mxu0 0
    %2384 = vmatprep.subr.bf16.mxu0 0
    %2385 = vmatpush1.bf16.msra.mxu0 0
    %2386 = vmatprep.subr.bf16.mxu0 0
    %2387 = vmatpush1.bf16.msra.mxu0 0
    %2388 = vmatprep.subr.bf16.mxu0 0
    %2389 = vmatpush1.bf16.msra.mxu0 0
    %2390 = vmatprep.subr.bf16.mxu0 0
    %2391 = vmatpush1.bf16.msra.mxu0 0
    %2392 = vmatprep.subr.bf16.mxu0 0
    %2393 = vmatpush1.bf16.msra.mxu0 %v2370
    %2394 = vmatprep.subr.bf16.mxu0 0
    %2395 = vmatpush1.bf16.msra.mxu0 %v2369
    %2396 = vmatprep.subr.bf16.mxu0 0
    %2397 = vmatpush2.bf16.msra.mxu0 0
    %2398 = vmatprep.subr.bf16.mxu0 0
    %2399 = vmatpush2.bf16.msra.mxu0 0
    %2400 = vmatprep.subr.bf16.mxu0 0
    %2401 = vmatpush2.bf16.msra.mxu0 0
    %2402 = vmatprep.subr.bf16.mxu0 0
    %2403 = vmatpush2.bf16.msra.mxu0 0
    %2404 = vmatprep.subr.bf16.mxu0 0
    %2405 = vmatpush2.bf16.msra.mxu0 0
    %2406 = vmatprep.subr.bf16.mxu0 0
    %2407 = vmatpush2.bf16.msra.mxu0 0
    %2408 = vmatprep.subr.bf16.mxu0 0
    %2409 = vmatpush2.bf16.msra.mxu0 0
    %2410 = vmatprep.subr.bf16.mxu0 0
    %2411 = vmatpush2.bf16.msra.mxu0 0
    %2412 = vmatprep.mubr.bf16.mxu0 0
    %2413 = vmatmul.mubr.bf16.gmra.mxu0 %v2378
    %v2414 = vpop.f32.mrf.mxu0
    %v2415 = vadd.f32 %v2375, %v2414
    %v2416 = vpop.f32.mrf.mxu0
    %v2417 = vpop.f32.mrf.mxu0
    %v2418 = vadd.f32 %v2375, %v2417
    %v2419 = vpop.f32.mrf.mxu0
    %2420 = vdwg.mxu0
    %v2421 = vmax.f32 %v2415, 0.0
    %v2422 = vmax.f32 %v2418, 0.0
    %v2423 = vpack.c.bf16 %v2422, %v2421
    %v2424 = vpack.c.bf16 %v1845, %v1844
    %v2425 = vpack.c.bf16 %v1847, %v1846
    %v2426 = vpack.c.bf16 %v1849, %v1848
    %v2427 = vpack.c.bf16 %v1851, %v1850
    %v2429 = vlaneseq
    %v2430 = vshrl.u32 %v2429, 7
    %v2431 = vsub.s32 0, %v2430
    %v2432 = vrot.slane %v1852, %v2431
    %v2435 = vsel %vm1104, %v2423, 0
    %2437 = vmatprep.subr.bf16.mxu0 0
    %2438 = vmatpush1.bf16.msra.mxu0 0
    %2439 = vmatprep.subr.bf16.mxu0 0
    %2440 = vmatpush1.bf16.msra.mxu0 0
    %2441 = vmatprep.subr.bf16.mxu0 0
    %2442 = vmatpush1.bf16.msra.mxu0 0
    %2443 = vmatprep.subr.bf16.mxu0 0
    %2444 = vmatpush1.bf16.msra.mxu0 0
    %2445 = vmatprep.subr.bf16.mxu0 0
    %2446 = vmatpush1.bf16.msra.mxu0 %v2427
    %2447 = vmatprep.subr.bf16.mxu0 0
    %2448 = vmatpush1.bf16.msra.mxu0 %v2426
    %2449 = vmatprep.subr.bf16.mxu0 0
    %2450 = vmatpush1.bf16.msra.mxu0 %v2425
    %2451 = vmatprep.subr.bf16.mxu0 0
    %2452 = vmatpush1.bf16.msra.mxu0 %v2424
    %2453 = vmatprep.subr.bf16.mxu0 0
    %2454 = vmatpush2.bf16.msra.mxu0 0
    %2455 = vmatprep.subr.bf16.mxu0 0
    %2456 = vmatpush2.bf16.msra.mxu0 0
    %2457 = vmatprep.subr.bf16.mxu0 0
    %2458 = vmatpush2.bf16.msra.mxu0 0
    %2459 = vmatprep.subr.bf16.mxu0 0
    %2460 = vmatpush2.bf16.msra.mxu0 0
    %2461 = vmatprep.subr.bf16.mxu0 0
    %2462 = vmatpush2.bf16.msra.mxu0 0
    %2463 = vmatprep.subr.bf16.mxu0 0
    %2464 = vmatpush2.bf16.msra.mxu0 0
    %2465 = vmatprep.subr.bf16.mxu0 0
    %2466 = vmatpush2.bf16.msra.mxu0 0
    %2467 = vmatprep.subr.bf16.mxu0 0
    %2468 = vmatpush2.bf16.msra.mxu0 0
    %2469 = vmatprep.mubr.bf16.mxu0 0
    %2470 = vmatmul.mubr.bf16.gmra.mxu0 %v2435
    %v2471 = vpop.f32.mrf.mxu0
    %v2472 = vadd.f32 %v2432, %v2471
    %v2473 = vpop.f32.mrf.mxu0
    %v2474 = vpop.f32.mrf.mxu0
    %v2475 = vadd.f32 %v2432, %v2474
    %v2476 = vpop.f32.mrf.mxu0
    %2477 = vdwg.mxu0
    %v2478 = vadd.f32 %v2366, %v2472
    %v2479 = vadd.f32 %v2367, %v2475
    %v2480 = vsel %vm598, %v2478, 0.0
    %2481 = vadd.xlane.f32.xlu0 %v2480
    %v2482 = vpop.xlane.xlu0 %2481
    %v2483 = vsel %vm598, %v2479, 0.0
    %2484 = vadd.xlane.f32.xlu0 %v2483
    %v2485 = vpop.xlane.xlu0 %2484
    %v2486 = vmul.f32 %v2482, %v1001
    %v2487 = vmul.f32 %v2485, %v1001
    %v2488 = vsub.f32 %v2478, %v2486
    %v2489 = vsub.f32 %v2479, %v2487
    %v2490 = vmul.f32 %v2488, %v2488
    %v2491 = vmul.f32 %v2489, %v2489
    %v2492 = vsel %vm598, %v2490, 0.0
    %2493 = vadd.xlane.f32.xlu0 %v2492
    %v2494 = vpop.xlane.xlu0 %2493
    %v2495 = vsel %vm598, %v2491, 0.0
    %2496 = vadd.xlane.f32.xlu0 %v2495
    %v2497 = vpop.xlane.xlu0 %2496
    %v2498 = vmul.f32 %v2494, %v1001
    %v2499 = vmul.f32 %v2497, %v1001
    %v2500 = vadd.f32 %v2498, 1e-05
    %v2501 = vadd.f32 %v2499, 1e-05
    %v2502 = vrsqrt.pop %v2500
    %v2503 = vrsqrt.pop %v2501
    %v2504 = vmul.f32 %v2488, %v2502
    %v2505 = vmul.f32 %v2489, %v2503
    %v2507 = vlaneseq
    %v2508 = vshrl.u32 %v2507, 7
    %v2509 = vsub.s32 0, %v2508
    %v2510 = vrot.slane %v1853, %v2509
    %v2512 = vmul.f32 %v2504, %v2510
    %v2513 = vmul.f32 %v2505, %v2510
    %v2515 = vlaneseq
    %v2516 = vshrl.u32 %v2515, 7
    %v2517 = vsub.s32 0, %v2516
    %v2518 = vrot.slane %v1854, %v2517
    %v2520 = vadd.f32 %v2512, %v2518
    %v2521 = vadd.f32 %v2513, %v2518
    %v2522 = vld [vmem:[%s91] sm:$0xff]
    %v2523 = vld [vmem:[%s91 + $0x8] sm:$0xff]
    %v2524 = vld [vmem:[%s91 + $0x10] sm:$0xff]
    %v2525 = vld [vmem:[%s91 + $0x18] sm:$0xff]
    %v2526 = vld [vmem:[%s93] sm:$0xff]
    %v2527 = vld [vmem:[%s93 + $0x8] sm:$0xff]
    %v2528 = vld [vmem:[%s93 + $0x10] sm:$0xff]
    %v2529 = vld [vmem:[%s93 + $0x18] sm:$0xff]
    %v2530 = vld [vmem:[#allocation17] sm:$0x1]
    %v2531 = vld [vmem:[%s97] sm:$0xff]
    %v2532 = vld [vmem:[%s97 + $0x8] sm:$0xff]
    %v2533 = vld [vmem:[%s97 + $0x10] sm:$0xff]
    %v2534 = vld [vmem:[%s97 + $0x18] sm:$0xff]
    %v2535 = vld [vmem:[#allocation19] sm:$0x1]
    %v2536 = vld [vmem:[#allocation20] sm:$0x1]
    %v2537 = vld [vmem:[#allocation2] sm:$0x1]
    %v2538 = vpack.c.bf16 %v2521, %v2520
    %v2539 = vpack.c.bf16 %v2523, %v2522
    %v2540 = vpack.c.bf16 %v2525, %v2524
    %v2541 = vpack.c.bf16 %v2527, %v2526
    %v2542 = vpack.c.bf16 %v2529, %v2528
    %2543 = vmatprep.subr.bf16.mxu0 0
    %2544 = vmatpush1.bf16.msra.mxu0 0
    %2545 = vmatprep.subr.bf16.mxu0 0
    %2546 = vmatpush1.bf16.msra.mxu0 0
    %2547 = vmatprep.subr.bf16.mxu0 0
    %2548 = vmatpush1.bf16.msra.mxu0 0
    %2549 = vmatprep.subr.bf16.mxu0 0
    %2550 = vmatpush1.bf16.msra.mxu0 0
    %2551 = vmatprep.subr.bf16.mxu0 0
    %2552 = vmatpush1.bf16.msra.mxu0 0
    %2553 = vmatprep.subr.bf16.mxu0 0
    %2554 = vmatpush1.bf16.msra.mxu0 0
    %2555 = vmatprep.subr.bf16.mxu0 0
    %2556 = vmatpush1.bf16.msra.mxu0 %v2542
    %2557 = vmatprep.subr.bf16.mxu0 0
    %2558 = vmatpush1.bf16.msra.mxu0 %v2541
    %2559 = vmatprep.subr.bf16.mxu0 0
    %2560 = vmatpush2.bf16.msra.mxu0 0
    %2561 = vmatprep.subr.bf16.mxu0 0
    %2562 = vmatpush2.bf16.msra.mxu0 0
    %2563 = vmatprep.subr.bf16.mxu0 0
    %2564 = vmatpush2.bf16.msra.mxu0 0
    %2565 = vmatprep.subr.bf16.mxu0 0
    %2566 = vmatpush2.bf16.msra.mxu0 0
    %2567 = vmatprep.subr.bf16.mxu0 0
    %2568 = vmatpush2.bf16.msra.mxu0 0
    %2569 = vmatprep.subr.bf16.mxu0 0
    %2570 = vmatpush2.bf16.msra.mxu0 0
    %2571 = vmatprep.subr.bf16.mxu0 0
    %2572 = vmatpush2.bf16.msra.mxu0 0
    %2573 = vmatprep.subr.bf16.mxu0 0
    %2574 = vmatpush2.bf16.msra.mxu0 0
    %2575 = vmatprep.mubr.bf16.mxu0 0
    %2576 = vmatmul.mubr.bf16.gmra.mxu0 %v600
    %v2577 = vpop.f32.mrf.mxu0
    %v2578 = vadd.f32 0.0, %v2577
    %v2579 = vpop.f32.mrf.mxu0
    %v2580 = vpop.f32.mrf.mxu0
    %v2581 = vadd.f32 0.0, %v2580
    %v2582 = vpop.f32.mrf.mxu0
    %2583 = vdwg.mxu0
    %v2585 = vsel %vm598, %v2538, 0
    %2587 = vmatprep.subr.bf16.mxu0 0
    %2588 = vmatpush1.bf16.msra.mxu0 0
    %2589 = vmatprep.subr.bf16.mxu0 0
    %2590 = vmatpush1.bf16.msra.mxu0 0
    %2591 = vmatprep.subr.bf16.mxu0 0
    %2592 = vmatpush1.bf16.msra.mxu0 0
    %2593 = vmatprep.subr.bf16.mxu0 0
    %2594 = vmatpush1.bf16.msra.mxu0 0
    %2595 = vmatprep.subr.bf16.mxu0 0
    %2596 = vmatpush1.bf16.msra.mxu0 0
    %2597 = vmatprep.subr.bf16.mxu0 0
    %2598 = vmatpush1.bf16.msra.mxu0 0
    %2599 = vmatprep.subr.bf16.mxu0 0
    %2600 = vmatpush1.bf16.msra.mxu0 %v2540
    %2601 = vmatprep.subr.bf16.mxu0 0
    %2602 = vmatpush1.bf16.msra.mxu0 %v2539
    %2603 = vmatprep.subr.bf16.mxu0 0
    %2604 = vmatpush2.bf16.msra.mxu0 0
    %2605 = vmatprep.subr.bf16.mxu0 0
    %2606 = vmatpush2.bf16.msra.mxu0 0
    %2607 = vmatprep.subr.bf16.mxu0 0
    %2608 = vmatpush2.bf16.msra.mxu0 0
    %2609 = vmatprep.subr.bf16.mxu0 0
    %2610 = vmatpush2.bf16.msra.mxu0 0
    %2611 = vmatprep.subr.bf16.mxu0 0
    %2612 = vmatpush2.bf16.msra.mxu0 0
    %2613 = vmatprep.subr.bf16.mxu0 0
    %2614 = vmatpush2.bf16.msra.mxu0 0
    %2615 = vmatprep.subr.bf16.mxu0 0
    %2616 = vmatpush2.bf16.msra.mxu0 0
    %2617 = vmatprep.subr.bf16.mxu0 0
    %2618 = vmatpush2.bf16.msra.mxu0 0
    %2619 = vmatprep.mubr.bf16.mxu0 0
    %2620 = vmatmul.mubr.bf16.gmra.mxu0 %v2585
    %v2621 = vpop.f32.mrf.mxu0
    %v2622 = vadd.f32 %v2578, %v2621
    %v2623 = vpop.f32.mrf.mxu0
    %v2624 = vpop.f32.mrf.mxu0
    %v2625 = vadd.f32 %v2581, %v2624
    %v2626 = vpop.f32.mrf.mxu0
    %2627 = vdwg.mxu0
    %v2629 = vlaneseq
    %v2630 = vshrl.u32 %v2629, 7
    %v2631 = vsub.s32 0, %v2630
    %v2632 = vrot.slane %v2530, %v2631
    %v2634 = vadd.f32 %v2622, %v2632
    %v2635 = vadd.f32 %v2625, %v2632
    %v2636 = vmul.f32 %v2634, 0.5
    %v2637 = vmul.f32 %v2635, 0.5
    %v2638 = vmul.f32 %v2634, 0.70710677
    %v2639 = vmul.f32 %v2635, 0.70710677
    %v2640 = verf.f32.pop %v2638
    %v2641 = verf.f32.pop %v2639
    %v2642 = vadd.f32 %v2640, 1.0
    %v2643 = vadd.f32 %v2641, 1.0
    %v2644 = vmul.f32 %v2636, %v2642
    %v2645 = vmul.f32 %v2637, %v2643
    %v2646 = vpack.c.bf16 %v2645, %v2644
    %v2647 = vpack.c.bf16 %v2532, %v2531
    %v2648 = vpack.c.bf16 %v2534, %v2533
    %v2650 = vlaneseq
    %v2651 = vshrl.u32 %v2650, 7
    %v2652 = vsub.s32 0, %v2651
    %v2653 = vrot.slane %v2535, %v2652
    %v2656 = vsel %vm598, %v2646, 0
    %2658 = vmatprep.subr.bf16.mxu0 0
    %2659 = vmatpush1.bf16.msra.mxu0 0
    %2660 = vmatprep.subr.bf16.mxu0 0
    %2661 = vmatpush1.bf16.msra.mxu0 0
    %2662 = vmatprep.subr.bf16.mxu0 0
    %2663 = vmatpush1.bf16.msra.mxu0 0
    %2664 = vmatprep.subr.bf16.mxu0 0
    %2665 = vmatpush1.bf16.msra.mxu0 0
    %2666 = vmatprep.subr.bf16.mxu0 0
    %2667 = vmatpush1.bf16.msra.mxu0 0
    %2668 = vmatprep.subr.bf16.mxu0 0
    %2669 = vmatpush1.bf16.msra.mxu0 0
    %2670 = vmatprep.subr.bf16.mxu0 0
    %2671 = vmatpush1.bf16.msra.mxu0 %v2648
    %2672 = vmatprep.subr.bf16.mxu0 0
    %2673 = vmatpush1.bf16.msra.mxu0 %v2647
    %2674 = vmatprep.subr.bf16.mxu0 0
    %2675 = vmatpush2.bf16.msra.mxu0 0
    %2676 = vmatprep.subr.bf16.mxu0 0
    %2677 = vmatpush2.bf16.msra.mxu0 0
    %2678 = vmatprep.subr.bf16.mxu0 0
    %2679 = vmatpush2.bf16.msra.mxu0 0
    %2680 = vmatprep.subr.bf16.mxu0 0
    %2681 = vmatpush2.bf16.msra.mxu0 0
    %2682 = vmatprep.subr.bf16.mxu0 0
    %2683 = vmatpush2.bf16.msra.mxu0 0
    %2684 = vmatprep.subr.bf16.mxu0 0
    %2685 = vmatpush2.bf16.msra.mxu0 0
    %2686 = vmatprep.subr.bf16.mxu0 0
    %2687 = vmatpush2.bf16.msra.mxu0 0
    %2688 = vmatprep.subr.bf16.mxu0 0
    %2689 = vmatpush2.bf16.msra.mxu0 0
    %2690 = vmatprep.mubr.bf16.mxu0 0
    %2691 = vmatmul.mubr.bf16.gmra.mxu0 %v2656
    %v2692 = vpop.f32.mrf.mxu0
    %v2693 = vadd.f32 %v2653, %v2692
    %v2694 = vpop.f32.mrf.mxu0
    %v2695 = vpop.f32.mrf.mxu0
    %v2696 = vadd.f32 %v2653, %v2695
    %v2697 = vpop.f32.mrf.mxu0
    %2698 = vdwg.mxu0
    %v2699 = vmul.f32 %v2693, 0.5
    %v2700 = vmul.f32 %v2696, 0.5
    %v2701 = vmul.f32 %v2693, 0.70710677
    %v2702 = vmul.f32 %v2696, 0.70710677
    %v2703 = verf.f32.pop %v2701
    %v2704 = verf.f32.pop %v2702
    %v2705 = vadd.f32 %v2703, 1.0
    %v2706 = vadd.f32 %v2704, 1.0
    %v2707 = vmul.f32 %v2699, %v2705
    %v2708 = vmul.f32 %v2700, %v2706
    %v2709 = vpack.c.bf16 %v2536, %v2536
    %v2710 = vpack.c.bf16 %v2708, %v2707
    %2712 = vset.pattern.permute.xlu0 0
    %2713 = vperm.xlu0 %2712, %v2537
    %v2714 = vpop.permute.xlu0 %2713
    %v2716 = vlaneseq
    %v2717 = vshrl.u32 %v2716, 7
    %v2718 = vsub.s32 0, %v2717
    %v2719 = vrot.slane %v2714, %v2718
    %v2721 = vsel %vm388, %v2709, 0
    %v2724 = vsel %vm388, %v2710, 0
    %2726 = vmatprep.subr.bf16.mxu0 0
    %2727 = vmatpush1.bf16.xpose.msra.mxu0 0
    %2728 = vmatprep.subr.bf16.mxu0 0
    %2729 = vmatpush1.bf16.xpose.msra.mxu0 0
    %2730 = vmatprep.subr.bf16.mxu0 0
    %2731 = vmatpush1.bf16.xpose.msra.mxu0 0
    %2732 = vmatprep.subr.bf16.mxu0 0
    %2733 = vmatpush1.bf16.xpose.msra.mxu0 0
    %2734 = vmatprep.subr.bf16.mxu0 0
    %2735 = vmatpush1.bf16.xpose.msra.mxu0 0
    %2736 = vmatprep.subr.bf16.mxu0 0
    %2737 = vmatpush1.bf16.xpose.msra.mxu0 0
    %2738 = vmatprep.subr.bf16.mxu0 0
    %2739 = vmatpush1.bf16.xpose.msra.mxu0 0
    %2740 = vmatprep.subr.bf16.mxu0 0
    %2741 = vmatpush1.bf16.xpose.msra.mxu0 %v2724
    %2742 = vmatprep.subr.bf16.mxu0 0
    %2743 = vmatpush2.bf16.xpose.msra.mxu0 0
    %2744 = vmatprep.subr.bf16.mxu0 0
    %2745 = vmatpush2.bf16.xpose.msra.mxu0 0
    %2746 = vmatprep.subr.bf16.mxu0 0
    %2747 = vmatpush2.bf16.xpose.msra.mxu0 0
    %2748 = vmatprep.subr.bf16.mxu0 0
    %2749 = vmatpush2.bf16.xpose.msra.mxu0 0
    %2750 = vmatprep.subr.bf16.mxu0 0
    %2751 = vmatpush2.bf16.xpose.msra.mxu0 0
    %2752 = vmatprep.subr.bf16.mxu0 0
    %2753 = vmatpush2.bf16.xpose.msra.mxu0 0
    %2754 = vmatprep.subr.bf16.mxu0 0
    %2755 = vmatpush2.bf16.xpose.msra.mxu0 0
    %2756 = vmatprep.subr.bf16.mxu0 0
    %2757 = vmatpush2.bf16.xpose.msra.mxu0 0
    %2758 = vmatprep.mubr.bf16.mxu0 0
    %2759 = vmatmul.mubr.bf16.gmra.mxu0 %v2721
    %v2760 = vpop.f32.mrf.mxu0
    %v2761 = vadd.f32 %v2719, %v2760
    %v2762 = vpop.f32.mrf.mxu0
    %v2763 = vpop.f32.mrf.mxu0
    %v2764 = vpop.f32.mrf.mxu0
    %2765 = vdwg.mxu0
    %v2766 = vxor.u32 %v2761, 2147483648
    %v2767 = vmul.f32 %v2766, 1.442695
    %v2768 = vpow.pop %v2767
    %v2769 = vadd.f32 %v2768, 1.0
    %v2770 = vrcp.pop %v2769
    %v2771 = vmul.f32 1.0, %v2770
    %vm2772 = vcmask 122880
    %2773 = vst.msk [vmem:[%s105] sm:$0x1] %vm2772, %v2771
    // Predicated region
    $region258: #{cl4kt_forward.1} parent=1 // pred_check
      _
    $region259: #{cl4kt_forward.1} parent=1 // pred_check_branch
      %2775 = sbr.rel (0) target = $region261
    $region260: #{cl4kt_forward.1} parent=1 // pred_region
      _
    $region261: #{cl4kt_forward.1} parent=1 // pred_fallthru
      _
    // Predicated region
    $region262: #{cl4kt_forward.1} parent=1 // pred_check
      _
    $region263: #{cl4kt_forward.1} parent=1 // pred_check_branch
      %2777 = sbr.rel (0) target = $region265
    $region264: #{cl4kt_forward.1} parent=1 // pred_region
      _
    $region265: #{cl4kt_forward.1} parent=1 // pred_fallthru
      _
    %2778 = vsyncpa [#allocation4], 1
    %2779 = vsyncpa [#allocation6], 1
    %2780 = vsyncpa [#allocation9], 1
    %2781 = vsyncpa [#allocation12], 1
    %2782 = vsyncpa [#allocation15], 1
    %2783 = vsyncpa [#allocation18], 1
    %2784 = vsyncpa [#allocation21], 1

</llo_original>
